<compile_context>
chip_gen: v7x
topology: tpu7x:2x2x1
jax: 0.10.0
libtpu: 0.0.40
codegen_flags: <defaults>
</compile_context>

<pallas_src>
import functools

import jax
import jax.numpy as jnp
from jax import lax
from jax.experimental import pallas as pl
from jax.experimental.pallas import tpu as pltpu


_VMEM_LIMIT_BYTES = 48 * 1024 * 1024   # explicit scoped-VMEM budget (< v7x 64 MiB)
_NEG_INF = -1.0e30                      # finite "masked" value: never produces NaN


# ------------------------------ tile selection ------------------------------

def _pick_tile(dim, target, align):
    """Largest multiple of `align` <= target that divides `dim`; else full dim."""
    if dim <= target:
        return dim
    if dim % align != 0:
        return dim
    t = (min(target, dim) // align) * align
    while t >= align:
        if dim % t == 0:
            return t
        t -= align
    return dim


# --------------------- fused linear (+bias, +optional ReLU) -----------------

def _linear_kernel(x_ref, w_ref, b_ref, o_ref, acc_ref, *, activation):
    @pl.when(pl.program_id(2) == 0)
    def _():
        acc_ref[...] = jnp.zeros_like(acc_ref)

    # bf16 operands into the MXU, f32 accumulation.
    acc_ref[...] += jnp.dot(x_ref[...].astype(jnp.bfloat16),
                            w_ref[...].astype(jnp.bfloat16),
                            preferred_element_type=jnp.float32)

    @pl.when(pl.program_id(2) == pl.num_programs(2) - 1)
    def _():
        y = acc_ref[...] + b_ref[...].astype(jnp.float32)
        if activation == "relu":
            y = jnp.maximum(y, 0.0)
        o_ref[...] = y.astype(o_ref.dtype)


def linear(x, w, b, activation=None):
    """x: [M, K] @ w: [K, N] + b: [N], tiled over (M, N, K)."""
    M, K = x.shape
    N = w.shape[1]
    tm = _pick_tile(M, 256, 8)
    tn = _pick_tile(N, 256, 128)
    tk = _pick_tile(K, 512, 128)
    grid = (M // tm, N // tn, K // tk)
    return pl.pallas_call(
        functools.partial(_linear_kernel, activation=activation),
        out_shape=jax.ShapeDtypeStruct((M, N), x.dtype),
        grid=grid,
        in_specs=[
            pl.BlockSpec((tm, tk), lambda i, j, k: (i, k)),
            pl.BlockSpec((tk, tn), lambda i, j, k: (k, j)),
            pl.BlockSpec((1, tn), lambda i, j, k: (0, j)),
        ],
        out_specs=pl.BlockSpec((tm, tn), lambda i, j, k: (i, j)),
        scratch_shapes=[pltpu.VMEM((tm, tn), jnp.float32)],
        compiler_params=pltpu.CompilerParams(
            dimension_semantics=("parallel", "parallel", "arbitrary"),
            vmem_limit_bytes=_VMEM_LIMIT_BYTES),
    )(x, w, b.reshape(1, N))


# ------------- fused linear + bias + residual add + LayerNorm ---------------

def _linear_res_ln_kernel(x_ref, w_ref, b_ref, r_ref, g_ref, bt_ref, o_ref,
                          acc_ref, *, eps):
    @pl.when(pl.program_id(1) == 0)
    def _():
        acc_ref[...] = jnp.zeros_like(acc_ref)

    acc_ref[...] += jnp.dot(x_ref[...].astype(jnp.bfloat16),
                            w_ref[...].astype(jnp.bfloat16),
                            preferred_element_type=jnp.float32)

    @pl.when(pl.program_id(1) == pl.num_programs(1) - 1)
    def _():
        h = (acc_ref[...] + b_ref[...].astype(jnp.float32)
             + r_ref[...].astype(jnp.float32))
        mean = jnp.mean(h, axis=-1, keepdims=True)
        var = jnp.mean(jnp.square(h - mean), axis=-1, keepdims=True)
        y = (h - mean) * lax.rsqrt(var + eps)
        y = y * g_ref[...].astype(jnp.float32) + bt_ref[...].astype(jnp.float32)
        o_ref[...] = y.astype(o_ref.dtype)


def linear_residual_layernorm(x, w, b, residual, gamma, beta, eps=1e-5):
    """LayerNorm(x @ w + b + residual).  N (= d_model) kept whole per block so
    the LN reduction stays in-kernel; K tiled with a f32 VMEM accumulator.
    Tiles kept small (tm<=128, tk<=256) so (tk,N)x2 + (tm,N)x4 f32 blocks fit
    the v5e/v7x scoped VMEM at large d_model."""
    M, K = x.shape
    N = w.shape[1]
    tm = _pick_tile(M, 128, 8)
    tk = _pick_tile(K, 256, 128)
    grid = (M // tm, K // tk)
    return pl.pallas_call(
        functools.partial(_linear_res_ln_kernel, eps=eps),
        out_shape=jax.ShapeDtypeStruct((M, N), x.dtype),
        grid=grid,
        in_specs=[
            pl.BlockSpec((tm, tk), lambda i, k: (i, k)),
            pl.BlockSpec((tk, N), lambda i, k: (k, 0)),
            pl.BlockSpec((1, N), lambda i, k: (0, 0)),
            pl.BlockSpec((tm, N), lambda i, k: (i, 0)),
            pl.BlockSpec((1, N), lambda i, k: (0, 0)),
            pl.BlockSpec((1, N), lambda i, k: (0, 0)),
        ],
        out_specs=pl.BlockSpec((tm, N), lambda i, k: (i, 0)),
        scratch_shapes=[pltpu.VMEM((tm, N), jnp.float32)],
        compiler_params=pltpu.CompilerParams(
            dimension_semantics=("parallel", "arbitrary"),
            vmem_limit_bytes=_VMEM_LIMIT_BYTES),
    )(x, w, b.reshape(1, N), residual, gamma.reshape(1, N), beta.reshape(1, N))


# ------------------------- flash-style attention ----------------------------

def _flash_attn_kernel(*refs, scale, mask_mode, tq, tk):
    """One grid step = one (batch, head, q-tile, kv-tile).  Online softmax with
    f32 m/l/acc VMEM scratch; kv-tile axis is innermost ('arbitrary')."""
    if mask_mode == "explicit":
        q_ref, k_ref, v_ref, m_ref, o_ref, m_sc, l_sc, acc_sc = refs
    else:
        q_ref, k_ref, v_ref, o_ref, m_sc, l_sc, acc_sc = refs

    qi = pl.program_id(2)
    ki = pl.program_id(3)

    @pl.when(ki == 0)
    def _():
        m_sc[...] = jnp.full_like(m_sc, _NEG_INF)
        l_sc[...] = jnp.zeros_like(l_sc)
        acc_sc[...] = jnp.zeros_like(acc_sc)

    def compute():
        # Fold softmax scale into q (tq*dh muls instead of tq*tk), feed MXU bf16.
        q = (q_ref[0, 0].astype(jnp.float32) * scale).astype(jnp.bfloat16)  # (tq, dh)
        k = k_ref[0, 0].astype(jnp.bfloat16)                                # (tk, dh)
        s = lax.dot_general(q, k, (((1,), (1,)), ((), ())),
                            preferred_element_type=jnp.float32)             # (tq, tk)

        if mask_mode == "causal":
            q_idx = qi * tq + lax.broadcasted_iota(jnp.int32, (tq, tk), 0)
            k_idx = ki * tk + lax.broadcasted_iota(jnp.int32, (tq, tk), 1)
            s = jnp.where(q_idx >= k_idx, s, _NEG_INF)
        elif mask_mode == "explicit":
            s = jnp.where(m_ref[0] != 0, s, _NEG_INF)

        m_prev = m_sc[...]
        m_new = jnp.maximum(m_prev, jnp.max(s, axis=-1, keepdims=True))
        alpha = jnp.exp(m_prev - m_new)
        p = jnp.exp(s - m_new)
        l_sc[...] = alpha * l_sc[...] + jnp.sum(p, axis=-1, keepdims=True)
        acc_sc[...] = alpha * acc_sc[...] + jnp.dot(
            p.astype(jnp.bfloat16), v_ref[0, 0].astype(jnp.bfloat16),
            preferred_element_type=jnp.float32)
        m_sc[...] = m_new

    if mask_mode == "causal":
        # Skip kv tiles that lie entirely above the causal diagonal of this q tile.
        @pl.when(ki * tk <= qi * tq + (tq - 1))
        def _():
            compute()
    else:
        compute()

    @pl.when(ki == pl.num_programs(3) - 1)
    def _():
        inv = pl.reciprocal(l_sc[...], approx=True)   # EUP slot; ~1e-3 rel. err ok for inference
        o_ref[0, 0] = (acc_sc[...] * inv).astype(o_ref.dtype)


def flash_attention(q, k, v, mask, scale, *, causal=False):
    """q: [B,H,Sq,dh], k/v: [B,H,Sk,dh].
    mask: [B,Sq,Sk] (1=keep, 0=mask), or None.  causal=True generates the
    subsequent-token mask in-kernel (no mask DMA) and skips masked kv tiles."""
    B, H, Sq, dh = q.shape
    Sk = k.shape[2]
    tq = _pick_tile(Sq, 128, 8)
    tk = _pick_tile(Sk, 128, 128)
    if causal:
        mask_mode = "causal"
    elif mask is not None:
        mask_mode = "explicit"
    else:
        mask_mode = "none"

    grid = (B, H, Sq // tq, Sk // tk)
    in_specs = [
        pl.BlockSpec((1, 1, tq, dh), lambda b, h, i, j: (b, h, i, 0)),
        pl.BlockSpec((1, 1, tk, dh), lambda b, h, i, j: (b, h, j, 0)),
        pl.BlockSpec((1, 1, tk, dh), lambda b, h, i, j: (b, h, j, 0)),
    ]
    args = [q, k, v]
    if mask_mode == "explicit":
        in_specs.append(pl.BlockSpec((1, tq, tk), lambda b, h, i, j: (b, i, j)))
        args.append(mask)

    return pl.pallas_call(
        functools.partial(_flash_attn_kernel, scale=scale, mask_mode=mask_mode,
                          tq=tq, tk=tk),
        out_shape=jax.ShapeDtypeStruct((B, H, Sq, dh), q.dtype),
        grid=grid,
        in_specs=in_specs,
        out_specs=pl.BlockSpec((1, 1, tq, dh), lambda b, h, i, j: (b, h, i, 0)),
        scratch_shapes=[pltpu.VMEM((tq, 1), jnp.float32),
                        pltpu.VMEM((tq, 1), jnp.float32),
                        pltpu.VMEM((tq, dh), jnp.float32)],
        compiler_params=pltpu.CompilerParams(
            dimension_semantics=("parallel", "parallel", "parallel", "arbitrary"),
            vmem_limit_bytes=_VMEM_LIMIT_BYTES),
    )(*args)


# --------------------------- model (glue in JAX) ----------------------------
# TODO(synk): the head split/merge transposes below are still JAX-level HBM
# relayouts; folding them into the attention BlockSpec index_maps needs
# non-128-aligned head blocks (dh < 128) to lower cleanly, so they stay here.

def _split_heads(x, B, S, n_head, d_head):
    return x.reshape(B, S, n_head, d_head).transpose(0, 2, 1, 3)


def self_attention_block(x, mask, p, n_head, d_head, causal):
    B, S, D = x.shape
    Hdh = n_head * d_head
    qkv = linear(x.reshape(B * S, D), p["wqkv"], p["bqkv"])      # [B*S, 3*Hdh]
    q, k, v = jnp.split(qkv, 3, axis=-1)
    q = _split_heads(q, B, S, n_head, d_head)
    k = _split_heads(k, B, S, n_head, d_head)
    v = _split_heads(v, B, S, n_head, d_head)
    ctx = flash_attention(q, k, v, None if causal else mask,
                          1.0 / (d_head ** 0.5), causal=causal)
    ctx = ctx.transpose(0, 2, 1, 3).reshape(B * S, Hdh)
    out = linear_residual_layernorm(ctx, p["wo"], p["bo"],
                                    x.reshape(B * S, D),
                                    p["ln_g"], p["ln_b"])
    return out.reshape(B, S, D)


def cross_attention_block(x_q, x_kv, p, n_head, d_head):
    B, Sq, D = x_q.shape
    Sk = x_kv.shape[1]
    Hdh = n_head * d_head
    q = linear(x_q.reshape(B * Sq, D), p["wq"], p["bq"])         # [B*Sq, Hdh]
    kv = linear(x_kv.reshape(B * Sk, D), p["wkv"], p["bkv"])     # [B*Sk, 2*Hdh]
    k, v = jnp.split(kv, 2, axis=-1)
    q = _split_heads(q, B, Sq, n_head, d_head)
    k = _split_heads(k, B, Sk, n_head, d_head)
    v = _split_heads(v, B, Sk, n_head, d_head)
    # no mask for cross-attention: no mask DMA, no select
    ctx = flash_attention(q, k, v, None, 1.0 / (d_head ** 0.5), causal=False)
    ctx = ctx.transpose(0, 2, 1, 3).reshape(B * Sq, Hdh)
    out = linear_residual_layernorm(ctx, p["wo"], p["bo"],
                                    x_q.reshape(B * Sq, D),
                                    p["ln_g"], p["ln_b"])
    return out.reshape(B, Sq, D)


def position_wise_ffn(x, p):
    B, S, D = x.shape
    h = linear(x.reshape(B * S, D), p["w1"], p["b1"], activation="relu")
    out = linear_residual_layernorm(h, p["w2"], p["b2"],
                                    x.reshape(B * S, D),
                                    p["ln_g"], p["ln_b"])
    return out.reshape(B, S, D)


def decoder_layer(dec_input, enc_output, dec_mask, params, n_head, d_head,
                  causal):
    x = self_attention_block(dec_input, dec_mask, params["slf_attn"],
                             n_head, d_head, causal)
    x = cross_attention_block(x, enc_output, params["enc_attn"],
                              n_head, d_head)
    x = position_wise_ffn(x, params["ffn"])
    return x


def transformer_decoder(dec_input, enc_output, dec_mask, params,
                        n_head, d_model, causal=False):
    d_head = d_model // n_head
    dec_output = dec_input   # nn.Dropout in eval mode == identity
    for layer_params in params["layers"]:
        dec_output = decoder_layer(dec_output, enc_output, dec_mask,
                                   layer_params, n_head, d_head, causal)
    return dec_output


# ---------------------------- parameter creation ----------------------------

def _init_self_attn(key, d_model, n_head, d_head):
    k1, k2 = jax.random.split(key)
    dh = n_head * d_head
    std = 0.02
    return {
        "wqkv": jax.random.normal(k1, (d_model, 3 * dh), jnp.float32) * std,
        "bqkv": jnp.zeros((3 * dh,), jnp.float32),
        "wo": jax.random.normal(k2, (dh, d_model), jnp.float32) * std,
        "bo": jnp.zeros((d_model,), jnp.float32),
        "ln_g": jnp.ones((d_model,), jnp.float32),
        "ln_b": jnp.zeros((d_model,), jnp.float32),
    }


def _init_cross_attn(key, d_model, n_head, d_head):
    k1, k2, k3 = jax.random.split(key, 3)
    dh = n_head * d_head
    std = 0.02
    return {
        "wq": jax.random.normal(k1, (d_model, dh), jnp.float32) * std,
        "bq": jnp.zeros((dh,), jnp.float32),
        "wkv": jax.random.normal(k2, (d_model, 2 * dh), jnp.float32) * std,
        "bkv": jnp.zeros((2 * dh,), jnp.float32),
        "wo": jax.random.normal(k3, (dh, d_model), jnp.float32) * std,
        "bo": jnp.zeros((d_model,), jnp.float32),
        "ln_g": jnp.ones((d_model,), jnp.float32),
        "ln_b": jnp.zeros((d_model,), jnp.float32),
    }


def _init_ffn(key, d_model, d_inner):
    k1, k2 = jax.random.split(key)
    std = 0.02
    return {
        "w1": jax.random.normal(k1, (d_model, d_inner), jnp.float32) * std,
        "b1": jnp.zeros((d_inner,), jnp.float32),
        "w2": jax.random.normal(k2, (d_inner, d_model), jnp.float32) * std,
        "b2": jnp.zeros((d_model,), jnp.float32),
        "ln_g": jnp.ones((d_model,), jnp.float32),
        "ln_b": jnp.zeros((d_model,), jnp.float32),
    }


def init_decoder_params(key, n_layer, n_head, d_model, d_inner):
    d_head = d_model // n_head
    layers = []
    for _ in range(n_layer):
        k1, k2, k3, key = jax.random.split(key, 4)
        layers.append({
            "slf_attn": _init_self_attn(k1, d_model, n_head, d_head),
            "enc_attn": _init_cross_attn(k2, d_model, n_head, d_head),
            "ffn": _init_ffn(k3, d_model, d_inner),
        })
    return {"layers": layers}


# ----------------------------------- main -----------------------------------

if __name__ == "__main__":
    n_layer, n_head, d_model, d_inner = 2, 4, 32, 64
    B, Sq, Sk = 2, 8, 8

    key = jax.random.PRNGKey(0)
    k_params, k_dec, k_enc = jax.random.split(key, 3)

    params = init_decoder_params(k_params, n_layer, n_head, d_model, d_inner)
    dec_input = jax.random.normal(k_dec, (B, Sq, d_model), jnp.float32)
    enc_output = jax.random.normal(k_enc, (B, Sk, d_model), jnp.float32)

    # Path 1 (fast): causal (subsequent) mask generated in-kernel, masked kv
    # tiles skipped, no mask HBM traffic.
    decoder_causal = jax.jit(functools.partial(
        transformer_decoder, n_head=n_head, d_model=d_model, causal=True))
    out = jax.block_until_ready(decoder_causal(dec_input, enc_output, None,
                                               params))

    # Path 2 (general): explicit [B,Sq,Sq] 0/1 mask DMA'd per tile; must match.
    dec_mask = jnp.tril(jnp.ones((Sq, Sq), jnp.float32))[None].repeat(B, axis=0)
    decoder_masked = jax.jit(functools.partial(
        transformer_decoder, n_head=n_head, d_model=d_model, causal=False))
    out_masked = jax.block_until_ready(decoder_masked(dec_input, enc_output,
                                                      dec_mask, params))

    assert out.shape == (B, Sq, d_model)
    assert bool(jnp.all(jnp.isfinite(out)))
    assert bool(jnp.allclose(out, out_masked, rtol=1e-4, atol=1e-4))
    print("KERNEL_OK")
</pallas_src>

<mosaic_0001>
module attributes {stable_mosaic.version = 11 : i64} {
  func.func @_linear_kernel(%arg0: i32, %arg1: i32, %arg2: i32, %arg3: memref<16x32xf32, #tpu.memory_space<vmem>>, %arg4: memref<32x96xf32, #tpu.memory_space<vmem>>, %arg5: memref<1x96xf32, #tpu.memory_space<vmem>>, %arg6: memref<16x96xf32, #tpu.memory_space<vmem>>, %arg7: memref<16x96xf32, #tpu.memory_space<vmem>>) attributes {dimension_semantics = [#tpu.dimension_semantics<parallel>, #tpu.dimension_semantics<parallel>, #tpu.dimension_semantics<arbitrary>], iteration_bounds = array<i64: 1, 1, 1>, scalar_prefetch = 0 : i64, scratch_operands = 1 : i64, tpu.core_type = #tpu.core_type<tc>, window_params = [{transform_indices = @transform_0, window_bounds = array<i64: 16, 32>}, {transform_indices = @transform_1, window_bounds = array<i64: 32, 96>}, {transform_indices = @transform_2, window_bounds = array<i64: 1, 96>}, {transform_indices = @transform_3, window_bounds = array<i64: 16, 96>}]} {
    %c0_i32 = arith.constant 0 : i32
    %0 = arith.cmpi eq, %arg2, %c0_i32 : i32
    %1 = arith.extui %0 : i1 to i32
    %c0_i32_0 = arith.constant 0 : i32
    %2 = arith.cmpi ne, %1, %c0_i32_0 : i32
    scf.if %2 {
      %cst_10 = arith.constant 0.000000e+00 : f32
      %14 = vector.broadcast %cst_10 : f32 to vector<16x96xf32>
      %c0_11 = arith.constant 0 : index
      %c0_12 = arith.constant 0 : index
      %15 = vector.load %arg7[%c0_11, %c0_12] : memref<16x96xf32, #tpu.memory_space<vmem>>, vector<16x96xf32>
      tpu.vector_store %arg7[%c0_11, %c0_12], %14 {strides = array<i32>} : memref<16x96xf32, #tpu.memory_space<vmem>>, vector<16x96xf32>,
    } else {
    }
    %c0 = arith.constant 0 : index
    %c0_1 = arith.constant 0 : index
    %3 = vector.load %arg7[%c0, %c0_1] : memref<16x96xf32, #tpu.memory_space<vmem>>, vector<16x96xf32>
    %c0_2 = arith.constant 0 : index
    %c0_3 = arith.constant 0 : index
    %4 = vector.load %arg3[%c0_2, %c0_3] : memref<16x32xf32, #tpu.memory_space<vmem>>, vector<16x32xf32>
    %5 = arith.truncf %4 : vector<16x32xf32> to vector<16x32xbf16>
    %c0_4 = arith.constant 0 : index
    %c0_5 = arith.constant 0 : index
    %6 = vector.load %arg4[%c0_4, %c0_5] : memref<32x96xf32, #tpu.memory_space<vmem>>, vector<32x96xf32>
    %7 = arith.truncf %6 : vector<32x96xf32> to vector<32x96xbf16>
    %cst = arith.constant dense<0.000000e+00> : vector<16x96xf32>
    %8 = tpu.matmul %5, %7, %cst {dimension_numbers = #tpu.dot_dimension_numbers<[1], [0], [0], [1], [0, 0, 1, 1], [], []>} : vector<16x32xbf16>, vector<32x96xbf16>, vector<16x96xf32> -> vector<16x96xf32>
    %9 = arith.addf %3, %8 : vector<16x96xf32>
    %c0_6 = arith.constant 0 : index
    %c0_7 = arith.constant 0 : index
    %10 = vector.load %arg7[%c0_6, %c0_7] : memref<16x96xf32, #tpu.memory_space<vmem>>, vector<16x96xf32>
    tpu.vector_store %arg7[%c0_6, %c0_7], %9 {strides = array<i32>} : memref<16x96xf32, #tpu.memory_space<vmem>>, vector<16x96xf32>,
    %c0_i32_8 = arith.constant 0 : i32
    %11 = arith.cmpi eq, %arg2, %c0_i32_8 : i32
    %12 = arith.extui %11 : i1 to i32
    %c0_i32_9 = arith.constant 0 : i32
    %13 = arith.cmpi ne, %12, %c0_i32_9 : i32
    scf.if %13 {
      %c0_10 = arith.constant 0 : index
      %c0_11 = arith.constant 0 : index
      %14 = vector.load %arg7[%c0_10, %c0_11] : memref<16x96xf32, #tpu.memory_space<vmem>>, vector<16x96xf32>
      %c0_12 = arith.constant 0 : index
      %c0_13 = arith.constant 0 : index
      %15 = vector.load %arg5[%c0_12, %c0_13] : memref<1x96xf32, #tpu.memory_space<vmem>>, vector<1x96xf32>
      %16 = vector.broadcast %15 : vector<1x96xf32> to vector<16x96xf32>
      %17 = arith.addf %14, %16 : vector<16x96xf32>
      %c0_14 = arith.constant 0 : index
      %c0_15 = arith.constant 0 : index
      %18 = vector.load %arg6[%c0_14, %c0_15] : memref<16x96xf32, #tpu.memory_space<vmem>>, vector<16x96xf32>
      tpu.vector_store %arg6[%c0_14, %c0_15], %17 {strides = array<i32>} : memref<16x96xf32, #tpu.memory_space<vmem>>, vector<16x96xf32>,
    } else {
    }
    return
  }
  func.func @transform_0(%arg0: i32, %arg1: i32, %arg2: i32) -> (i32, i32) {
    %c0_i32 = arith.constant 0 : i32
    return %arg0, %arg2 : i32, i32
  }
  func.func @transform_1(%arg0: i32, %arg1: i32, %arg2: i32) -> (i32, i32) {
    %c0_i32 = arith.constant 0 : i32
    return %arg2, %arg1 : i32, i32
  }
  func.func @transform_2(%arg0: i32, %arg1: i32, %arg2: i32) -> (i32, i32) {
    %c0_i32 = arith.constant 0 : i32
    %c0_i32_0 = arith.constant 0 : i32
    return %c0_i32, %arg1 : i32, i32
  }
  func.func @transform_3(%arg0: i32, %arg1: i32, %arg2: i32) -> (i32, i32) {
    %c0_i32 = arith.constant 0 : i32
    return %arg0, %arg1 : i32, i32
  }
}

module attributes {stable_mosaic.version = 11 : i64} {
  func.func @_flash_attn_kernel(%arg0: i32, %arg1: i32, %arg2: i32, %arg3: i32, %arg4: memref<1x1x8x8xf32, #tpu.memory_space<vmem>>, %arg5: memref<1x1x8x8xf32, #tpu.memory_space<vmem>>, %arg6: memref<1x1x8x8xf32, #tpu.memory_space<vmem>>, %arg7: memref<1x1x8x8xf32, #tpu.memory_space<vmem>>, %arg8: memref<8x1xf32, #tpu.memory_space<vmem>>, %arg9: memref<8x1xf32, #tpu.memory_space<vmem>>, %arg10: memref<8x8xf32, #tpu.memory_space<vmem>>) attributes {dimension_semantics = [#tpu.dimension_semantics<parallel>, #tpu.dimension_semantics<parallel>, #tpu.dimension_semantics<parallel>, #tpu.dimension_semantics<arbitrary>], iteration_bounds = array<i64: 2, 4, 1, 1>, scalar_prefetch = 0 : i64, scratch_operands = 3 : i64, tpu.core_type = #tpu.core_type<tc>, window_params = [{transform_indices = @transform_0, window_bounds = array<i64: 1, 1, 8, 8>}, {transform_indices = @transform_1, window_bounds = array<i64: 1, 1, 8, 8>}, {transform_indices = @transform_2, window_bounds = array<i64: 1, 1, 8, 8>}, {transform_indices = @transform_3, window_bounds = array<i64: 1, 1, 8, 8>}]} {
    %c0_i32 = arith.constant 0 : i32
    %0 = arith.cmpi eq, %arg3, %c0_i32 : i32
    %1 = arith.extui %0 : i1 to i32
    %c0_i32_0 = arith.constant 0 : i32
    %2 = arith.cmpi ne, %1, %c0_i32_0 : i32
    scf.if %2 {
      %cst = arith.constant -1.000000e+30 : f32
      %12 = vector.broadcast %cst : f32 to vector<8x1xf32>
      %c0 = arith.constant 0 : index
      %c0_5 = arith.constant 0 : index
      %13 = vector.load %arg8[%c0, %c0_5] : memref<8x1xf32, #tpu.memory_space<vmem>>, vector<8x1xf32>
      tpu.vector_store %arg8[%c0, %c0_5], %12 {strides = array<i32>} : memref<8x1xf32, #tpu.memory_space<vmem>>, vector<8x1xf32>,
      %cst_6 = arith.constant 0.000000e+00 : f32
      %14 = vector.broadcast %cst_6 : f32 to vector<8x1xf32>
      %c0_7 = arith.constant 0 : index
      %c0_8 = arith.constant 0 : index
      %15 = vector.load %arg9[%c0_7, %c0_8] : memref<8x1xf32, #tpu.memory_space<vmem>>, vector<8x1xf32>
      tpu.vector_store %arg9[%c0_7, %c0_8], %14 {strides = array<i32>} : memref<8x1xf32, #tpu.memory_space<vmem>>, vector<8x1xf32>,
      %cst_9 = arith.constant 0.000000e+00 : f32
      %16 = vector.broadcast %cst_9 : f32 to vector<8x8xf32>
      %c0_10 = arith.constant 0 : index
      %c0_11 = arith.constant 0 : index
      %17 = vector.load %arg10[%c0_10, %c0_11] : memref<8x8xf32, #tpu.memory_space<vmem>>, vector<8x8xf32>
      tpu.vector_store %arg10[%c0_10, %c0_11], %16 {strides = array<i32>} : memref<8x8xf32, #tpu.memory_space<vmem>>, vector<8x8xf32>,
    } else {
    }
    %c8_i32 = arith.constant 8 : i32
    %3 = arith.muli %arg3, %c8_i32 : i32
    %c8_i32_1 = arith.constant 8 : i32
    %4 = arith.muli %arg2, %c8_i32_1 : i32
    %c7_i32 = arith.constant 7 : i32
    %5 = arith.addi %4, %c7_i32 : i32
    %6 = arith.cmpi sle, %3, %5 : i32
    %7 = arith.extui %6 : i1 to i32
    %c0_i32_2 = arith.constant 0 : i32
    %8 = arith.cmpi ne, %7, %c0_i32_2 : i32
    scf.if %8 {
      %c0 = arith.constant 0 : index
      %c0_5 = arith.constant 0 : index
      %c0_6 = arith.constant 0 : index
      %c0_7 = arith.constant 0 : index
      %12 = vector.load %arg4[%c0, %c0_5, %c0_6, %c0_7] : memref<1x1x8x8xf32, #tpu.memory_space<vmem>>, vector<1x1x8x8xf32>
      %13 = vector.shape_cast %12 : vector<1x1x8x8xf32> to vector<8x8xf32>
      %cst = arith.constant 0.353553385 : f32
      %14 = vector.broadcast %cst : f32 to vector<8x8xf32>
      %15 = arith.mulf %13, %14 : vector<8x8xf32>
      %16 = arith.truncf %15 : vector<8x8xf32> to vector<8x8xbf16>
      %c0_8 = arith.constant 0 : index
      %c0_9 = arith.constant 0 : index
      %c0_10 = arith.constant 0 : index
      %c0_11 = arith.constant 0 : index
      %17 = vector.load %arg5[%c0_8, %c0_9, %c0_10, %c0_11] : memref<1x1x8x8xf32, #tpu.memory_space<vmem>>, vector<1x1x8x8xf32>
      %18 = vector.shape_cast %17 : vector<1x1x8x8xf32> to vector<8x8xf32>
      %19 = arith.truncf %18 : vector<8x8xf32> to vector<8x8xbf16>
      %cst_12 = arith.constant dense<0.000000e+00> : vector<8x8xf32>
      %20 = tpu.matmul %16, %19, %cst_12 {dimension_numbers = #tpu.dot_dimension_numbers<[1], [1], [0], [0], [0, 0, 1, 0], [], []>} : vector<8x8xbf16>, vector<8x8xbf16>, vector<8x8xf32> -> vector<8x8xf32>
      %c8_i32_13 = arith.constant 8 : i32
      %21 = arith.muli %arg2, %c8_i32_13 : i32
      %22 = tpu.iota {dimensions = array<i32: 0>} : vector<8x8xi32>
      %23 = vector.broadcast %21 : i32 to vector<8x8xi32>
      %24 = arith.addi %23, %22 : vector<8x8xi32>
      %c8_i32_14 = arith.constant 8 : i32
      %25 = arith.muli %arg3, %c8_i32_14 : i32
      %26 = tpu.iota {dimensions = array<i32: 1>} : vector<8x8xi32>
      %27 = vector.broadcast %25 : i32 to vector<8x8xi32>
      %28 = arith.addi %27, %26 : vector<8x8xi32>
      %29 = arith.cmpi sge, %24, %28 : vector<8x8xi32>
      %cst_15 = arith.constant -1.000000e+30 : f32
      %30 = vector.broadcast %cst_15 : f32 to vector<8x8xf32>
      %31 = arith.select %29, %20, %30 : vector<8x8xi1>, vector<8x8xf32>
      %c0_16 = arith.constant 0 : index
      %c0_17 = arith.constant 0 : index
      %32 = vector.load %arg8[%c0_16, %c0_17] : memref<8x1xf32, #tpu.memory_space<vmem>>, vector<8x1xf32>
      %cst_18 = arith.constant dense<0xFF800000> : vector<8xf32>
      %33 = vector.multi_reduction <maximumf>, %31, %cst_18 [1] : vector<8x8xf32> to vector<8xf32>
      %34 = vector.shape_cast %33 : vector<8xf32> to vector<8x1xf32>
      %35 = arith.maximumf %32, %34 : vector<8x1xf32>
      %36 = arith.subf %32, %35 : vector<8x1xf32>
      %37 = math.exp %36 : vector<8x1xf32>
      %38 = vector.broadcast %35 : vector<8x1xf32> to vector<8x8xf32>
      %39 = arith.subf %31, %38 : vector<8x8xf32>
      %40 = math.exp %39 : vector<8x8xf32>
      %c0_19 = arith.constant 0 : index
      %c0_20 = arith.constant 0 : index
      %41 = vector.load %arg9[%c0_19, %c0_20] : memref<8x1xf32, #tpu.memory_space<vmem>>, vector<8x1xf32>
      %42 = arith.mulf %37, %41 : vector<8x1xf32>
      %cst_21 = arith.constant dense<0.000000e+00> : vector<8xf32>
      %43 = vector.multi_reduction <add>, %40, %cst_21 [1] : vector<8x8xf32> to vector<8xf32>
      %44 = vector.shape_cast %43 : vector<8xf32> to vector<8x1xf32>
      %45 = arith.addf %42, %44 : vector<8x1xf32>
      %c0_22 = arith.constant 0 : index
      %c0_23 = arith.constant 0 : index
      %46 = vector.load %arg9[%c0_22, %c0_23] : memref<8x1xf32, #tpu.memory_space<vmem>>, vector<8x1xf32>
      tpu.vector_store %arg9[%c0_22, %c0_23], %45 {strides = array<i32>} : memref<8x1xf32, #tpu.memory_space<vmem>>, vector<8x1xf32>,
      %c0_24 = arith.constant 0 : index
      %c0_25 = arith.constant 0 : index
      %47 = vector.load %arg10[%c0_24, %c0_25] : memref<8x8xf32, #tpu.memory_space<vmem>>, vector<8x8xf32>
      %48 = vector.broadcast %37 : vector<8x1xf32> to vector<8x8xf32>
      %49 = arith.mulf %48, %47 : vector<8x8xf32>
      %50 = arith.truncf %40 : vector<8x8xf32> to vector<8x8xbf16>
      %c0_26 = arith.constant 0 : index
      %c0_27 = arith.constant 0 : index
      %c0_28 = arith.constant 0 : index
      %c0_29 = arith.constant 0 : index
      %51 = vector.load %arg6[%c0_26, %c0_27, %c0_28, %c0_29] : memref<1x1x8x8xf32, #tpu.memory_space<vmem>>, vector<1x1x8x8xf32>
      %52 = vector.shape_cast %51 : vector<1x1x8x8xf32> to vector<8x8xf32>
      %53 = arith.truncf %52 : vector<8x8xf32> to vector<8x8xbf16>
      %cst_30 = arith.constant dense<0.000000e+00> : vector<8x8xf32>
      %54 = tpu.matmul %50, %53, %cst_30 {dimension_numbers = #tpu.dot_dimension_numbers<[1], [0], [0], [1], [0, 0, 1, 1], [], []>} : vector<8x8xbf16>, vector<8x8xbf16>, vector<8x8xf32> -> vector<8x8xf32>
      %55 = arith.addf %49, %54 : vector<8x8xf32>
      %c0_31 = arith.constant 0 : index
      %c0_32 = arith.constant 0 : index
      %56 = vector.load %arg10[%c0_31, %c0_32] : memref<8x8xf32, #tpu.memory_space<vmem>>, vector<8x8xf32>
      tpu.vector_store %arg10[%c0_31, %c0_32], %55 {strides = array<i32>} : memref<8x8xf32, #tpu.memory_space<vmem>>, vector<8x8xf32>,
      %c0_33 = arith.constant 0 : index
      %c0_34 = arith.constant 0 : index
      %57 = vector.load %arg8[%c0_33, %c0_34] : memref<8x1xf32, #tpu.memory_space<vmem>>, vector<8x1xf32>
      tpu.vector_store %arg8[%c0_33, %c0_34], %35 {strides = array<i32>} : memref<8x1xf32, #tpu.memory_space<vmem>>, vector<8x1xf32>,
    } else {
    }
    %c0_i32_3 = arith.constant 0 : i32
    %9 = arith.cmpi eq, %arg3, %c0_i32_3 : i32
    %10 = arith.extui %9 : i1 to i32
    %c0_i32_4 = arith.constant 0 : i32
    %11 = arith.cmpi ne, %10, %c0_i32_4 : i32
    scf.if %11 {
      %c0 = arith.constant 0 : index
      %c0_5 = arith.constant 0 : index
      %12 = vector.load %arg9[%c0, %c0_5] : memref<8x1xf32, #tpu.memory_space<vmem>>, vector<8x1xf32>
      %13 = tpu.reciprocal %12 {approx = true} : vector<8x1xf32> -> vector<8x1xf32>
      %c0_6 = arith.constant 0 : index
      %c0_7 = arith.constant 0 : index
      %14 = vector.load %arg10[%c0_6, %c0_7] : memref<8x8xf32, #tpu.memory_space<vmem>>, vector<8x8xf32>
      %15 = vector.broadcast %13 : vector<8x1xf32> to vector<8x8xf32>
      %16 = arith.mulf %14, %15 : vector<8x8xf32>
      %c0_8 = arith.constant 0 : index
      %c0_9 = arith.constant 0 : index
      %c0_10 = arith.constant 0 : index
      %c0_11 = arith.constant 0 : index
      %17 = vector.load %arg7[%c0_8, %c0_9, %c0_10, %c0_11] : memref<1x1x8x8xf32, #tpu.memory_space<vmem>>, vector<1x1x8x8xf32>
      %18 = vector.shape_cast %17 : vector<1x1x8x8xf32> to vector<8x8xf32>
      %19 = vector.shape_cast %16 : vector<8x8xf32> to vector<1x1x8x8xf32>
      tpu.vector_store %arg7[%c0_8, %c0_9, %c0_10, %c0_11], %19 {strides = array<i32>} : memref<1x1x8x8xf32, #tpu.memory_space<vmem>>, vector<1x1x8x8xf32>,
    } else {
    }
    return
  }
  func.func @transform_0(%arg0: i32, %arg1: i32, %arg2: i32, %arg3: i32) -> (i32, i32, i32, i32) {
    %c0_i32 = arith.constant 0 : i32
    %c0_i32_0 = arith.constant 0 : i32
    return %arg0, %arg1, %arg2, %c0_i32 : i32, i32, i32, i32
  }
  func.func @transform_1(%arg0: i32, %arg1: i32, %arg2: i32, %arg3: i32) -> (i32, i32, i32, i32) {
    %c0_i32 = arith.constant 0 : i32
    %c0_i32_0 = arith.constant 0 : i32
    return %arg0, %arg1, %arg3, %c0_i32 : i32, i32, i32, i32
  }
  func.func @transform_2(%arg0: i32, %arg1: i32, %arg2: i32, %arg3: i32) -> (i32, i32, i32, i32) {
    %c0_i32 = arith.constant 0 : i32
    %c0_i32_0 = arith.constant 0 : i32
    return %arg0, %arg1, %arg3, %c0_i32 : i32, i32, i32, i32
  }
  func.func @transform_3(%arg0: i32, %arg1: i32, %arg2: i32, %arg3: i32) -> (i32, i32, i32, i32) {
    %c0_i32 = arith.constant 0 : i32
    %c0_i32_0 = arith.constant 0 : i32
    return %arg0, %arg1, %arg2, %c0_i32 : i32, i32, i32, i32
  }
}

module attributes {stable_mosaic.version = 11 : i64} {
  func.func @_linear_res_ln_kernel(%arg0: i32, %arg1: i32, %arg2: memref<16x32xf32, #tpu.memory_space<vmem>>, %arg3: memref<32x32xf32, #tpu.memory_space<vmem>>, %arg4: memref<1x32xf32, #tpu.memory_space<vmem>>, %arg5: memref<16x32xf32, #tpu.memory_space<vmem>>, %arg6: memref<1x32xf32, #tpu.memory_space<vmem>>, %arg7: memref<1x32xf32, #tpu.memory_space<vmem>>, %arg8: memref<16x32xf32, #tpu.memory_space<vmem>>, %arg9: memref<16x32xf32, #tpu.memory_space<vmem>>) attributes {dimension_semantics = [#tpu.dimension_semantics<parallel>, #tpu.dimension_semantics<arbitrary>], iteration_bounds = array<i64: 1, 1>, scalar_prefetch = 0 : i64, scratch_operands = 1 : i64, tpu.core_type = #tpu.core_type<tc>, window_params = [{transform_indices = @transform_0, window_bounds = array<i64: 16, 32>}, {transform_indices = @transform_1, window_bounds = array<i64: 32, 32>}, {pipeline_mode = #tpu.pipeline_mode<synchronous>, transform_indices = @transform_2, window_bounds = array<i64: 1, 32>}, {transform_indices = @transform_3, window_bounds = array<i64: 16, 32>}, {pipeline_mode = #tpu.pipeline_mode<synchronous>, transform_indices = @transform_4, window_bounds = array<i64: 1, 32>}, {pipeline_mode = #tpu.pipeline_mode<synchronous>, transform_indices = @transform_5, window_bounds = array<i64: 1, 32>}, {transform_indices = @transform_6, window_bounds = array<i64: 16, 32>}]} {
    %c0_i32 = arith.constant 0 : i32
    %0 = arith.cmpi eq, %arg1, %c0_i32 : i32
    %1 = arith.extui %0 : i1 to i32
    %c0_i32_0 = arith.constant 0 : i32
    %2 = arith.cmpi ne, %1, %c0_i32_0 : i32
    scf.if %2 {
      %cst_10 = arith.constant 0.000000e+00 : f32
      %14 = vector.broadcast %cst_10 : f32 to vector<16x32xf32>
      %c0_11 = arith.constant 0 : index
      %c0_12 = arith.constant 0 : index
      %15 = vector.load %arg9[%c0_11, %c0_12] : memref<16x32xf32, #tpu.memory_space<vmem>>, vector<16x32xf32>
      tpu.vector_store %arg9[%c0_11, %c0_12], %14 {strides = array<i32>} : memref<16x32xf32, #tpu.memory_space<vmem>>, vector<16x32xf32>,
    } else {
    }
    %c0 = arith.constant 0 : index
    %c0_1 = arith.constant 0 : index
    %3 = vector.load %arg9[%c0, %c0_1] : memref<16x32xf32, #tpu.memory_space<vmem>>, vector<16x32xf32>
    %c0_2 = arith.constant 0 : index
    %c0_3 = arith.constant 0 : index
    %4 = vector.load %arg2[%c0_2, %c0_3] : memref<16x32xf32, #tpu.memory_space<vmem>>, vector<16x32xf32>
    %5 = arith.truncf %4 : vector<16x32xf32> to vector<16x32xbf16>
    %c0_4 = arith.constant 0 : index
    %c0_5 = arith.constant 0 : index
    %6 = vector.load %arg3[%c0_4, %c0_5] : memref<32x32xf32, #tpu.memory_space<vmem>>, vector<32x32xf32>
    %7 = arith.truncf %6 : vector<32x32xf32> to vector<32x32xbf16>
    %cst = arith.constant dense<0.000000e+00> : vector<16x32xf32>
    %8 = tpu.matmul %5, %7, %cst {dimension_numbers = #tpu.dot_dimension_numbers<[1], [0], [0], [1], [0, 0, 1, 1], [], []>} : vector<16x32xbf16>, vector<32x32xbf16>, vector<16x32xf32> -> vector<16x32xf32>
    %9 = arith.addf %3, %8 : vector<16x32xf32>
    %c0_6 = arith.constant 0 : index
    %c0_7 = arith.constant 0 : index
    %10 = vector.load %arg9[%c0_6, %c0_7] : memref<16x32xf32, #tpu.memory_space<vmem>>, vector<16x32xf32>
    tpu.vector_store %arg9[%c0_6, %c0_7], %9 {strides = array<i32>} : memref<16x32xf32, #tpu.memory_space<vmem>>, vector<16x32xf32>,
    %c0_i32_8 = arith.constant 0 : i32
    %11 = arith.cmpi eq, %arg1, %c0_i32_8 : i32
    %12 = arith.extui %11 : i1 to i32
    %c0_i32_9 = arith.constant 0 : i32
    %13 = arith.cmpi ne, %12, %c0_i32_9 : i32
    scf.if %13 {
      %c0_10 = arith.constant 0 : index
      %c0_11 = arith.constant 0 : index
      %14 = vector.load %arg9[%c0_10, %c0_11] : memref<16x32xf32, #tpu.memory_space<vmem>>, vector<16x32xf32>
      %c0_12 = arith.constant 0 : index
      %c0_13 = arith.constant 0 : index
      %15 = vector.load %arg4[%c0_12, %c0_13] : memref<1x32xf32, #tpu.memory_space<vmem>>, vector<1x32xf32>
      %16 = vector.broadcast %15 : vector<1x32xf32> to vector<16x32xf32>
      %17 = arith.addf %14, %16 : vector<16x32xf32>
      %c0_14 = arith.constant 0 : index
      %c0_15 = arith.constant 0 : index
      %18 = vector.load %arg5[%c0_14, %c0_15] : memref<16x32xf32, #tpu.memory_space<vmem>>, vector<16x32xf32>
      %19 = arith.addf %17, %18 : vector<16x32xf32>
      %cst_16 = arith.constant dense<0.000000e+00> : vector<16xf32>
      %20 = vector.multi_reduction <add>, %19, %cst_16 [1] : vector<16x32xf32> to vector<16xf32>
      %21 = vector.shape_cast %20 : vector<16xf32> to vector<16x1xf32>
      %cst_17 = arith.constant 3.200000e+01 : f32
      %22 = vector.broadcast %cst_17 : f32 to vector<16x1xf32>
      %23 = arith.divf %21, %22 : vector<16x1xf32>
      %24 = vector.broadcast %23 : vector<16x1xf32> to vector<16x32xf32>
      %25 = arith.subf %19, %24 : vector<16x32xf32>
      %26 = arith.mulf %25, %25 : vector<16x32xf32>
      %cst_18 = arith.constant dense<0.000000e+00> : vector<16xf32>
      %27 = vector.multi_reduction <add>, %26, %cst_18 [1] : vector<16x32xf32> to vector<16xf32>
      %28 = vector.shape_cast %27 : vector<16xf32> to vector<16x1xf32>
      %cst_19 = arith.constant 3.200000e+01 : f32
      %29 = vector.broadcast %cst_19 : f32 to vector<16x1xf32>
      %30 = arith.divf %28, %29 : vector<16x1xf32>
      %31 = vector.broadcast %23 : vector<16x1xf32> to vector<16x32xf32>
      %32 = arith.subf %19, %31 : vector<16x32xf32>
      %cst_20 = arith.constant 9.99999974E-6 : f32
      %33 = vector.broadcast %cst_20 : f32 to vector<16x1xf32>
      %34 = arith.addf %30, %33 : vector<16x1xf32>
      %35 = math.rsqrt %34 : vector<16x1xf32>
      %36 = vector.broadcast %35 : vector<16x1xf32> to vector<16x32xf32>
      %37 = arith.mulf %32, %36 : vector<16x32xf32>
      %c0_21 = arith.constant 0 : index
      %c0_22 = arith.constant 0 : index
      %38 = vector.load %arg6[%c0_21, %c0_22] : memref<1x32xf32, #tpu.memory_space<vmem>>, vector<1x32xf32>
      %39 = vector.broadcast %38 : vector<1x32xf32> to vector<16x32xf32>
      %40 = arith.mulf %37, %39 : vector<16x32xf32>
      %c0_23 = arith.constant 0 : index
      %c0_24 = arith.constant 0 : index
      %41 = vector.load %arg7[%c0_23, %c0_24] : memref<1x32xf32, #tpu.memory_space<vmem>>, vector<1x32xf32>
      %42 = vector.broadcast %41 : vector<1x32xf32> to vector<16x32xf32>
      %43 = arith.addf %40, %42 : vector<16x32xf32>
      %c0_25 = arith.constant 0 : index
      %c0_26 = arith.constant 0 : index
      %44 = vector.load %arg8[%c0_25, %c0_26] : memref<16x32xf32, #tpu.memory_space<vmem>>, vector<16x32xf32>
      tpu.vector_store %arg8[%c0_25, %c0_26], %43 {strides = array<i32>} : memref<16x32xf32, #tpu.memory_space<vmem>>, vector<16x32xf32>,
    } else {
    }
    return
  }
  func.func @transform_0(%arg0: i32, %arg1: i32) -> (i32, i32) {
    %c0_i32 = arith.constant 0 : i32
    return %arg0, %arg1 : i32, i32
  }
  func.func @transform_1(%arg0: i32, %arg1: i32) -> (i32, i32) {
    %c0_i32 = arith.constant 0 : i32
    %c0_i32_0 = arith.constant 0 : i32
    return %arg1, %c0_i32 : i32, i32
  }
  func.func @transform_2(%arg0: i32, %arg1: i32) -> (i32, i32) {
    %c0_i32 = arith.constant 0 : i32
    %c0_i32_0 = arith.constant 0 : i32
    %c0_i32_1 = arith.constant 0 : i32
    return %c0_i32, %c0_i32_0 : i32, i32
  }
  func.func @transform_3(%arg0: i32, %arg1: i32) -> (i32, i32) {
    %c0_i32 = arith.constant 0 : i32
    %c0_i32_0 = arith.constant 0 : i32
    return %arg0, %c0_i32 : i32, i32
  }
  func.func @transform_4(%arg0: i32, %arg1: i32) -> (i32, i32) {
    %c0_i32 = arith.constant 0 : i32
    %c0_i32_0 = arith.constant 0 : i32
    %c0_i32_1 = arith.constant 0 : i32
    return %c0_i32, %c0_i32_0 : i32, i32
  }
  func.func @transform_5(%arg0: i32, %arg1: i32) -> (i32, i32) {
    %c0_i32 = arith.constant 0 : i32
    %c0_i32_0 = arith.constant 0 : i32
    %c0_i32_1 = arith.constant 0 : i32
    return %c0_i32, %c0_i32_0 : i32, i32
  }
  func.func @transform_6(%arg0: i32, %arg1: i32) -> (i32, i32) {
    %c0_i32 = arith.constant 0 : i32
    %c0_i32_0 = arith.constant 0 : i32
    return %arg0, %c0_i32 : i32, i32
  }
}

module attributes {stable_mosaic.version = 11 : i64} {
  func.func @_linear_kernel(%arg0: i32, %arg1: i32, %arg2: i32, %arg3: memref<16x32xf32, #tpu.memory_space<vmem>>, %arg4: memref<32x32xf32, #tpu.memory_space<vmem>>, %arg5: memref<1x32xf32, #tpu.memory_space<vmem>>, %arg6: memref<16x32xf32, #tpu.memory_space<vmem>>, %arg7: memref<16x32xf32, #tpu.memory_space<vmem>>) attributes {dimension_semantics = [#tpu.dimension_semantics<parallel>, #tpu.dimension_semantics<parallel>, #tpu.dimension_semantics<arbitrary>], iteration_bounds = array<i64: 1, 1, 1>, scalar_prefetch = 0 : i64, scratch_operands = 1 : i64, tpu.core_type = #tpu.core_type<tc>, window_params = [{transform_indices = @transform_0, window_bounds = array<i64: 16, 32>}, {transform_indices = @transform_1, window_bounds = array<i64: 32, 32>}, {transform_indices = @transform_2, window_bounds = array<i64: 1, 32>}, {transform_indices = @transform_3, window_bounds = array<i64: 16, 32>}]} {
    %c0_i32 = arith.constant 0 : i32
    %0 = arith.cmpi eq, %arg2, %c0_i32 : i32
    %1 = arith.extui %0 : i1 to i32
    %c0_i32_0 = arith.constant 0 : i32
    %2 = arith.cmpi ne, %1, %c0_i32_0 : i32
    scf.if %2 {
      %cst_10 = arith.constant 0.000000e+00 : f32
      %14 = vector.broadcast %cst_10 : f32 to vector<16x32xf32>
      %c0_11 = arith.constant 0 : index
      %c0_12 = arith.constant 0 : index
      %15 = vector.load %arg7[%c0_11, %c0_12] : memref<16x32xf32, #tpu.memory_space<vmem>>, vector<16x32xf32>
      tpu.vector_store %arg7[%c0_11, %c0_12], %14 {strides = array<i32>} : memref<16x32xf32, #tpu.memory_space<vmem>>, vector<16x32xf32>,
    } else {
    }
    %c0 = arith.constant 0 : index
    %c0_1 = arith.constant 0 : index
    %3 = vector.load %arg7[%c0, %c0_1] : memref<16x32xf32, #tpu.memory_space<vmem>>, vector<16x32xf32>
    %c0_2 = arith.constant 0 : index
    %c0_3 = arith.constant 0 : index
    %4 = vector.load %arg3[%c0_2, %c0_3] : memref<16x32xf32, #tpu.memory_space<vmem>>, vector<16x32xf32>
    %5 = arith.truncf %4 : vector<16x32xf32> to vector<16x32xbf16>
    %c0_4 = arith.constant 0 : index
    %c0_5 = arith.constant 0 : index
    %6 = vector.load %arg4[%c0_4, %c0_5] : memref<32x32xf32, #tpu.memory_space<vmem>>, vector<32x32xf32>
    %7 = arith.truncf %6 : vector<32x32xf32> to vector<32x32xbf16>
    %cst = arith.constant dense<0.000000e+00> : vector<16x32xf32>
    %8 = tpu.matmul %5, %7, %cst {dimension_numbers = #tpu.dot_dimension_numbers<[1], [0], [0], [1], [0, 0, 1, 1], [], []>} : vector<16x32xbf16>, vector<32x32xbf16>, vector<16x32xf32> -> vector<16x32xf32>
    %9 = arith.addf %3, %8 : vector<16x32xf32>
    %c0_6 = arith.constant 0 : index
    %c0_7 = arith.constant 0 : index
    %10 = vector.load %arg7[%c0_6, %c0_7] : memref<16x32xf32, #tpu.memory_space<vmem>>, vector<16x32xf32>
    tpu.vector_store %arg7[%c0_6, %c0_7], %9 {strides = array<i32>} : memref<16x32xf32, #tpu.memory_space<vmem>>, vector<16x32xf32>,
    %c0_i32_8 = arith.constant 0 : i32
    %11 = arith.cmpi eq, %arg2, %c0_i32_8 : i32
    %12 = arith.extui %11 : i1 to i32
    %c0_i32_9 = arith.constant 0 : i32
    %13 = arith.cmpi ne, %12, %c0_i32_9 : i32
    scf.if %13 {
      %c0_10 = arith.constant 0 : index
      %c0_11 = arith.constant 0 : index
      %14 = vector.load %arg7[%c0_10, %c0_11] : memref<16x32xf32, #tpu.memory_space<vmem>>, vector<16x32xf32>
      %c0_12 = arith.constant 0 : index
      %c0_13 = arith.constant 0 : index
      %15 = vector.load %arg5[%c0_12, %c0_13] : memref<1x32xf32, #tpu.memory_space<vmem>>, vector<1x32xf32>
      %16 = vector.broadcast %15 : vector<1x32xf32> to vector<16x32xf32>
      %17 = arith.addf %14, %16 : vector<16x32xf32>
      %c0_14 = arith.constant 0 : index
      %c0_15 = arith.constant 0 : index
      %18 = vector.load %arg6[%c0_14, %c0_15] : memref<16x32xf32, #tpu.memory_space<vmem>>, vector<16x32xf32>
      tpu.vector_store %arg6[%c0_14, %c0_15], %17 {strides = array<i32>} : memref<16x32xf32, #tpu.memory_space<vmem>>, vector<16x32xf32>,
    } else {
    }
    return
  }
  func.func @transform_0(%arg0: i32, %arg1: i32, %arg2: i32) -> (i32, i32) {
    %c0_i32 = arith.constant 0 : i32
    return %arg0, %arg2 : i32, i32
  }
  func.func @transform_1(%arg0: i32, %arg1: i32, %arg2: i32) -> (i32, i32) {
    %c0_i32 = arith.constant 0 : i32
    return %arg2, %arg1 : i32, i32
  }
  func.func @transform_2(%arg0: i32, %arg1: i32, %arg2: i32) -> (i32, i32) {
    %c0_i32 = arith.constant 0 : i32
    %c0_i32_0 = arith.constant 0 : i32
    return %c0_i32, %arg1 : i32, i32
  }
  func.func @transform_3(%arg0: i32, %arg1: i32, %arg2: i32) -> (i32, i32) {
    %c0_i32 = arith.constant 0 : i32
    return %arg0, %arg1 : i32, i32
  }
}

module attributes {stable_mosaic.version = 11 : i64} {
  func.func @_linear_kernel(%arg0: i32, %arg1: i32, %arg2: i32, %arg3: memref<16x32xf32, #tpu.memory_space<vmem>>, %arg4: memref<32x64xf32, #tpu.memory_space<vmem>>, %arg5: memref<1x64xf32, #tpu.memory_space<vmem>>, %arg6: memref<16x64xf32, #tpu.memory_space<vmem>>, %arg7: memref<16x64xf32, #tpu.memory_space<vmem>>) attributes {dimension_semantics = [#tpu.dimension_semantics<parallel>, #tpu.dimension_semantics<parallel>, #tpu.dimension_semantics<arbitrary>], iteration_bounds = array<i64: 1, 1, 1>, scalar_prefetch = 0 : i64, scratch_operands = 1 : i64, tpu.core_type = #tpu.core_type<tc>, window_params = [{transform_indices = @transform_0, window_bounds = array<i64: 16, 32>}, {transform_indices = @transform_1, window_bounds = array<i64: 32, 64>}, {transform_indices = @transform_2, window_bounds = array<i64: 1, 64>}, {transform_indices = @transform_3, window_bounds = array<i64: 16, 64>}]} {
    %c0_i32 = arith.constant 0 : i32
    %0 = arith.cmpi eq, %arg2, %c0_i32 : i32
    %1 = arith.extui %0 : i1 to i32
    %c0_i32_0 = arith.constant 0 : i32
    %2 = arith.cmpi ne, %1, %c0_i32_0 : i32
    scf.if %2 {
      %cst_10 = arith.constant 0.000000e+00 : f32
      %14 = vector.broadcast %cst_10 : f32 to vector<16x64xf32>
      %c0_11 = arith.constant 0 : index
      %c0_12 = arith.constant 0 : index
      %15 = vector.load %arg7[%c0_11, %c0_12] : memref<16x64xf32, #tpu.memory_space<vmem>>, vector<16x64xf32>
      tpu.vector_store %arg7[%c0_11, %c0_12], %14 {strides = array<i32>} : memref<16x64xf32, #tpu.memory_space<vmem>>, vector<16x64xf32>,
    } else {
    }
    %c0 = arith.constant 0 : index
    %c0_1 = arith.constant 0 : index
    %3 = vector.load %arg7[%c0, %c0_1] : memref<16x64xf32, #tpu.memory_space<vmem>>, vector<16x64xf32>
    %c0_2 = arith.constant 0 : index
    %c0_3 = arith.constant 0 : index
    %4 = vector.load %arg3[%c0_2, %c0_3] : memref<16x32xf32, #tpu.memory_space<vmem>>, vector<16x32xf32>
    %5 = arith.truncf %4 : vector<16x32xf32> to vector<16x32xbf16>
    %c0_4 = arith.constant 0 : index
    %c0_5 = arith.constant 0 : index
    %6 = vector.load %arg4[%c0_4, %c0_5] : memref<32x64xf32, #tpu.memory_space<vmem>>, vector<32x64xf32>
    %7 = arith.truncf %6 : vector<32x64xf32> to vector<32x64xbf16>
    %cst = arith.constant dense<0.000000e+00> : vector<16x64xf32>
    %8 = tpu.matmul %5, %7, %cst {dimension_numbers = #tpu.dot_dimension_numbers<[1], [0], [0], [1], [0, 0, 1, 1], [], []>} : vector<16x32xbf16>, vector<32x64xbf16>, vector<16x64xf32> -> vector<16x64xf32>
    %9 = arith.addf %3, %8 : vector<16x64xf32>
    %c0_6 = arith.constant 0 : index
    %c0_7 = arith.constant 0 : index
    %10 = vector.load %arg7[%c0_6, %c0_7] : memref<16x64xf32, #tpu.memory_space<vmem>>, vector<16x64xf32>
    tpu.vector_store %arg7[%c0_6, %c0_7], %9 {strides = array<i32>} : memref<16x64xf32, #tpu.memory_space<vmem>>, vector<16x64xf32>,
    %c0_i32_8 = arith.constant 0 : i32
    %11 = arith.cmpi eq, %arg2, %c0_i32_8 : i32
    %12 = arith.extui %11 : i1 to i32
    %c0_i32_9 = arith.constant 0 : i32
    %13 = arith.cmpi ne, %12, %c0_i32_9 : i32
    scf.if %13 {
      %c0_10 = arith.constant 0 : index
      %c0_11 = arith.constant 0 : index
      %14 = vector.load %arg7[%c0_10, %c0_11] : memref<16x64xf32, #tpu.memory_space<vmem>>, vector<16x64xf32>
      %c0_12 = arith.constant 0 : index
      %c0_13 = arith.constant 0 : index
      %15 = vector.load %arg5[%c0_12, %c0_13] : memref<1x64xf32, #tpu.memory_space<vmem>>, vector<1x64xf32>
      %16 = vector.broadcast %15 : vector<1x64xf32> to vector<16x64xf32>
      %17 = arith.addf %14, %16 : vector<16x64xf32>
      %c0_14 = arith.constant 0 : index
      %c0_15 = arith.constant 0 : index
      %18 = vector.load %arg6[%c0_14, %c0_15] : memref<16x64xf32, #tpu.memory_space<vmem>>, vector<16x64xf32>
      tpu.vector_store %arg6[%c0_14, %c0_15], %17 {strides = array<i32>} : memref<16x64xf32, #tpu.memory_space<vmem>>, vector<16x64xf32>,
    } else {
    }
    return
  }
  func.func @transform_0(%arg0: i32, %arg1: i32, %arg2: i32) -> (i32, i32) {
    %c0_i32 = arith.constant 0 : i32
    return %arg0, %arg2 : i32, i32
  }
  func.func @transform_1(%arg0: i32, %arg1: i32, %arg2: i32) -> (i32, i32) {
    %c0_i32 = arith.constant 0 : i32
    return %arg2, %arg1 : i32, i32
  }
  func.func @transform_2(%arg0: i32, %arg1: i32, %arg2: i32) -> (i32, i32) {
    %c0_i32 = arith.constant 0 : i32
    %c0_i32_0 = arith.constant 0 : i32
    return %c0_i32, %arg1 : i32, i32
  }
  func.func @transform_3(%arg0: i32, %arg1: i32, %arg2: i32) -> (i32, i32) {
    %c0_i32 = arith.constant 0 : i32
    return %arg0, %arg1 : i32, i32
  }
}

module attributes {stable_mosaic.version = 11 : i64} {
  func.func @_linear_kernel(%arg0: i32, %arg1: i32, %arg2: i32, %arg3: memref<16x32xf32, #tpu.memory_space<vmem>>, %arg4: memref<32x64xf32, #tpu.memory_space<vmem>>, %arg5: memref<1x64xf32, #tpu.memory_space<vmem>>, %arg6: memref<16x64xf32, #tpu.memory_space<vmem>>, %arg7: memref<16x64xf32, #tpu.memory_space<vmem>>) attributes {dimension_semantics = [#tpu.dimension_semantics<parallel>, #tpu.dimension_semantics<parallel>, #tpu.dimension_semantics<arbitrary>], iteration_bounds = array<i64: 1, 1, 1>, scalar_prefetch = 0 : i64, scratch_operands = 1 : i64, tpu.core_type = #tpu.core_type<tc>, window_params = [{transform_indices = @transform_0, window_bounds = array<i64: 16, 32>}, {transform_indices = @transform_1, window_bounds = array<i64: 32, 64>}, {transform_indices = @transform_2, window_bounds = array<i64: 1, 64>}, {transform_indices = @transform_3, window_bounds = array<i64: 16, 64>}]} {
    %c0_i32 = arith.constant 0 : i32
    %0 = arith.cmpi eq, %arg2, %c0_i32 : i32
    %1 = arith.extui %0 : i1 to i32
    %c0_i32_0 = arith.constant 0 : i32
    %2 = arith.cmpi ne, %1, %c0_i32_0 : i32
    scf.if %2 {
      %cst_10 = arith.constant 0.000000e+00 : f32
      %14 = vector.broadcast %cst_10 : f32 to vector<16x64xf32>
      %c0_11 = arith.constant 0 : index
      %c0_12 = arith.constant 0 : index
      %15 = vector.load %arg7[%c0_11, %c0_12] : memref<16x64xf32, #tpu.memory_space<vmem>>, vector<16x64xf32>
      tpu.vector_store %arg7[%c0_11, %c0_12], %14 {strides = array<i32>} : memref<16x64xf32, #tpu.memory_space<vmem>>, vector<16x64xf32>,
    } else {
    }
    %c0 = arith.constant 0 : index
    %c0_1 = arith.constant 0 : index
    %3 = vector.load %arg7[%c0, %c0_1] : memref<16x64xf32, #tpu.memory_space<vmem>>, vector<16x64xf32>
    %c0_2 = arith.constant 0 : index
    %c0_3 = arith.constant 0 : index
    %4 = vector.load %arg3[%c0_2, %c0_3] : memref<16x32xf32, #tpu.memory_space<vmem>>, vector<16x32xf32>
    %5 = arith.truncf %4 : vector<16x32xf32> to vector<16x32xbf16>
    %c0_4 = arith.constant 0 : index
    %c0_5 = arith.constant 0 : index
    %6 = vector.load %arg4[%c0_4, %c0_5] : memref<32x64xf32, #tpu.memory_space<vmem>>, vector<32x64xf32>
    %7 = arith.truncf %6 : vector<32x64xf32> to vector<32x64xbf16>
    %cst = arith.constant dense<0.000000e+00> : vector<16x64xf32>
    %8 = tpu.matmul %5, %7, %cst {dimension_numbers = #tpu.dot_dimension_numbers<[1], [0], [0], [1], [0, 0, 1, 1], [], []>} : vector<16x32xbf16>, vector<32x64xbf16>, vector<16x64xf32> -> vector<16x64xf32>
    %9 = arith.addf %3, %8 : vector<16x64xf32>
    %c0_6 = arith.constant 0 : index
    %c0_7 = arith.constant 0 : index
    %10 = vector.load %arg7[%c0_6, %c0_7] : memref<16x64xf32, #tpu.memory_space<vmem>>, vector<16x64xf32>
    tpu.vector_store %arg7[%c0_6, %c0_7], %9 {strides = array<i32>} : memref<16x64xf32, #tpu.memory_space<vmem>>, vector<16x64xf32>,
    %c0_i32_8 = arith.constant 0 : i32
    %11 = arith.cmpi eq, %arg2, %c0_i32_8 : i32
    %12 = arith.extui %11 : i1 to i32
    %c0_i32_9 = arith.constant 0 : i32
    %13 = arith.cmpi ne, %12, %c0_i32_9 : i32
    scf.if %13 {
      %c0_10 = arith.constant 0 : index
      %c0_11 = arith.constant 0 : index
      %14 = vector.load %arg7[%c0_10, %c0_11] : memref<16x64xf32, #tpu.memory_space<vmem>>, vector<16x64xf32>
      %c0_12 = arith.constant 0 : index
      %c0_13 = arith.constant 0 : index
      %15 = vector.load %arg5[%c0_12, %c0_13] : memref<1x64xf32, #tpu.memory_space<vmem>>, vector<1x64xf32>
      %16 = vector.broadcast %15 : vector<1x64xf32> to vector<16x64xf32>
      %17 = arith.addf %14, %16 : vector<16x64xf32>
      %cst_14 = arith.constant 0.000000e+00 : f32
      %18 = vector.broadcast %cst_14 : f32 to vector<16x64xf32>
      %19 = arith.maximumf %17, %18 : vector<16x64xf32>
      %c0_15 = arith.constant 0 : index
      %c0_16 = arith.constant 0 : index
      %20 = vector.load %arg6[%c0_15, %c0_16] : memref<16x64xf32, #tpu.memory_space<vmem>>, vector<16x64xf32>
      tpu.vector_store %arg6[%c0_15, %c0_16], %19 {strides = array<i32>} : memref<16x64xf32, #tpu.memory_space<vmem>>, vector<16x64xf32>,
    } else {
    }
    return
  }
  func.func @transform_0(%arg0: i32, %arg1: i32, %arg2: i32) -> (i32, i32) {
    %c0_i32 = arith.constant 0 : i32
    return %arg0, %arg2 : i32, i32
  }
  func.func @transform_1(%arg0: i32, %arg1: i32, %arg2: i32) -> (i32, i32) {
    %c0_i32 = arith.constant 0 : i32
    return %arg2, %arg1 : i32, i32
  }
  func.func @transform_2(%arg0: i32, %arg1: i32, %arg2: i32) -> (i32, i32) {
    %c0_i32 = arith.constant 0 : i32
    %c0_i32_0 = arith.constant 0 : i32
    return %c0_i32, %arg1 : i32, i32
  }
  func.func @transform_3(%arg0: i32, %arg1: i32, %arg2: i32) -> (i32, i32) {
    %c0_i32 = arith.constant 0 : i32
    return %arg0, %arg1 : i32, i32
  }
}

module attributes {stable_mosaic.version = 11 : i64} {
  func.func @_flash_attn_kernel(%arg0: i32, %arg1: i32, %arg2: i32, %arg3: i32, %arg4: memref<1x1x8x8xf32, #tpu.memory_space<vmem>>, %arg5: memref<1x1x8x8xf32, #tpu.memory_space<vmem>>, %arg6: memref<1x1x8x8xf32, #tpu.memory_space<vmem>>, %arg7: memref<1x1x8x8xf32, #tpu.memory_space<vmem>>, %arg8: memref<8x1xf32, #tpu.memory_space<vmem>>, %arg9: memref<8x1xf32, #tpu.memory_space<vmem>>, %arg10: memref<8x8xf32, #tpu.memory_space<vmem>>) attributes {dimension_semantics = [#tpu.dimension_semantics<parallel>, #tpu.dimension_semantics<parallel>, #tpu.dimension_semantics<parallel>, #tpu.dimension_semantics<arbitrary>], iteration_bounds = array<i64: 2, 4, 1, 1>, scalar_prefetch = 0 : i64, scratch_operands = 3 : i64, tpu.core_type = #tpu.core_type<tc>, window_params = [{transform_indices = @transform_0, window_bounds = array<i64: 1, 1, 8, 8>}, {transform_indices = @transform_1, window_bounds = array<i64: 1, 1, 8, 8>}, {transform_indices = @transform_2, window_bounds = array<i64: 1, 1, 8, 8>}, {transform_indices = @transform_3, window_bounds = array<i64: 1, 1, 8, 8>}]} {
    %c0_i32 = arith.constant 0 : i32
    %0 = arith.cmpi eq, %arg3, %c0_i32 : i32
    %1 = arith.extui %0 : i1 to i32
    %c0_i32_0 = arith.constant 0 : i32
    %2 = arith.cmpi ne, %1, %c0_i32_0 : i32
    scf.if %2 {
      %cst_30 = arith.constant -1.000000e+30 : f32
      %41 = vector.broadcast %cst_30 : f32 to vector<8x1xf32>
      %c0_31 = arith.constant 0 : index
      %c0_32 = arith.constant 0 : index
      %42 = vector.load %arg8[%c0_31, %c0_32] : memref<8x1xf32, #tpu.memory_space<vmem>>, vector<8x1xf32>
      tpu.vector_store %arg8[%c0_31, %c0_32], %41 {strides = array<i32>} : memref<8x1xf32, #tpu.memory_space<vmem>>, vector<8x1xf32>,
      %cst_33 = arith.constant 0.000000e+00 : f32
      %43 = vector.broadcast %cst_33 : f32 to vector<8x1xf32>
      %c0_34 = arith.constant 0 : index
      %c0_35 = arith.constant 0 : index
      %44 = vector.load %arg9[%c0_34, %c0_35] : memref<8x1xf32, #tpu.memory_space<vmem>>, vector<8x1xf32>
      tpu.vector_store %arg9[%c0_34, %c0_35], %43 {strides = array<i32>} : memref<8x1xf32, #tpu.memory_space<vmem>>, vector<8x1xf32>,
      %cst_36 = arith.constant 0.000000e+00 : f32
      %45 = vector.broadcast %cst_36 : f32 to vector<8x8xf32>
      %c0_37 = arith.constant 0 : index
      %c0_38 = arith.constant 0 : index
      %46 = vector.load %arg10[%c0_37, %c0_38] : memref<8x8xf32, #tpu.memory_space<vmem>>, vector<8x8xf32>
      tpu.vector_store %arg10[%c0_37, %c0_38], %45 {strides = array<i32>} : memref<8x8xf32, #tpu.memory_space<vmem>>, vector<8x8xf32>,
    } else {
    }
    %c0 = arith.constant 0 : index
    %c0_1 = arith.constant 0 : index
    %c0_2 = arith.constant 0 : index
    %c0_3 = arith.constant 0 : index
    %3 = vector.load %arg4[%c0, %c0_1, %c0_2, %c0_3] : memref<1x1x8x8xf32, #tpu.memory_space<vmem>>, vector<1x1x8x8xf32>
    %4 = vector.shape_cast %3 : vector<1x1x8x8xf32> to vector<8x8xf32>
    %cst = arith.constant 0.353553385 : f32
    %5 = vector.broadcast %cst : f32 to vector<8x8xf32>
    %6 = arith.mulf %4, %5 : vector<8x8xf32>
    %7 = arith.truncf %6 : vector<8x8xf32> to vector<8x8xbf16>
    %c0_4 = arith.constant 0 : index
    %c0_5 = arith.constant 0 : index
    %c0_6 = arith.constant 0 : index
    %c0_7 = arith.constant 0 : index
    %8 = vector.load %arg5[%c0_4, %c0_5, %c0_6, %c0_7] : memref<1x1x8x8xf32, #tpu.memory_space<vmem>>, vector<1x1x8x8xf32>
    %9 = vector.shape_cast %8 : vector<1x1x8x8xf32> to vector<8x8xf32>
    %10 = arith.truncf %9 : vector<8x8xf32> to vector<8x8xbf16>
    %cst_8 = arith.constant dense<0.000000e+00> : vector<8x8xf32>
    %11 = tpu.matmul %7, %10, %cst_8 {dimension_numbers = #tpu.dot_dimension_numbers<[1], [1], [0], [0], [0, 0, 1, 0], [], []>} : vector<8x8xbf16>, vector<8x8xbf16>, vector<8x8xf32> -> vector<8x8xf32>
    %c0_9 = arith.constant 0 : index
    %c0_10 = arith.constant 0 : index
    %12 = vector.load %arg8[%c0_9, %c0_10] : memref<8x1xf32, #tpu.memory_space<vmem>>, vector<8x1xf32>
    %cst_11 = arith.constant dense<0xFF800000> : vector<8xf32>
    %13 = vector.multi_reduction <maximumf>, %11, %cst_11 [1] : vector<8x8xf32> to vector<8xf32>
    %14 = vector.shape_cast %13 : vector<8xf32> to vector<8x1xf32>
    %15 = arith.maximumf %12, %14 : vector<8x1xf32>
    %16 = arith.subf %12, %15 : vector<8x1xf32>
    %17 = math.exp %16 : vector<8x1xf32>
    %18 = vector.broadcast %15 : vector<8x1xf32> to vector<8x8xf32>
    %19 = arith.subf %11, %18 : vector<8x8xf32>
    %20 = math.exp %19 : vector<8x8xf32>
    %c0_12 = arith.constant 0 : index
    %c0_13 = arith.constant 0 : index
    %21 = vector.load %arg9[%c0_12, %c0_13] : memref<8x1xf32, #tpu.memory_space<vmem>>, vector<8x1xf32>
    %22 = arith.mulf %17, %21 : vector<8x1xf32>
    %cst_14 = arith.constant dense<0.000000e+00> : vector<8xf32>
    %23 = vector.multi_reduction <add>, %20, %cst_14 [1] : vector<8x8xf32> to vector<8xf32>
    %24 = vector.shape_cast %23 : vector<8xf32> to vector<8x1xf32>
    %25 = arith.addf %22, %24 : vector<8x1xf32>
    %c0_15 = arith.constant 0 : index
    %c0_16 = arith.constant 0 : index
    %26 = vector.load %arg9[%c0_15, %c0_16] : memref<8x1xf32, #tpu.memory_space<vmem>>, vector<8x1xf32>
    tpu.vector_store %arg9[%c0_15, %c0_16], %25 {strides = array<i32>} : memref<8x1xf32, #tpu.memory_space<vmem>>, vector<8x1xf32>,
    %c0_17 = arith.constant 0 : index
    %c0_18 = arith.constant 0 : index
    %27 = vector.load %arg10[%c0_17, %c0_18] : memref<8x8xf32, #tpu.memory_space<vmem>>, vector<8x8xf32>
    %28 = vector.broadcast %17 : vector<8x1xf32> to vector<8x8xf32>
    %29 = arith.mulf %28, %27 : vector<8x8xf32>
    %30 = arith.truncf %20 : vector<8x8xf32> to vector<8x8xbf16>
    %c0_19 = arith.constant 0 : index
    %c0_20 = arith.constant 0 : index
    %c0_21 = arith.constant 0 : index
    %c0_22 = arith.constant 0 : index
    %31 = vector.load %arg6[%c0_19, %c0_20, %c0_21, %c0_22] : memref<1x1x8x8xf32, #tpu.memory_space<vmem>>, vector<1x1x8x8xf32>
    %32 = vector.shape_cast %31 : vector<1x1x8x8xf32> to vector<8x8xf32>
    %33 = arith.truncf %32 : vector<8x8xf32> to vector<8x8xbf16>
    %cst_23 = arith.constant dense<0.000000e+00> : vector<8x8xf32>
    %34 = tpu.matmul %30, %33, %cst_23 {dimension_numbers = #tpu.dot_dimension_numbers<[1], [0], [0], [1], [0, 0, 1, 1], [], []>} : vector<8x8xbf16>, vector<8x8xbf16>, vector<8x8xf32> -> vector<8x8xf32>
    %35 = arith.addf %29, %34 : vector<8x8xf32>
    %c0_24 = arith.constant 0 : index
    %c0_25 = arith.constant 0 : index
    %36 = vector.load %arg10[%c0_24, %c0_25] : memref<8x8xf32, #tpu.memory_space<vmem>>, vector<8x8xf32>
    tpu.vector_store %arg10[%c0_24, %c0_25], %35 {strides = array<i32>} : memref<8x8xf32, #tpu.memory_space<vmem>>, vector<8x8xf32>,
    %c0_26 = arith.constant 0 : index
    %c0_27 = arith.constant 0 : index
    %37 = vector.load %arg8[%c0_26, %c0_27] : memref<8x1xf32, #tpu.memory_space<vmem>>, vector<8x1xf32>
    tpu.vector_store %arg8[%c0_26, %c0_27], %15 {strides = array<i32>} : memref<8x1xf32, #tpu.memory_space<vmem>>, vector<8x1xf32>,
    %c0_i32_28 = arith.constant 0 : i32
    %38 = arith.cmpi eq, %arg3, %c0_i32_28 : i32
    %39 = arith.extui %38 : i1 to i32
    %c0_i32_29 = arith.constant 0 : i32
    %40 = arith.cmpi ne, %39, %c0_i32_29 : i32
    scf.if %40 {
      %c0_30 = arith.constant 0 : index
      %c0_31 = arith.constant 0 : index
      %41 = vector.load %arg9[%c0_30, %c0_31] : memref<8x1xf32, #tpu.memory_space<vmem>>, vector<8x1xf32>
      %42 = tpu.reciprocal %41 {approx = true} : vector<8x1xf32> -> vector<8x1xf32>
      %c0_32 = arith.constant 0 : index
      %c0_33 = arith.constant 0 : index
      %43 = vector.load %arg10[%c0_32, %c0_33] : memref<8x8xf32, #tpu.memory_space<vmem>>, vector<8x8xf32>
      %44 = vector.broadcast %42 : vector<8x1xf32> to vector<8x8xf32>
      %45 = arith.mulf %43, %44 : vector<8x8xf32>
      %c0_34 = arith.constant 0 : index
      %c0_35 = arith.constant 0 : index
      %c0_36 = arith.constant 0 : index
      %c0_37 = arith.constant 0 : index
      %46 = vector.load %arg7[%c0_34, %c0_35, %c0_36, %c0_37] : memref<1x1x8x8xf32, #tpu.memory_space<vmem>>, vector<1x1x8x8xf32>
      %47 = vector.shape_cast %46 : vector<1x1x8x8xf32> to vector<8x8xf32>
      %48 = vector.shape_cast %45 : vector<8x8xf32> to vector<1x1x8x8xf32>
      tpu.vector_store %arg7[%c0_34, %c0_35, %c0_36, %c0_37], %48 {strides = array<i32>} : memref<1x1x8x8xf32, #tpu.memory_space<vmem>>, vector<1x1x8x8xf32>,
    } else {
    }
    return
  }
  func.func @transform_0(%arg0: i32, %arg1: i32, %arg2: i32, %arg3: i32) -> (i32, i32, i32, i32) {
    %c0_i32 = arith.constant 0 : i32
    %c0_i32_0 = arith.constant 0 : i32
    return %arg0, %arg1, %arg2, %c0_i32 : i32, i32, i32, i32
  }
  func.func @transform_1(%arg0: i32, %arg1: i32, %arg2: i32, %arg3: i32) -> (i32, i32, i32, i32) {
    %c0_i32 = arith.constant 0 : i32
    %c0_i32_0 = arith.constant 0 : i32
    return %arg0, %arg1, %arg3, %c0_i32 : i32, i32, i32, i32
  }
  func.func @transform_2(%arg0: i32, %arg1: i32, %arg2: i32, %arg3: i32) -> (i32, i32, i32, i32) {
    %c0_i32 = arith.constant 0 : i32
    %c0_i32_0 = arith.constant 0 : i32
    return %arg0, %arg1, %arg3, %c0_i32 : i32, i32, i32, i32
  }
  func.func @transform_3(%arg0: i32, %arg1: i32, %arg2: i32, %arg3: i32) -> (i32, i32, i32, i32) {
    %c0_i32 = arith.constant 0 : i32
    %c0_i32_0 = arith.constant 0 : i32
    return %arg0, %arg1, %arg2, %c0_i32 : i32, i32, i32, i32
  }
}

module attributes {stable_mosaic.version = 11 : i64} {
  func.func @_linear_res_ln_kernel(%arg0: i32, %arg1: i32, %arg2: memref<16x64xf32, #tpu.memory_space<vmem>>, %arg3: memref<64x32xf32, #tpu.memory_space<vmem>>, %arg4: memref<1x32xf32, #tpu.memory_space<vmem>>, %arg5: memref<16x32xf32, #tpu.memory_space<vmem>>, %arg6: memref<1x32xf32, #tpu.memory_space<vmem>>, %arg7: memref<1x32xf32, #tpu.memory_space<vmem>>, %arg8: memref<16x32xf32, #tpu.memory_space<vmem>>, %arg9: memref<16x32xf32, #tpu.memory_space<vmem>>) attributes {dimension_semantics = [#tpu.dimension_semantics<parallel>, #tpu.dimension_semantics<arbitrary>], iteration_bounds = array<i64: 1, 1>, scalar_prefetch = 0 : i64, scratch_operands = 1 : i64, tpu.core_type = #tpu.core_type<tc>, window_params = [{transform_indices = @transform_0, window_bounds = array<i64: 16, 64>}, {transform_indices = @transform_1, window_bounds = array<i64: 64, 32>}, {pipeline_mode = #tpu.pipeline_mode<synchronous>, transform_indices = @transform_2, window_bounds = array<i64: 1, 32>}, {transform_indices = @transform_3, window_bounds = array<i64: 16, 32>}, {pipeline_mode = #tpu.pipeline_mode<synchronous>, transform_indices = @transform_4, window_bounds = array<i64: 1, 32>}, {pipeline_mode = #tpu.pipeline_mode<synchronous>, transform_indices = @transform_5, window_bounds = array<i64: 1, 32>}, {transform_indices = @transform_6, window_bounds = array<i64: 16, 32>}]} {
    %c0_i32 = arith.constant 0 : i32
    %0 = arith.cmpi eq, %arg1, %c0_i32 : i32
    %1 = arith.extui %0 : i1 to i32
    %c0_i32_0 = arith.constant 0 : i32
    %2 = arith.cmpi ne, %1, %c0_i32_0 : i32
    scf.if %2 {
      %cst_10 = arith.constant 0.000000e+00 : f32
      %14 = vector.broadcast %cst_10 : f32 to vector<16x32xf32>
      %c0_11 = arith.constant 0 : index
      %c0_12 = arith.constant 0 : index
      %15 = vector.load %arg9[%c0_11, %c0_12] : memref<16x32xf32, #tpu.memory_space<vmem>>, vector<16x32xf32>
      tpu.vector_store %arg9[%c0_11, %c0_12], %14 {strides = array<i32>} : memref<16x32xf32, #tpu.memory_space<vmem>>, vector<16x32xf32>,
    } else {
    }
    %c0 = arith.constant 0 : index
    %c0_1 = arith.constant 0 : index
    %3 = vector.load %arg9[%c0, %c0_1] : memref<16x32xf32, #tpu.memory_space<vmem>>, vector<16x32xf32>
    %c0_2 = arith.constant 0 : index
    %c0_3 = arith.constant 0 : index
    %4 = vector.load %arg2[%c0_2, %c0_3] : memref<16x64xf32, #tpu.memory_space<vmem>>, vector<16x64xf32>
    %5 = arith.truncf %4 : vector<16x64xf32> to vector<16x64xbf16>
    %c0_4 = arith.constant 0 : index
    %c0_5 = arith.constant 0 : index
    %6 = vector.load %arg3[%c0_4, %c0_5] : memref<64x32xf32, #tpu.memory_space<vmem>>, vector<64x32xf32>
    %7 = arith.truncf %6 : vector<64x32xf32> to vector<64x32xbf16>
    %cst = arith.constant dense<0.000000e+00> : vector<16x32xf32>
    %8 = tpu.matmul %5, %7, %cst {dimension_numbers = #tpu.dot_dimension_numbers<[1], [0], [0], [1], [0, 0, 1, 1], [], []>} : vector<16x64xbf16>, vector<64x32xbf16>, vector<16x32xf32> -> vector<16x32xf32>
    %9 = arith.addf %3, %8 : vector<16x32xf32>
    %c0_6 = arith.constant 0 : index
    %c0_7 = arith.constant 0 : index
    %10 = vector.load %arg9[%c0_6, %c0_7] : memref<16x32xf32, #tpu.memory_space<vmem>>, vector<16x32xf32>
    tpu.vector_store %arg9[%c0_6, %c0_7], %9 {strides = array<i32>} : memref<16x32xf32, #tpu.memory_space<vmem>>, vector<16x32xf32>,
    %c0_i32_8 = arith.constant 0 : i32
    %11 = arith.cmpi eq, %arg1, %c0_i32_8 : i32
    %12 = arith.extui %11 : i1 to i32
    %c0_i32_9 = arith.constant 0 : i32
    %13 = arith.cmpi ne, %12, %c0_i32_9 : i32
    scf.if %13 {
      %c0_10 = arith.constant 0 : index
      %c0_11 = arith.constant 0 : index
      %14 = vector.load %arg9[%c0_10, %c0_11] : memref<16x32xf32, #tpu.memory_space<vmem>>, vector<16x32xf32>
      %c0_12 = arith.constant 0 : index
      %c0_13 = arith.constant 0 : index
      %15 = vector.load %arg4[%c0_12, %c0_13] : memref<1x32xf32, #tpu.memory_space<vmem>>, vector<1x32xf32>
      %16 = vector.broadcast %15 : vector<1x32xf32> to vector<16x32xf32>
      %17 = arith.addf %14, %16 : vector<16x32xf32>
      %c0_14 = arith.constant 0 : index
      %c0_15 = arith.constant 0 : index
      %18 = vector.load %arg5[%c0_14, %c0_15] : memref<16x32xf32, #tpu.memory_space<vmem>>, vector<16x32xf32>
      %19 = arith.addf %17, %18 : vector<16x32xf32>
      %cst_16 = arith.constant dense<0.000000e+00> : vector<16xf32>
      %20 = vector.multi_reduction <add>, %19, %cst_16 [1] : vector<16x32xf32> to vector<16xf32>
      %21 = vector.shape_cast %20 : vector<16xf32> to vector<16x1xf32>
      %cst_17 = arith.constant 3.200000e+01 : f32
      %22 = vector.broadcast %cst_17 : f32 to vector<16x1xf32>
      %23 = arith.divf %21, %22 : vector<16x1xf32>
      %24 = vector.broadcast %23 : vector<16x1xf32> to vector<16x32xf32>
      %25 = arith.subf %19, %24 : vector<16x32xf32>
      %26 = arith.mulf %25, %25 : vector<16x32xf32>
      %cst_18 = arith.constant dense<0.000000e+00> : vector<16xf32>
      %27 = vector.multi_reduction <add>, %26, %cst_18 [1] : vector<16x32xf32> to vector<16xf32>
      %28 = vector.shape_cast %27 : vector<16xf32> to vector<16x1xf32>
      %cst_19 = arith.constant 3.200000e+01 : f32
      %29 = vector.broadcast %cst_19 : f32 to vector<16x1xf32>
      %30 = arith.divf %28, %29 : vector<16x1xf32>
      %31 = vector.broadcast %23 : vector<16x1xf32> to vector<16x32xf32>
      %32 = arith.subf %19, %31 : vector<16x32xf32>
      %cst_20 = arith.constant 9.99999974E-6 : f32
      %33 = vector.broadcast %cst_20 : f32 to vector<16x1xf32>
      %34 = arith.addf %30, %33 : vector<16x1xf32>
      %35 = math.rsqrt %34 : vector<16x1xf32>
      %36 = vector.broadcast %35 : vector<16x1xf32> to vector<16x32xf32>
      %37 = arith.mulf %32, %36 : vector<16x32xf32>
      %c0_21 = arith.constant 0 : index
      %c0_22 = arith.constant 0 : index
      %38 = vector.load %arg6[%c0_21, %c0_22] : memref<1x32xf32, #tpu.memory_space<vmem>>, vector<1x32xf32>
      %39 = vector.broadcast %38 : vector<1x32xf32> to vector<16x32xf32>
      %40 = arith.mulf %37, %39 : vector<16x32xf32>
      %c0_23 = arith.constant 0 : index
      %c0_24 = arith.constant 0 : index
      %41 = vector.load %arg7[%c0_23, %c0_24] : memref<1x32xf32, #tpu.memory_space<vmem>>, vector<1x32xf32>
      %42 = vector.broadcast %41 : vector<1x32xf32> to vector<16x32xf32>
      %43 = arith.addf %40, %42 : vector<16x32xf32>
      %c0_25 = arith.constant 0 : index
      %c0_26 = arith.constant 0 : index
      %44 = vector.load %arg8[%c0_25, %c0_26] : memref<16x32xf32, #tpu.memory_space<vmem>>, vector<16x32xf32>
      tpu.vector_store %arg8[%c0_25, %c0_26], %43 {strides = array<i32>} : memref<16x32xf32, #tpu.memory_space<vmem>>, vector<16x32xf32>,
    } else {
    }
    return
  }
  func.func @transform_0(%arg0: i32, %arg1: i32) -> (i32, i32) {
    %c0_i32 = arith.constant 0 : i32
    return %arg0, %arg1 : i32, i32
  }
  func.func @transform_1(%arg0: i32, %arg1: i32) -> (i32, i32) {
    %c0_i32 = arith.constant 0 : i32
    %c0_i32_0 = arith.constant 0 : i32
    return %arg1, %c0_i32 : i32, i32
  }
  func.func @transform_2(%arg0: i32, %arg1: i32) -> (i32, i32) {
    %c0_i32 = arith.constant 0 : i32
    %c0_i32_0 = arith.constant 0 : i32
    %c0_i32_1 = arith.constant 0 : i32
    return %c0_i32, %c0_i32_0 : i32, i32
  }
  func.func @transform_3(%arg0: i32, %arg1: i32) -> (i32, i32) {
    %c0_i32 = arith.constant 0 : i32
    %c0_i32_0 = arith.constant 0 : i32
    return %arg0, %c0_i32 : i32, i32
  }
  func.func @transform_4(%arg0: i32, %arg1: i32) -> (i32, i32) {
    %c0_i32 = arith.constant 0 : i32
    %c0_i32_0 = arith.constant 0 : i32
    %c0_i32_1 = arith.constant 0 : i32
    return %c0_i32, %c0_i32_0 : i32, i32
  }
  func.func @transform_5(%arg0: i32, %arg1: i32) -> (i32, i32) {
    %c0_i32 = arith.constant 0 : i32
    %c0_i32_0 = arith.constant 0 : i32
    %c0_i32_1 = arith.constant 0 : i32
    return %c0_i32, %c0_i32_0 : i32, i32
  }
  func.func @transform_6(%arg0: i32, %arg1: i32) -> (i32, i32) {
    %c0_i32 = arith.constant 0 : i32
    %c0_i32_0 = arith.constant 0 : i32
    return %arg0, %c0_i32 : i32, i32
  }
}

module attributes {stable_mosaic.version = 11 : i64} {
  func.func @_linear_res_ln_kernel(%arg0: i32, %arg1: i32, %arg2: memref<16x64xf32, #tpu.memory_space<vmem>>, %arg3: memref<64x32xf32, #tpu.memory_space<vmem>>, %arg4: memref<1x32xf32, #tpu.memory_space<vmem>>, %arg5: memref<16x32xf32, #tpu.memory_space<vmem>>, %arg6: memref<1x32xf32, #tpu.memory_space<vmem>>, %arg7: memref<1x32xf32, #tpu.memory_space<vmem>>, %arg8: memref<16x32xf32, #tpu.memory_space<vmem>>, %arg9: memref<16x32xf32, #tpu.memory_space<vmem>>) attributes {dimension_semantics = [#tpu.dimension_semantics<parallel>, #tpu.dimension_semantics<arbitrary>], iteration_bounds = array<i64: 1, 1>, scalar_prefetch = 0 : i64, scratch_operands = 1 : i64, tpu.core_type = #tpu.core_type<tc>, window_params = [{transform_indices = @transform_0, window_bounds = array<i64: 16, 64>}, {transform_indices = @transform_1, window_bounds = array<i64: 64, 32>}, {pipeline_mode = #tpu.pipeline_mode<synchronous>, transform_indices = @transform_2, window_bounds = array<i64: 1, 32>}, {transform_indices = @transform_3, window_bounds = array<i64: 16, 32>}, {pipeline_mode = #tpu.pipeline_mode<synchronous>, transform_indices = @transform_4, window_bounds = array<i64: 1, 32>}, {pipeline_mode = #tpu.pipeline_mode<synchronous>, transform_indices = @transform_5, window_bounds = array<i64: 1, 32>}, {transform_indices = @transform_6, window_bounds = array<i64: 16, 32>}]} {
    %c0_i32 = arith.constant 0 : i32
    %0 = arith.cmpi eq, %arg1, %c0_i32 : i32
    %1 = arith.extui %0 : i1 to i32
    %c0_i32_0 = arith.constant 0 : i32
    %2 = arith.cmpi ne, %1, %c0_i32_0 : i32
    scf.if %2 {
      %cst_10 = arith.constant 0.000000e+00 : f32
      %14 = vector.broadcast %cst_10 : f32 to vector<16x32xf32>
      %c0_11 = arith.constant 0 : index
      %c0_12 = arith.constant 0 : index
      %15 = vector.load %arg9[%c0_11, %c0_12] : memref<16x32xf32, #tpu.memory_space<vmem>>, vector<16x32xf32>
      tpu.vector_store %arg9[%c0_11, %c0_12], %14 {strides = array<i32>} : memref<16x32xf32, #tpu.memory_space<vmem>>, vector<16x32xf32>,
    } else {
    }
    %c0 = arith.constant 0 : index
    %c0_1 = arith.constant 0 : index
    %3 = vector.load %arg9[%c0, %c0_1] : memref<16x32xf32, #tpu.memory_space<vmem>>, vector<16x32xf32>
    %c0_2 = arith.constant 0 : index
    %c0_3 = arith.constant 0 : index
    %4 = vector.load %arg2[%c0_2, %c0_3] : memref<16x64xf32, #tpu.memory_space<vmem>>, vector<16x64xf32>
    %5 = arith.truncf %4 : vector<16x64xf32> to vector<16x64xbf16>
    %c0_4 = arith.constant 0 : index
    %c0_5 = arith.constant 0 : index
    %6 = vector.load %arg3[%c0_4, %c0_5] : memref<64x32xf32, #tpu.memory_space<vmem>>, vector<64x32xf32>
    %7 = arith.truncf %6 : vector<64x32xf32> to vector<64x32xbf16>
    %cst = arith.constant dense<0.000000e+00> : vector<16x32xf32>
    %8 = tpu.matmul %5, %7, %cst {dimension_numbers = #tpu.dot_dimension_numbers<[1], [0], [0], [1], [0, 0, 1, 1], [], []>} : vector<16x64xbf16>, vector<64x32xbf16>, vector<16x32xf32> -> vector<16x32xf32>
    %9 = arith.addf %3, %8 : vector<16x32xf32>
    %c0_6 = arith.constant 0 : index
    %c0_7 = arith.constant 0 : index
    %10 = vector.load %arg9[%c0_6, %c0_7] : memref<16x32xf32, #tpu.memory_space<vmem>>, vector<16x32xf32>
    tpu.vector_store %arg9[%c0_6, %c0_7], %9 {strides = array<i32>} : memref<16x32xf32, #tpu.memory_space<vmem>>, vector<16x32xf32>,
    %c0_i32_8 = arith.constant 0 : i32
    %11 = arith.cmpi eq, %arg1, %c0_i32_8 : i32
    %12 = arith.extui %11 : i1 to i32
    %c0_i32_9 = arith.constant 0 : i32
    %13 = arith.cmpi ne, %12, %c0_i32_9 : i32
    scf.if %13 {
      %c0_10 = arith.constant 0 : index
      %c0_11 = arith.constant 0 : index
      %14 = vector.load %arg9[%c0_10, %c0_11] : memref<16x32xf32, #tpu.memory_space<vmem>>, vector<16x32xf32>
      %c0_12 = arith.constant 0 : index
      %c0_13 = arith.constant 0 : index
      %15 = vector.load %arg4[%c0_12, %c0_13] : memref<1x32xf32, #tpu.memory_space<vmem>>, vector<1x32xf32>
      %16 = vector.broadcast %15 : vector<1x32xf32> to vector<16x32xf32>
      %17 = arith.addf %14, %16 : vector<16x32xf32>
      %c0_14 = arith.constant 0 : index
      %c0_15 = arith.constant 0 : index
      %18 = vector.load %arg5[%c0_14, %c0_15] : memref<16x32xf32, #tpu.memory_space<vmem>>, vector<16x32xf32>
      %19 = arith.addf %17, %18 : vector<16x32xf32>
      %cst_16 = arith.constant dense<0.000000e+00> : vector<16xf32>
      %20 = vector.multi_reduction <add>, %19, %cst_16 [1] : vector<16x32xf32> to vector<16xf32>
      %21 = vector.shape_cast %20 : vector<16xf32> to vector<16x1xf32>
      %cst_17 = arith.constant 3.200000e+01 : f32
      %22 = vector.broadcast %cst_17 : f32 to vector<16x1xf32>
      %23 = arith.divf %21, %22 : vector<16x1xf32>
      %24 = vector.broadcast %23 : vector<16x1xf32> to vector<16x32xf32>
      %25 = arith.subf %19, %24 : vector<16x32xf32>
      %26 = arith.mulf %25, %25 : vector<16x32xf32>
      %cst_18 = arith.constant dense<0.000000e+00> : vector<16xf32>
      %27 = vector.multi_reduction <add>, %26, %cst_18 [1] : vector<16x32xf32> to vector<16xf32>
      %28 = vector.shape_cast %27 : vector<16xf32> to vector<16x1xf32>
      %cst_19 = arith.constant 3.200000e+01 : f32
      %29 = vector.broadcast %cst_19 : f32 to vector<16x1xf32>
      %30 = arith.divf %28, %29 : vector<16x1xf32>
      %31 = vector.broadcast %23 : vector<16x1xf32> to vector<16x32xf32>
      %32 = arith.subf %19, %31 : vector<16x32xf32>
      %cst_20 = arith.constant 9.99999974E-6 : f32
      %33 = vector.broadcast %cst_20 : f32 to vector<16x1xf32>
      %34 = arith.addf %30, %33 : vector<16x1xf32>
      %35 = math.rsqrt %34 : vector<16x1xf32>
      %36 = vector.broadcast %35 : vector<16x1xf32> to vector<16x32xf32>
      %37 = arith.mulf %32, %36 : vector<16x32xf32>
      %c0_21 = arith.constant 0 : index
      %c0_22 = arith.constant 0 : index
      %38 = vector.load %arg6[%c0_21, %c0_22] : memref<1x32xf32, #tpu.memory_space<vmem>>, vector<1x32xf32>
      %39 = vector.broadcast %38 : vector<1x32xf32> to vector<16x32xf32>
      %40 = arith.mulf %37, %39 : vector<16x32xf32>
      %c0_23 = arith.constant 0 : index
      %c0_24 = arith.constant 0 : index
      %41 = vector.load %arg7[%c0_23, %c0_24] : memref<1x32xf32, #tpu.memory_space<vmem>>, vector<1x32xf32>
      %42 = vector.broadcast %41 : vector<1x32xf32> to vector<16x32xf32>
      %43 = arith.addf %40, %42 : vector<16x32xf32>
      %c0_25 = arith.constant 0 : index
      %c0_26 = arith.constant 0 : index
      %44 = vector.load %arg8[%c0_25, %c0_26] : memref<16x32xf32, #tpu.memory_space<vmem>>, vector<16x32xf32>
      tpu.vector_store %arg8[%c0_25, %c0_26], %43 {strides = array<i32>} : memref<16x32xf32, #tpu.memory_space<vmem>>, vector<16x32xf32>,
    } else {
    }
    return
  }
  func.func @transform_0(%arg0: i32, %arg1: i32) -> (i32, i32) {
    %c0_i32 = arith.constant 0 : i32
    return %arg0, %arg1 : i32, i32
  }
  func.func @transform_1(%arg0: i32, %arg1: i32) -> (i32, i32) {
    %c0_i32 = arith.constant 0 : i32
    %c0_i32_0 = arith.constant 0 : i32
    return %arg1, %c0_i32 : i32, i32
  }
  func.func @transform_2(%arg0: i32, %arg1: i32) -> (i32, i32) {
    %c0_i32 = arith.constant 0 : i32
    %c0_i32_0 = arith.constant 0 : i32
    %c0_i32_1 = arith.constant 0 : i32
    return %c0_i32, %c0_i32_0 : i32, i32
  }
  func.func @transform_3(%arg0: i32, %arg1: i32) -> (i32, i32) {
    %c0_i32 = arith.constant 0 : i32
    %c0_i32_0 = arith.constant 0 : i32
    return %arg0, %c0_i32 : i32, i32
  }
  func.func @transform_4(%arg0: i32, %arg1: i32) -> (i32, i32) {
    %c0_i32 = arith.constant 0 : i32
    %c0_i32_0 = arith.constant 0 : i32
    %c0_i32_1 = arith.constant 0 : i32
    return %c0_i32, %c0_i32_0 : i32, i32
  }
  func.func @transform_5(%arg0: i32, %arg1: i32) -> (i32, i32) {
    %c0_i32 = arith.constant 0 : i32
    %c0_i32_0 = arith.constant 0 : i32
    %c0_i32_1 = arith.constant 0 : i32
    return %c0_i32, %c0_i32_0 : i32, i32
  }
  func.func @transform_6(%arg0: i32, %arg1: i32) -> (i32, i32) {
    %c0_i32 = arith.constant 0 : i32
    %c0_i32_0 = arith.constant 0 : i32
    return %arg0, %c0_i32 : i32, i32
  }
}

</mosaic_0001>

<llo_original>
// kernel: transformer_decoder.18
$region0: #{transformer_decoder.18}
  #allocation0 [shape = 'u32[]', space=smem, size = 0x4, offset = 0x4, fixed_abs, tag = 'smem constant byte address 0x4 - core index']
  #allocation1 [shape = 'u32[144,128]{1,0:T(1,128)}', space=vmem, size = 0x12000, scoped, tag = 'internal scratch']
  #allocation2 [shape = 'f32[16,96]{1,0:T(8,128)}', space=vmem, size = 0x2000, scoped, tag = 'scratch operand']
  %s0 = inlined_call_operand.vmem [shape: f32[16,32], index: 0, kind: input, shape index: {}]
  %s1 = inlined_call_operand.vmem [shape: f32[32,96], index: 1, kind: input, shape index: {}]
  %s2 = inlined_call_operand.vmem [shape: f32[1,96], index: 2, kind: input, shape index: {}]
  %s3 = inlined_call_operand.vmem [shape: f32[16,96], index: 3, kind: output, shape index: {}]
  %s4 = sld [smem:[#allocation0]]
  $region30: #{transformer_decoder.18} parent=0
    _
  %s6 = ssub.s32 1, %s4
  %s7 = scalar_select 0, %s6, %s4
  // Predicated region
  $region2: #{transformer_decoder.18} parent=0 // pred_check
    _
  $region3: #{transformer_decoder.18} parent=0 // pred_check_branch
    %9 = sbr.rel (0) target = $region5
  $region4: #{transformer_decoder.18} parent=0 // pred_region
    _
  $region5: #{transformer_decoder.18} parent=0 // pred_fallthru
    _
  // Predicated region
  $region6: #{transformer_decoder.18} parent=0 // pred_check
    _
  $region7: #{transformer_decoder.18} parent=0 // pred_check_branch
    %11 = sbr.rel (0) target = $region9
  $region8: #{transformer_decoder.18} parent=0 // pred_region
    _
  $region9: #{transformer_decoder.18} parent=0 // pred_fallthru
    _
  // Predicated region
  $region10: #{transformer_decoder.18} parent=0 // pred_check
    _
  $region11: #{transformer_decoder.18} parent=0 // pred_check_branch
    %13 = sbr.rel (0) target = $region13
  $region12: #{transformer_decoder.18} parent=0 // pred_region
    _
  $region13: #{transformer_decoder.18} parent=0 // pred_fallthru
    _
  %p15 = scmp.eq.s32.totalorder 0, 0
  // Predicated region
  $region14: #{transformer_decoder.18} parent=0 // pred_check
    %p16 = pneg %p15
  $region15: #{transformer_decoder.18} parent=0 // pred_check_branch
    %18 = sbr.rel (%p16) target = $region17
  $region16: #{transformer_decoder.18} parent=0 // pred_region
    %vm19 = vcmask 785408
    %20 = vst.msk [vmem:[#allocation2] sm:$0xff] %vm19, 0.0
    %21 = vst.msk [vmem:[#allocation2 + $0x8] sm:$0xff] %vm19, 0.0
  $region17: #{transformer_decoder.18} parent=0 // pred_fallthru
    _
  %v22 = vld [vmem:[#allocation2] sm:$0xff]
  %v23 = vld [vmem:[#allocation2 + $0x8] sm:$0xff]
  %v24 = vld [vmem:[%s0] sm:$0xff]
  %v25 = vld [vmem:[%s0 + $0x8] sm:$0xff]
  %v26 = vpack.c.bf16 %v25, %v24
  %v27 = vld [vmem:[%s1] sm:$0xff]
  %v28 = vld [vmem:[%s1 + $0x8] sm:$0xff]
  %v29 = vld [vmem:[%s1 + $0x10] sm:$0xff]
  %v30 = vld [vmem:[%s1 + $0x18] sm:$0xff]
  %v31 = vpack.c.bf16 %v28, %v27
  %v32 = vpack.c.bf16 %v30, %v29
  %vm33 = vcmask 261120
  %v35 = vsel %vm33, %v26, 0
  %37 = vmatprep.subr.bf16.mxu0 0
  %38 = vmatpush1.bf16.msra.mxu0 %v31
  %39 = vmatprep.subr.bf16.mxu0 0
  %40 = vmatpush1.bf16.msra.mxu0 %v32
  %41 = vmatprep.subr.bf16.mxu0 0
  %42 = vmatpush1.bf16.msra.mxu0 0
  %43 = vmatprep.subr.bf16.mxu0 0
  %44 = vmatpush1.bf16.msra.mxu0 0
  %45 = vmatprep.subr.bf16.mxu0 0
  %46 = vmatpush1.bf16.msra.mxu0 0
  %47 = vmatprep.subr.bf16.mxu0 0
  %48 = vmatpush1.bf16.msra.mxu0 0
  %49 = vmatprep.subr.bf16.mxu0 0
  %50 = vmatpush1.bf16.msra.mxu0 0
  %51 = vmatprep.subr.bf16.mxu0 0
  %52 = vmatpush1.bf16.msra.mxu0 0
  %53 = vmatprep.subr.bf16.mxu0 0
  %54 = vmatpush1.bf16.msra.mxu0 0
  %55 = vmatprep.subr.bf16.mxu0 0
  %56 = vmatpush1.bf16.msra.mxu0 0
  %57 = vmatprep.subr.bf16.mxu0 0
  %58 = vmatpush1.bf16.msra.mxu0 0
  %59 = vmatprep.subr.bf16.mxu0 0
  %60 = vmatpush1.bf16.msra.mxu0 0
  %61 = vmatprep.subr.bf16.mxu0 0
  %62 = vmatpush1.bf16.msra.mxu0 0
  %63 = vmatprep.subr.bf16.mxu0 0
  %64 = vmatpush1.bf16.msra.mxu0 0
  %65 = vmatprep.subr.bf16.mxu0 0
  %66 = vmatpush1.bf16.msra.mxu0 0
  %67 = vmatprep.subr.bf16.mxu0 0
  %68 = vmatpush1.bf16.msra.mxu0 0
  %69 = vmatprep.mubr.bf16.mxu0 0
  %70 = vmatmul.mubr.bf16.gmra.mrb[0].mxu0 %v35
  %v71 = vpop.f32.mrb[0].mxu0
  %v72 = vadd.f32 0.0, %v71
  %v73 = vpop.f32.mrb[0].mxu0
  %v74 = vpop.f32.mrb[0].mxu0
  %v75 = vadd.f32 0.0, %v74
  %v76 = vpop.f32.mrb[0].mxu0
  %77 = vdwg.mxu0
  %v78 = vadd.f32 %v22, %v72
  %v79 = vadd.f32 %v23, %v75
  %vm80 = vcmask 785408
  %81 = vst.msk [vmem:[#allocation2] sm:$0xff] %vm80, %v78
  %82 = vst.msk [vmem:[#allocation2 + $0x8] sm:$0xff] %vm80, %v79
  // Predicated region
  $region18: #{transformer_decoder.18} parent=0 // pred_check
    %p83 = pneg %p15
  $region19: #{transformer_decoder.18} parent=0 // pred_check_branch
    %85 = sbr.rel (%p83) target = $region21
  $region20: #{transformer_decoder.18} parent=0 // pred_region
    %v86 = vld [vmem:[#allocation2] sm:$0xff]
    %v87 = vld [vmem:[#allocation2 + $0x8] sm:$0xff]
    %v88 = vld [vmem:[%s2] sm:$0x1]
    %v90 = vlaneseq
    %v91 = vshrl.u32 %v90, 7
    %v92 = vsub.s32 0, %v91
    %v93 = vrot.slane %v88, %v92
    %v95 = vadd.f32 %v86, %v93
    %v96 = vadd.f32 %v87, %v93
    %97 = vst.msk [vmem:[%s3] sm:$0xff] %vm80, %v95
    %98 = vst.msk [vmem:[%s3 + $0x8] sm:$0xff] %vm80, %v96
  $region21: #{transformer_decoder.18} parent=0 // pred_fallthru
    _
  // Predicated region
  $region22: #{transformer_decoder.18} parent=0 // pred_check
    _
  $region23: #{transformer_decoder.18} parent=0 // pred_check_branch
    %100 = sbr.rel (0) target = $region25
  $region24: #{transformer_decoder.18} parent=0 // pred_region
    _
  $region25: #{transformer_decoder.18} parent=0 // pred_fallthru
    _
  // Predicated region
  $region26: #{transformer_decoder.18} parent=0 // pred_check
    _
  $region27: #{transformer_decoder.18} parent=0 // pred_check_branch
    %102 = sbr.rel (0) target = $region29
  $region28: #{transformer_decoder.18} parent=0 // pred_region
    _
  $region29: #{transformer_decoder.18} parent=0 // pred_fallthru
    _

// kernel: transformer_decoder.19
$region0: #{transformer_decoder.19}
  #allocation0 [shape = 'u32[]', space=smem, size = 0x4, offset = 0x4, fixed_abs, tag = 'smem constant byte address 0x4 - core index']
  #allocation1 [shape = 'u32[144,128]{1,0:T(1,128)}', space=vmem, size = 0x12000, scoped, tag = 'internal scratch']
  #allocation2 [shape = 'f32[8,1]{1,0:T(8,128)}', space=vmem, size = 0x1000, scoped, tag = 'scratch operand']
  #allocation3 [shape = 'f32[8,1]{1,0:T(8,128)}', space=vmem, size = 0x1000, scoped, tag = 'scratch operand']
  #allocation4 [shape = 'f32[8,8]{1,0:T(8,128)}', space=vmem, size = 0x1000, scoped, tag = 'scratch operand']
  %s0 = inlined_call_operand.vmem [shape: f32[2,4,8,8], index: 0, kind: input, shape index: {}]
  %s1 = inlined_call_operand.vmem [shape: f32[2,4,8,8], index: 1, kind: input, shape index: {}]
  %s2 = inlined_call_operand.vmem [shape: f32[2,4,8,8], index: 2, kind: input, shape index: {}]
  %s3 = inlined_call_operand.vmem [shape: f32[2,4,8,8], index: 3, kind: output, shape index: {}]
  %s4 = sld [smem:[#allocation0]]
  $region57: #{transformer_decoder.19} parent=0
    _
  %s6 = ssub.s32 1, %s4
  %s7 = scalar_select 0, %s6, %s4
  loop: start=0, step=1, limit=10
  $region2: #{transformer_decoder.19} parent=0 // loop_pre_header
    _
  $region3: #{transformer_decoder.19} parent=0 // loop_header
    %s9 = sphi 0, %s13
    %p10 = scmp.ge.s32.totalorder %s9, 10
    %s16 = sphi 0, %s42
    %s17 = sphi 0, %s38
    %s18 = sphi 0, %s34
    %s19 = sphi 0, %s30
    %s20 = sphi 0, %s16
    %s21 = sphi 0, %s17
    %s22 = sphi 0, %s18
    %s23 = sphi 0, %s19
    %s24 = sphi 0, %s20
    %s25 = sphi 0, %s21
    %s26 = sphi 0, %s22
    %s27 = sphi 0, %s23
    %s49 = sphi 0, %s51
    %s52 = sphi 0, %s49
    %s53 = sphi 0, %s52
    %s69 = sphi 0, %s53
    %s79 = sphi 0, %s81
    %s82 = sphi 0, %s79
    %s83 = sphi 0, %s82
    %s99 = sphi 0, %s83
    %s109 = sphi 0, %s111
    %s112 = sphi 0, %s109
    %s113 = sphi 0, %s112
    %s129 = sphi 0, %s113
    %s139 = sphi 0, %s141
    %s142 = sphi 0, %s139
    %s143 = sphi 0, %s142
    %s159 = sphi 0, %s143
  $region4: #{transformer_decoder.19} parent=0 // loop_header_branch
    %12 = sbr.rel (%p10) target = $region8
  $region5: #{transformer_decoder.19} parent=0 // loop_body
    %s14 = ssub.s32 %s9, 1
    %s15 = ssub.s32 %s9, 2
    %s28 = sadd.s32 1, %s19
    %p29 = scmp.ge.s32.totalorder %s28, 1
    %s30 = scalar_select %p29, 0, %s28
    %s31 = sadd.s32 1, %s18
    %s32 = scalar_select %p29, %s31, %s18
    %p33 = scmp.ge.s32.totalorder %s32, 1
    %s34 = scalar_select %p33, 0, %s32
    %s35 = sadd.s32 1, %s17
    %s36 = scalar_select %p33, %s35, %s17
    %p37 = scmp.ge.s32.totalorder %s36, 4
    %s38 = scalar_select %p37, 0, %s36
    %s39 = sadd.s32 1, %s16
    %s40 = scalar_select %p37, %s39, %s16
    %p41 = scmp.ge.s32.totalorder %s40, 2
    %s42 = scalar_select %p41, 0, %s40
    %s43 = ssub.s32 %s16, %s42
    %s44 = ssub.s32 %s17, %s38
    %s45 = sor.u32 %s43, %s44
    %s46 = ssub.s32 %s18, %s34
    %s47 = sor.u32 %s45, %s46
    %p48 = scmp.eq.s32.totalorder %s47, 0
    %s50 = sadd.s32 %s49, 1
    %s51 = scalar_select %p48, %s49, %s50
    %p54 = pneg %p48
    %p55 = scmp.eq.s32.totalorder %s9, 7
    %p56 = por %p54, %p55
    %p57 = scmp.ne.s32.totalorder %s49, %s52
    %p58 = scmp.eq.s32.totalorder %s9, 0
    %p59 = por %p57, %p58
    %p60 = scmp.ne.s32.totalorder %s49, %s52
    %p61 = scmp.eq.s32.totalorder %s14, 7
    %p62 = por %p60, %p61
    %p63 = scmp.ne.s32.totalorder %s52, %s53
    %p64 = scmp.eq.s32.totalorder %s14, 0
    %p65 = por %p63, %p64
    %p66 = scmp.ne.s32.totalorder %s52, %s53
    %p67 = scmp.eq.s32.totalorder %s15, 7
    %p68 = por %p66, %p67
    %p70 = scmp.ne.s32.totalorder %s53, %s69
    %p71 = scmp.eq.s32.totalorder %s15, 0
    %p72 = por %p70, %p71
    %s73 = ssub.s32 %s16, %s42
    %s74 = ssub.s32 %s17, %s38
    %s75 = sor.u32 %s73, %s74
    %s76 = ssub.s32 %s19, %s30
    %s77 = sor.u32 %s75, %s76
    %p78 = scmp.eq.s32.totalorder %s77, 0
    %s80 = sadd.s32 %s79, 1
    %s81 = scalar_select %p78, %s79, %s80
    %p84 = pneg %p78
    %p85 = scmp.eq.s32.totalorder %s9, 7
    %p86 = por %p84, %p85
    %p87 = scmp.ne.s32.totalorder %s79, %s82
    %p88 = scmp.eq.s32.totalorder %s9, 0
    %p89 = por %p87, %p88
    %p90 = scmp.ne.s32.totalorder %s79, %s82
    %p91 = scmp.eq.s32.totalorder %s14, 7
    %p92 = por %p90, %p91
    %p93 = scmp.ne.s32.totalorder %s82, %s83
    %p94 = scmp.eq.s32.totalorder %s14, 0
    %p95 = por %p93, %p94
    %p96 = scmp.ne.s32.totalorder %s82, %s83
    %p97 = scmp.eq.s32.totalorder %s15, 7
    %p98 = por %p96, %p97
    %p100 = scmp.ne.s32.totalorder %s83, %s99
    %p101 = scmp.eq.s32.totalorder %s15, 0
    %p102 = por %p100, %p101
    %s103 = ssub.s32 %s16, %s42
    %s104 = ssub.s32 %s17, %s38
    %s105 = sor.u32 %s103, %s104
    %s106 = ssub.s32 %s19, %s30
    %s107 = sor.u32 %s105, %s106
    %p108 = scmp.eq.s32.totalorder %s107, 0
    %s110 = sadd.s32 %s109, 1
    %s111 = scalar_select %p108, %s109, %s110
    %p114 = pneg %p108
    %p115 = scmp.eq.s32.totalorder %s9, 7
    %p116 = por %p114, %p115
    %p117 = scmp.ne.s32.totalorder %s109, %s112
    %p118 = scmp.eq.s32.totalorder %s9, 0
    %p119 = por %p117, %p118
    %p120 = scmp.ne.s32.totalorder %s109, %s112
    %p121 = scmp.eq.s32.totalorder %s14, 7
    %p122 = por %p120, %p121
    %p123 = scmp.ne.s32.totalorder %s112, %s113
    %p124 = scmp.eq.s32.totalorder %s14, 0
    %p125 = por %p123, %p124
    %p126 = scmp.ne.s32.totalorder %s112, %s113
    %p127 = scmp.eq.s32.totalorder %s15, 7
    %p128 = por %p126, %p127
    %p130 = scmp.ne.s32.totalorder %s113, %s129
    %p131 = scmp.eq.s32.totalorder %s15, 0
    %p132 = por %p130, %p131
    %s133 = ssub.s32 %s16, %s42
    %s134 = ssub.s32 %s17, %s38
    %s135 = sor.u32 %s133, %s134
    %s136 = ssub.s32 %s18, %s34
    %s137 = sor.u32 %s135, %s136
    %p138 = scmp.eq.s32.totalorder %s137, 0
    %s140 = sadd.s32 %s139, 1
    %s141 = scalar_select %p138, %s139, %s140
    %p144 = pneg %p138
    %p145 = scmp.eq.s32.totalorder %s9, 7
    %p146 = por %p144, %p145
    %p147 = scmp.ne.s32.totalorder %s139, %s142
    %p148 = scmp.eq.s32.totalorder %s9, 0
    %p149 = por %p147, %p148
    %p150 = scmp.ne.s32.totalorder %s139, %s142
    %p151 = scmp.eq.s32.totalorder %s14, 7
    %p152 = por %p150, %p151
    %p153 = scmp.ne.s32.totalorder %s142, %s143
    %p154 = scmp.eq.s32.totalorder %s14, 0
    %p155 = por %p153, %p154
    %p156 = scmp.ne.s32.totalorder %s142, %s143
    %p157 = scmp.eq.s32.totalorder %s15, 7
    %p158 = por %p156, %p157
    %p160 = scmp.ne.s32.totalorder %s143, %s159
    %p161 = scmp.eq.s32.totalorder %s15, 0
    %p162 = por %p160, %p161
    %p163 = scmp.le.s32.totalorder 1, %s9
    %p164 = scmp.lt.s32.totalorder %s9, 9
    %p165 = pnand %p163, %p164
    %p166 = pneg %p165
    // Predicated region
    $region9: #{transformer_decoder.19} parent=5 // pred_check
      _
    $region10: #{transformer_decoder.19} parent=5 // pred_check_branch
      %168 = sbr.rel (%p165) target = $region12
    $region11: #{transformer_decoder.19} parent=5 // pred_region
      %s169 = ssub.s32 %s9, 1
    $region12: #{transformer_decoder.19} parent=5 // pred_fallthru
      _
    %p170 = scmp.lt.s32.totalorder %s9, 8
    // Predicated region
    $region13: #{transformer_decoder.19} parent=5 // pred_check
      %p171 = pneg %p170
    $region14: #{transformer_decoder.19} parent=5 // pred_check_branch
      %173 = sbr.rel (%p171) target = $region16
    $region15: #{transformer_decoder.19} parent=5 // pred_region
      // Predicated region
      $region17: #{transformer_decoder.19} parent=15 // pred_check
        %p174 = pneg %p59
      $region18: #{transformer_decoder.19} parent=15 // pred_check_branch
        %176 = sbr.rel (%p174) target = $region20
      $region19: #{transformer_decoder.19} parent=15 // pred_region
        %p177 = scmp.lt.s32.totalorder %s16, 1
        %s178 = scalar_select %p177, %s16, 1
        %p179 = scmp.lt.s32.totalorder %s17, 3
        %s180 = scalar_select %p179, %s17, 3
        %p181 = scmp.lt.s32.totalorder %s18, 0
        %s182 = scalar_select %p181, %s18, 0
        %s183 = sadd.s32 %s182, %s180
        %s184 = smul.addr %s178, 4
        %s185 = sadd.s32 %s183, %s184
        %s186 = smul.addr %s185, 8
        %s187 = scalar_lea.vmem %s0, %s186
      $region20: #{transformer_decoder.19} parent=15 // pred_fallthru
        _
      // Predicated region
      $region21: #{transformer_decoder.19} parent=15 // pred_check
        %p188 = pneg %p89
      $region22: #{transformer_decoder.19} parent=15 // pred_check_branch
        %190 = sbr.rel (%p188) target = $region24
      $region23: #{transformer_decoder.19} parent=15 // pred_region
        %p191 = scmp.lt.s32.totalorder %s16, 1
        %s192 = scalar_select %p191, %s16, 1
        %p193 = scmp.lt.s32.totalorder %s17, 3
        %s194 = scalar_select %p193, %s17, 3
        %p195 = scmp.lt.s32.totalorder %s19, 0
        %s196 = scalar_select %p195, %s19, 0
        %s197 = sadd.s32 %s196, %s194
        %s198 = smul.addr %s192, 4
        %s199 = sadd.s32 %s197, %s198
        %s200 = smul.addr %s199, 8
        %s201 = scalar_lea.vmem %s1, %s200
      $region24: #{transformer_decoder.19} parent=15 // pred_fallthru
        _
      // Predicated region
      $region25: #{transformer_decoder.19} parent=15 // pred_check
        %p202 = pneg %p119
      $region26: #{transformer_decoder.19} parent=15 // pred_check_branch
        %204 = sbr.rel (%p202) target = $region28
      $region27: #{transformer_decoder.19} parent=15 // pred_region
        %p205 = scmp.lt.s32.totalorder %s16, 1
        %s206 = scalar_select %p205, %s16, 1
        %p207 = scmp.lt.s32.totalorder %s17, 3
        %s208 = scalar_select %p207, %s17, 3
        %p209 = scmp.lt.s32.totalorder %s19, 0
        %s210 = scalar_select %p209, %s19, 0
        %s211 = sadd.s32 %s210, %s208
        %s212 = smul.addr %s206, 4
        %s213 = sadd.s32 %s211, %s212
        %s214 = smul.addr %s213, 8
        %s215 = scalar_lea.vmem %s2, %s214
      $region28: #{transformer_decoder.19} parent=15 // pred_fallthru
        _
    $region16: #{transformer_decoder.19} parent=5 // pred_fallthru
      _
    %p216 = scmp.le.s32.totalorder 1, %s9
    %p217 = scmp.lt.s32.totalorder %s9, 9
    %p218 = pnand %p216, %p217
    %p219 = pneg %p218
    // Predicated region
    $region29: #{transformer_decoder.19} parent=5 // pred_check
      _
    $region30: #{transformer_decoder.19} parent=5 // pred_check_branch
      %221 = sbr.rel (%p218) target = $region32
    $region31: #{transformer_decoder.19} parent=5 // pred_region
      %s222 = ssub.s32 %s9, 1
      %p223 = scmp.lt.s32.totalorder %s20, 1
      %s224 = scalar_select %p223, %s20, 1
      %p225 = scmp.lt.s32.totalorder %s21, 3
      %s226 = scalar_select %p225, %s21, 3
      %p227 = scmp.lt.s32.totalorder %s22, 0
      %s228 = scalar_select %p227, %s22, 0
      %s229 = sadd.s32 %s228, %s226
      %s230 = smul.addr %s224, 4
      %s231 = sadd.s32 %s229, %s230
      %s232 = smul.addr %s231, 8
      %s233 = scalar_lea.vmem %s0, %s232
      %p234 = pneg %p65
      %p235 = pneg %p62
      %p236 = scmp.lt.s32.totalorder %s20, 1
      %s237 = scalar_select %p236, %s20, 1
      %p238 = scmp.lt.s32.totalorder %s21, 3
      %s239 = scalar_select %p238, %s21, 3
      %p240 = scmp.lt.s32.totalorder %s23, 0
      %s241 = scalar_select %p240, %s23, 0
      %s242 = sadd.s32 %s241, %s239
      %s243 = smul.addr %s237, 4
      %s244 = sadd.s32 %s242, %s243
      %s245 = smul.addr %s244, 8
      %s246 = scalar_lea.vmem %s1, %s245
      %p247 = pneg %p95
      %p248 = pneg %p92
      %p249 = scmp.lt.s32.totalorder %s20, 1
      %s250 = scalar_select %p249, %s20, 1
      %p251 = scmp.lt.s32.totalorder %s21, 3
      %s252 = scalar_select %p251, %s21, 3
      %p253 = scmp.lt.s32.totalorder %s23, 0
      %s254 = scalar_select %p253, %s23, 0
      %s255 = sadd.s32 %s254, %s252
      %s256 = smul.addr %s250, 4
      %s257 = sadd.s32 %s255, %s256
      %s258 = smul.addr %s257, 8
      %s259 = scalar_lea.vmem %s2, %s258
      %p260 = pneg %p125
      %p261 = pneg %p122
      %p262 = pneg %p155
      %p263 = pneg %p152
      %p264 = scmp.lt.s32.totalorder %s20, 1
      %s265 = scalar_select %p264, %s20, 1
      %p266 = scmp.lt.s32.totalorder %s21, 3
      %s267 = scalar_select %p266, %s21, 3
      %p268 = scmp.lt.s32.totalorder %s22, 0
      %s269 = scalar_select %p268, %s22, 0
      %s270 = sadd.s32 %s269, %s267
      %s271 = smul.addr %s265, 4
      %s272 = sadd.s32 %s270, %s271
      %s273 = smul.addr %s272, 8
      %s274 = scalar_lea.vmem %s3, %s273
      %p275 = scmp.lt.s32.totalorder %s20, 1
      %s276 = scalar_select %p275, %s20, 1
      %p277 = scmp.lt.s32.totalorder %s21, 3
      %s278 = scalar_select %p277, %s21, 3
      %p279 = scmp.lt.s32.totalorder %s22, 0
      %s280 = scalar_select %p279, %s22, 0
      %s281 = sadd.s32 %s280, %s278
      %s282 = smul.addr %s276, 4
      %s283 = sadd.s32 %s281, %s282
      %s284 = smul.addr %s283, 8
      %s285 = scalar_lea.vmem %s0, %s284
      %p286 = scmp.lt.s32.totalorder %s20, 1
      %s287 = scalar_select %p286, %s20, 1
      %p288 = scmp.lt.s32.totalorder %s21, 3
      %s289 = scalar_select %p288, %s21, 3
      %p290 = scmp.lt.s32.totalorder %s23, 0
      %s291 = scalar_select %p290, %s23, 0
      %s292 = sadd.s32 %s291, %s289
      %s293 = smul.addr %s287, 4
      %s294 = sadd.s32 %s292, %s293
      %s295 = smul.addr %s294, 8
      %s296 = scalar_lea.vmem %s1, %s295
      %p297 = scmp.lt.s32.totalorder %s20, 1
      %s298 = scalar_select %p297, %s20, 1
      %p299 = scmp.lt.s32.totalorder %s21, 3
      %s300 = scalar_select %p299, %s21, 3
      %p301 = scmp.lt.s32.totalorder %s23, 0
      %s302 = scalar_select %p301, %s23, 0
      %s303 = sadd.s32 %s302, %s300
      %s304 = smul.addr %s298, 4
      %s305 = sadd.s32 %s303, %s304
      %s306 = smul.addr %s305, 8
      %s307 = scalar_lea.vmem %s2, %s306
      %p308 = scmp.lt.s32.totalorder %s20, 1
      %s309 = scalar_select %p308, %s20, 1
      %p310 = scmp.lt.s32.totalorder %s21, 3
      %s311 = scalar_select %p310, %s21, 3
      %p312 = scmp.lt.s32.totalorder %s22, 0
      %s313 = scalar_select %p312, %s22, 0
      %s314 = sadd.s32 %s313, %s311
      %s315 = smul.addr %s309, 4
      %s316 = sadd.s32 %s314, %s315
      %s317 = smul.addr %s316, 8
      %s318 = scalar_lea.vmem %s3, %s317
      %p320 = scmp.eq.s32.totalorder %s23, 0
      // Predicated region
      $region33: #{transformer_decoder.19} parent=31 // pred_check
        %p321 = pneg %p320
      $region34: #{transformer_decoder.19} parent=31 // pred_check_branch
        %323 = sbr.rel (%p321) target = $region36
      $region35: #{transformer_decoder.19} parent=31 // pred_region
        %vm324 = vcmask 7168
        %325 = vst.msk [vmem:[#allocation2] sm:$0xff] %vm324, -1e+30
        %326 = vst.msk [vmem:[#allocation3] sm:$0xff] %vm324, 0.0
        %vm327 = vcmask 64512
        %328 = vst.msk [vmem:[#allocation4] sm:$0xff] %vm327, 0.0
      $region36: #{transformer_decoder.19} parent=31 // pred_fallthru
        _
      %s329 = smul.u32 %s23, 8
      %s330 = smul.u32 %s22, 8
      %s331 = sadd.s32 %s330, 7
      %p332 = scmp.le.s32.totalorder %s329, %s331
      // Predicated region
      $region37: #{transformer_decoder.19} parent=31 // pred_check
        %p333 = pneg %p332
      $region38: #{transformer_decoder.19} parent=31 // pred_check_branch
        %335 = sbr.rel (%p333) target = $region40
      $region39: #{transformer_decoder.19} parent=31 // pred_region
        %v336 = vld [vmem:[%s285] sm:$0xff]
        %v337 = vmul.f32 %v336, 0.35355338
        %v338 = vpack.c.bf16 %v337, %v337
        %v339 = vld [vmem:[%s296] sm:$0xff]
        %v340 = vpack.c.bf16 %v339, %v339
        %vm341 = vcmask 64512
        %v343 = vsel %vm341, %v338, 0
        %v346 = vsel %vm341, %v340, 0
        %348 = vmatprep.subr.bf16.mxu0 0
        %349 = vmatpush1.bf16.xpose.msra.mxu0 %v346
        %350 = vmatprep.subr.bf16.mxu0 0
        %351 = vmatpush1.bf16.xpose.msra.mxu0 0
        %352 = vmatprep.subr.bf16.mxu0 0
        %353 = vmatpush1.bf16.xpose.msra.mxu0 0
        %354 = vmatprep.subr.bf16.mxu0 0
        %355 = vmatpush1.bf16.xpose.msra.mxu0 0
        %356 = vmatprep.subr.bf16.mxu0 0
        %357 = vmatpush1.bf16.xpose.msra.mxu0 0
        %358 = vmatprep.subr.bf16.mxu0 0
        %359 = vmatpush1.bf16.xpose.msra.mxu0 0
        %360 = vmatprep.subr.bf16.mxu0 0
        %361 = vmatpush1.bf16.xpose.msra.mxu0 0
        %362 = vmatprep.subr.bf16.mxu0 0
        %363 = vmatpush1.bf16.xpose.msra.mxu0 0
        %364 = vmatprep.subr.bf16.mxu0 0
        %365 = vmatpush1.bf16.xpose.msra.mxu0 0
        %366 = vmatprep.subr.bf16.mxu0 0
        %367 = vmatpush1.bf16.xpose.msra.mxu0 0
        %368 = vmatprep.subr.bf16.mxu0 0
        %369 = vmatpush1.bf16.xpose.msra.mxu0 0
        %370 = vmatprep.subr.bf16.mxu0 0
        %371 = vmatpush1.bf16.xpose.msra.mxu0 0
        %372 = vmatprep.subr.bf16.mxu0 0
        %373 = vmatpush1.bf16.xpose.msra.mxu0 0
        %374 = vmatprep.subr.bf16.mxu0 0
        %375 = vmatpush1.bf16.xpose.msra.mxu0 0
        %376 = vmatprep.subr.bf16.mxu0 0
        %377 = vmatpush1.bf16.xpose.msra.mxu0 0
        %378 = vmatprep.subr.bf16.mxu0 0
        %379 = vmatpush1.bf16.xpose.msra.mxu0 0
        %380 = vmatprep.mubr.bf16.mxu0 0
        %381 = vmatmul.mubr.bf16.gmra.mrb[0].mxu0 %v343
        %v382 = vpop.f32.mrb[0].mxu0
        %v383 = vadd.f32 0.0, %v382
        %v384 = vpop.f32.mrb[0].mxu0
        %v385 = vpop.f32.mrb[0].mxu0
        %v386 = vpop.f32.mrb[0].mxu0
        %387 = vdwg.mxu0
        %v388 = vlaneseq
        %v389 = vshrl.u32 %v388, 7
        %v390 = vstv %s330
        %v391 = vadd.s32 %v390, %v389
        %v392 = vlaneseq
        %v393 = vand.u32 %v392, 127
        %v394 = vstv %s329
        %v395 = vadd.s32 %v394, %v393
        %vm396 = vcmp.ge.s32.totalorder %v391, %v395
        %v397 = vsel %vm396, %v383, -1e+30
        %v398 = vld [vmem:[#allocation2] sm:$0xff]
        %v399 = vsel %vm341, %v397, -inf
        %400 = vmax.xlane.f32.xlu0 %v399
        %v401 = vpop.xlane.xlu0 %400
        %v402 = vmax.f32 %v398, %v401
        %v403 = vsub.f32 %v398, %v402
        %v404 = vmul.f32 %v403, 1.442695
        %v405 = vpow.pop %v404
        %407 = vset.pattern.permute.xlu0 0
        %408 = vperm.xlu0 %407, %v402
        %v409 = vpop.permute.xlu0 %408
        %v411 = vsub.f32 %v397, %v409
        %v412 = vmul.f32 %v411, 1.442695
        %v413 = vpow.pop %v412
        %v414 = vld [vmem:[#allocation3] sm:$0xff]
        %v415 = vmul.f32 %v405, %v414
        %v416 = vsel %vm341, %v413, 0.0
        %417 = vadd.xlane.f32.xlu0 %v416
        %v418 = vpop.xlane.xlu0 %417
        %v419 = vadd.f32 %v415, %v418
        %vm420 = vcmask 7168
        %421 = vst.msk [vmem:[#allocation3] sm:$0xff] %vm420, %v419
        %v422 = vld [vmem:[#allocation4] sm:$0xff]
        %424 = vset.pattern.permute.xlu0 0
        %425 = vperm.xlu0 %424, %v405
        %v426 = vpop.permute.xlu0 %425
        %v428 = vmul.f32 %v426, %v422
        %v429 = vpack.c.bf16 %v413, %v413
        %v430 = vld [vmem:[%s307] sm:$0xff]
        %v431 = vpack.c.bf16 %v430, %v430
        %v433 = vsel %vm341, %v429, 0
        %vm435 = vcmask 1043456
        %v437 = vsel %vm435, %v431, 0
        %439 = vmatprep.subr.bf16.mxu0 0
        %440 = vmatpush1.bf16.msra.mxu0 %v437
        %441 = vmatprep.subr.bf16.mxu0 0
        %442 = vmatpush1.bf16.msra.mxu0 0
        %443 = vmatprep.subr.bf16.mxu0 0
        %444 = vmatpush1.bf16.msra.mxu0 0
        %445 = vmatprep.subr.bf16.mxu0 0
        %446 = vmatpush1.bf16.msra.mxu0 0
        %447 = vmatprep.subr.bf16.mxu0 0
        %448 = vmatpush1.bf16.msra.mxu0 0
        %449 = vmatprep.subr.bf16.mxu0 0
        %450 = vmatpush1.bf16.msra.mxu0 0
        %451 = vmatprep.subr.bf16.mxu0 0
        %452 = vmatpush1.bf16.msra.mxu0 0
        %453 = vmatprep.subr.bf16.mxu0 0
        %454 = vmatpush1.bf16.msra.mxu0 0
        %455 = vmatprep.subr.bf16.mxu0 0
        %456 = vmatpush1.bf16.msra.mxu0 0
        %457 = vmatprep.subr.bf16.mxu0 0
        %458 = vmatpush1.bf16.msra.mxu0 0
        %459 = vmatprep.subr.bf16.mxu0 0
        %460 = vmatpush1.bf16.msra.mxu0 0
        %461 = vmatprep.subr.bf16.mxu0 0
        %462 = vmatpush1.bf16.msra.mxu0 0
        %463 = vmatprep.subr.bf16.mxu0 0
        %464 = vmatpush1.bf16.msra.mxu0 0
        %465 = vmatprep.subr.bf16.mxu0 0
        %466 = vmatpush1.bf16.msra.mxu0 0
        %467 = vmatprep.subr.bf16.mxu0 0
        %468 = vmatpush1.bf16.msra.mxu0 0
        %469 = vmatprep.subr.bf16.mxu0 0
        %470 = vmatpush1.bf16.msra.mxu0 0
        %471 = vmatprep.mubr.bf16.mxu0 0
        %472 = vmatmul.mubr.bf16.gmra.mrb[0].mxu0 %v433
        %v473 = vpop.f32.mrb[0].mxu0
        %v474 = vadd.f32 0.0, %v473
        %v475 = vpop.f32.mrb[0].mxu0
        %v476 = vpop.f32.mrb[0].mxu0
        %v477 = vpop.f32.mrb[0].mxu0
        %478 = vdwg.mxu0
        %v479 = vadd.f32 %v428, %v474
        %480 = vst.msk [vmem:[#allocation4] sm:$0xff] %vm341, %v479
        %481 = vst.msk [vmem:[#allocation2] sm:$0xff] %vm420, %v402
      $region40: #{transformer_decoder.19} parent=31 // pred_fallthru
        _
      // Predicated region
      $region41: #{transformer_decoder.19} parent=31 // pred_check
        %p482 = pneg %p320
      $region42: #{transformer_decoder.19} parent=31 // pred_check_branch
        %484 = sbr.rel (%p482) target = $region44
      $region43: #{transformer_decoder.19} parent=31 // pred_region
        %v485 = vld [vmem:[#allocation3] sm:$0xff]
        %v486 = vrcp.pop %v485
        %v487 = vld [vmem:[#allocation4] sm:$0xff]
        %489 = vset.pattern.permute.xlu0 0
        %490 = vperm.xlu0 %489, %v486
        %v491 = vpop.permute.xlu0 %490
        %v493 = vmul.f32 %v487, %v491
        %vm494 = vcmask 64512
        %495 = vst.msk [vmem:[%s318] sm:$0xff] %vm494, %v493
      $region44: #{transformer_decoder.19} parent=31 // pred_fallthru
        _
      %p496 = scmp.lt.s32.totalorder %s20, 1
      %s497 = scalar_select %p496, %s20, 1
      %p498 = scmp.lt.s32.totalorder %s21, 3
      %s499 = scalar_select %p498, %s21, 3
      %p500 = scmp.lt.s32.totalorder %s22, 0
      %s501 = scalar_select %p500, %s22, 0
      %s502 = sadd.s32 %s501, %s499
      %s503 = smul.addr %s497, 4
      %s504 = sadd.s32 %s502, %s503
      %s505 = smul.addr %s504, 8
      %s506 = scalar_lea.vmem %s3, %s505
      // Predicated region
      $region45: #{transformer_decoder.19} parent=31 // pred_check
        %p507 = pneg %p152
      $region46: #{transformer_decoder.19} parent=31 // pred_check_branch
        %509 = sbr.rel (%p507) target = $region48
      $region47: #{transformer_decoder.19} parent=31 // pred_region
        _
      $region48: #{transformer_decoder.19} parent=31 // pred_fallthru
        _
    $region32: #{transformer_decoder.19} parent=5 // pred_fallthru
      _
    %p510 = scmp.le.s32.totalorder 2, %s9
    // Predicated region
    $region49: #{transformer_decoder.19} parent=5 // pred_check
      %p511 = pneg %p510
    $region50: #{transformer_decoder.19} parent=5 // pred_check_branch
      %513 = sbr.rel (%p511) target = $region52
    $region51: #{transformer_decoder.19} parent=5 // pred_region
      %s514 = ssub.s32 %s9, 2
      // Predicated region
      $region53: #{transformer_decoder.19} parent=51 // pred_check
        %p515 = pneg %p158
      $region54: #{transformer_decoder.19} parent=51 // pred_check_branch
        %517 = sbr.rel (%p515) target = $region56
      $region55: #{transformer_decoder.19} parent=51 // pred_region
        %p518 = scmp.lt.s32.totalorder %s24, 1
        %s519 = scalar_select %p518, %s24, 1
        %p520 = scmp.lt.s32.totalorder %s25, 3
        %s521 = scalar_select %p520, %s25, 3
        %p522 = scmp.lt.s32.totalorder %s26, 0
        %s523 = scalar_select %p522, %s26, 0
        %s524 = sadd.s32 %s523, %s521
        %s525 = smul.addr %s519, 4
        %s526 = sadd.s32 %s524, %s525
        %s527 = smul.addr %s526, 8
        %s528 = scalar_lea.vmem %s3, %s527
      $region56: #{transformer_decoder.19} parent=51 // pred_fallthru
        _
    $region52: #{transformer_decoder.19} parent=5 // pred_fallthru
      _
  $region6: #{transformer_decoder.19} parent=0 // loop_footer
    %s13 = sadd.s32 1, %s9
  $region7: #{transformer_decoder.19} parent=0 // loop_footer_branch
    %8 = sbr.rel target = $region3
  $region8: #{transformer_decoder.19} parent=0 // loop_exit
    _

// kernel: transformer_decoder.21
$region0: #{transformer_decoder.21}
  #allocation0 [shape = 'u32[]', space=smem, size = 0x4, offset = 0x4, fixed_abs, tag = 'smem constant byte address 0x4 - core index']
  #allocation1 [shape = 'u32[144,128]{1,0:T(1,128)}', space=vmem, size = 0x12000, scoped, tag = 'internal scratch']
  #allocation2 [shape = 'f32[16,32]{1,0:T(8,128)}', space=vmem, size = 0x2000, scoped, tag = 'scratch operand']
  %s0 = inlined_call_operand.vmem [shape: f32[16,32], index: 0, kind: input, shape index: {}]
  %s1 = inlined_call_operand.vmem [shape: f32[32,32], index: 1, kind: input, shape index: {}]
  %s2 = inlined_call_operand.vmem [shape: f32[1,32], index: 2, kind: input, shape index: {}]
  %s3 = inlined_call_operand.vmem [shape: f32[16,32], index: 3, kind: output, shape index: {}]
  %s4 = sld [smem:[#allocation0]]
  $region30: #{transformer_decoder.21} parent=0
    _
  %s6 = ssub.s32 1, %s4
  %s7 = scalar_select 0, %s6, %s4
  // Predicated region
  $region2: #{transformer_decoder.21} parent=0 // pred_check
    _
  $region3: #{transformer_decoder.21} parent=0 // pred_check_branch
    %9 = sbr.rel (0) target = $region5
  $region4: #{transformer_decoder.21} parent=0 // pred_region
    _
  $region5: #{transformer_decoder.21} parent=0 // pred_fallthru
    _
  // Predicated region
  $region6: #{transformer_decoder.21} parent=0 // pred_check
    _
  $region7: #{transformer_decoder.21} parent=0 // pred_check_branch
    %11 = sbr.rel (0) target = $region9
  $region8: #{transformer_decoder.21} parent=0 // pred_region
    _
  $region9: #{transformer_decoder.21} parent=0 // pred_fallthru
    _
  // Predicated region
  $region10: #{transformer_decoder.21} parent=0 // pred_check
    _
  $region11: #{transformer_decoder.21} parent=0 // pred_check_branch
    %13 = sbr.rel (0) target = $region13
  $region12: #{transformer_decoder.21} parent=0 // pred_region
    _
  $region13: #{transformer_decoder.21} parent=0 // pred_fallthru
    _
  %p15 = scmp.eq.s32.totalorder 0, 0
  // Predicated region
  $region14: #{transformer_decoder.21} parent=0 // pred_check
    %p16 = pneg %p15
  $region15: #{transformer_decoder.21} parent=0 // pred_check_branch
    %18 = sbr.rel (%p16) target = $region17
  $region16: #{transformer_decoder.21} parent=0 // pred_region
    %vm19 = vcmask 261120
    %20 = vst.msk [vmem:[#allocation2] sm:$0xff] %vm19, 0.0
    %21 = vst.msk [vmem:[#allocation2 + $0x8] sm:$0xff] %vm19, 0.0
  $region17: #{transformer_decoder.21} parent=0 // pred_fallthru
    _
  %v22 = vld [vmem:[#allocation2] sm:$0xff]
  %v23 = vld [vmem:[#allocation2 + $0x8] sm:$0xff]
  %v24 = vld [vmem:[%s0] sm:$0xff]
  %v25 = vld [vmem:[%s0 + $0x8] sm:$0xff]
  %v26 = vpack.c.bf16 %v25, %v24
  %v27 = vld [vmem:[%s1] sm:$0xff]
  %v28 = vld [vmem:[%s1 + $0x8] sm:$0xff]
  %v29 = vld [vmem:[%s1 + $0x10] sm:$0xff]
  %v30 = vld [vmem:[%s1 + $0x18] sm:$0xff]
  %v31 = vpack.c.bf16 %v28, %v27
  %v32 = vpack.c.bf16 %v30, %v29
  %vm33 = vcmask 261120
  %v35 = vsel %vm33, %v26, 0
  %37 = vmatprep.subr.bf16.mxu0 0
  %38 = vmatpush1.bf16.msra.mxu0 %v31
  %39 = vmatprep.subr.bf16.mxu0 0
  %40 = vmatpush1.bf16.msra.mxu0 %v32
  %41 = vmatprep.subr.bf16.mxu0 0
  %42 = vmatpush1.bf16.msra.mxu0 0
  %43 = vmatprep.subr.bf16.mxu0 0
  %44 = vmatpush1.bf16.msra.mxu0 0
  %45 = vmatprep.subr.bf16.mxu0 0
  %46 = vmatpush1.bf16.msra.mxu0 0
  %47 = vmatprep.subr.bf16.mxu0 0
  %48 = vmatpush1.bf16.msra.mxu0 0
  %49 = vmatprep.subr.bf16.mxu0 0
  %50 = vmatpush1.bf16.msra.mxu0 0
  %51 = vmatprep.subr.bf16.mxu0 0
  %52 = vmatpush1.bf16.msra.mxu0 0
  %53 = vmatprep.subr.bf16.mxu0 0
  %54 = vmatpush1.bf16.msra.mxu0 0
  %55 = vmatprep.subr.bf16.mxu0 0
  %56 = vmatpush1.bf16.msra.mxu0 0
  %57 = vmatprep.subr.bf16.mxu0 0
  %58 = vmatpush1.bf16.msra.mxu0 0
  %59 = vmatprep.subr.bf16.mxu0 0
  %60 = vmatpush1.bf16.msra.mxu0 0
  %61 = vmatprep.subr.bf16.mxu0 0
  %62 = vmatpush1.bf16.msra.mxu0 0
  %63 = vmatprep.subr.bf16.mxu0 0
  %64 = vmatpush1.bf16.msra.mxu0 0
  %65 = vmatprep.subr.bf16.mxu0 0
  %66 = vmatpush1.bf16.msra.mxu0 0
  %67 = vmatprep.subr.bf16.mxu0 0
  %68 = vmatpush1.bf16.msra.mxu0 0
  %69 = vmatprep.mubr.bf16.mxu0 0
  %70 = vmatmul.mubr.bf16.gmra.mrb[0].mxu0 %v35
  %v71 = vpop.f32.mrb[0].mxu0
  %v72 = vadd.f32 0.0, %v71
  %v73 = vpop.f32.mrb[0].mxu0
  %v74 = vpop.f32.mrb[0].mxu0
  %v75 = vadd.f32 0.0, %v74
  %v76 = vpop.f32.mrb[0].mxu0
  %77 = vdwg.mxu0
  %v78 = vadd.f32 %v22, %v72
  %v79 = vadd.f32 %v23, %v75
  %80 = vst.msk [vmem:[#allocation2] sm:$0xff] %vm33, %v78
  %81 = vst.msk [vmem:[#allocation2 + $0x8] sm:$0xff] %vm33, %v79
  // Predicated region
  $region18: #{transformer_decoder.21} parent=0 // pred_check
    %p82 = pneg %p15
  $region19: #{transformer_decoder.21} parent=0 // pred_check_branch
    %84 = sbr.rel (%p82) target = $region21
  $region20: #{transformer_decoder.21} parent=0 // pred_region
    %v85 = vld [vmem:[#allocation2] sm:$0xff]
    %v86 = vld [vmem:[#allocation2 + $0x8] sm:$0xff]
    %v87 = vld [vmem:[%s2] sm:$0x1]
    %v89 = vlaneseq
    %v90 = vshrl.u32 %v89, 7
    %v91 = vsub.s32 0, %v90
    %v92 = vrot.slane %v87, %v91
    %v94 = vadd.f32 %v85, %v92
    %v95 = vadd.f32 %v86, %v92
    %96 = vst.msk [vmem:[%s3] sm:$0xff] %vm33, %v94
    %97 = vst.msk [vmem:[%s3 + $0x8] sm:$0xff] %vm33, %v95
  $region21: #{transformer_decoder.21} parent=0 // pred_fallthru
    _
  // Predicated region
  $region22: #{transformer_decoder.21} parent=0 // pred_check
    _
  $region23: #{transformer_decoder.21} parent=0 // pred_check_branch
    %99 = sbr.rel (0) target = $region25
  $region24: #{transformer_decoder.21} parent=0 // pred_region
    _
  $region25: #{transformer_decoder.21} parent=0 // pred_fallthru
    _
  // Predicated region
  $region26: #{transformer_decoder.21} parent=0 // pred_check
    _
  $region27: #{transformer_decoder.21} parent=0 // pred_check_branch
    %101 = sbr.rel (0) target = $region29
  $region28: #{transformer_decoder.21} parent=0 // pred_region
    _
  $region29: #{transformer_decoder.21} parent=0 // pred_fallthru
    _

// kernel: transformer_decoder.20
$region0: #{transformer_decoder.20}
  #allocation0 [shape = 'u32[]', space=smem, size = 0x4, offset = 0x4, fixed_abs, tag = 'smem constant byte address 0x4 - core index']
  #allocation1 [shape = 'u32[144,128]{1,0:T(1,128)}', space=vmem, size = 0x12000, scoped, tag = 'internal scratch']
  #allocation2 [shape = 'f32[16,32]{1,0:T(8,128)}', space=vmem, size = 0x2000, scoped, tag = 'scratch operand']
  %s0 = inlined_call_operand.vmem [shape: f32[16,32], index: 0, kind: input, shape index: {}]
  %s1 = inlined_call_operand.vmem [shape: f32[32,32], index: 1, kind: input, shape index: {}]
  %s2 = inlined_call_operand.vmem [shape: f32[1,32], index: 2, kind: input, shape index: {}]
  %s3 = inlined_call_operand.vmem [shape: f32[16,32], index: 3, kind: input, shape index: {}]
  %s4 = inlined_call_operand.vmem [shape: f32[1,32], index: 4, kind: input, shape index: {}]
  %s5 = inlined_call_operand.vmem [shape: f32[1,32], index: 5, kind: input, shape index: {}]
  %s6 = inlined_call_operand.vmem [shape: f32[16,32], index: 6, kind: output, shape index: {}]
  %s7 = sld [smem:[#allocation0]]
  $region42: #{transformer_decoder.20} parent=0
    _
  %s9 = ssub.s32 1, %s7
  %s10 = scalar_select 0, %s9, %s7
  // Predicated region
  $region2: #{transformer_decoder.20} parent=0 // pred_check
    _
  $region3: #{transformer_decoder.20} parent=0 // pred_check_branch
    %12 = sbr.rel (0) target = $region5
  $region4: #{transformer_decoder.20} parent=0 // pred_region
    _
  $region5: #{transformer_decoder.20} parent=0 // pred_fallthru
    _
  // Predicated region
  $region6: #{transformer_decoder.20} parent=0 // pred_check
    _
  $region7: #{transformer_decoder.20} parent=0 // pred_check_branch
    %14 = sbr.rel (0) target = $region9
  $region8: #{transformer_decoder.20} parent=0 // pred_region
    _
  $region9: #{transformer_decoder.20} parent=0 // pred_fallthru
    _
  // Predicated region
  $region10: #{transformer_decoder.20} parent=0 // pred_check
    _
  $region11: #{transformer_decoder.20} parent=0 // pred_check_branch
    %16 = sbr.rel (0) target = $region13
  $region12: #{transformer_decoder.20} parent=0 // pred_region
    _
  $region13: #{transformer_decoder.20} parent=0 // pred_fallthru
    _
  // Predicated region
  $region14: #{transformer_decoder.20} parent=0 // pred_check
    _
  $region15: #{transformer_decoder.20} parent=0 // pred_check_branch
    %18 = sbr.rel (0) target = $region17
  $region16: #{transformer_decoder.20} parent=0 // pred_region
    _
  $region17: #{transformer_decoder.20} parent=0 // pred_fallthru
    _
  // Predicated region
  $region18: #{transformer_decoder.20} parent=0 // pred_check
    _
  $region19: #{transformer_decoder.20} parent=0 // pred_check_branch
    %20 = sbr.rel (0) target = $region21
  $region20: #{transformer_decoder.20} parent=0 // pred_region
    _
  $region21: #{transformer_decoder.20} parent=0 // pred_fallthru
    _
  // Predicated region
  $region22: #{transformer_decoder.20} parent=0 // pred_check
    _
  $region23: #{transformer_decoder.20} parent=0 // pred_check_branch
    %22 = sbr.rel (0) target = $region25
  $region24: #{transformer_decoder.20} parent=0 // pred_region
    _
  $region25: #{transformer_decoder.20} parent=0 // pred_fallthru
    _
  %p24 = scmp.eq.s32.totalorder 0, 0
  // Predicated region
  $region26: #{transformer_decoder.20} parent=0 // pred_check
    %p25 = pneg %p24
  $region27: #{transformer_decoder.20} parent=0 // pred_check_branch
    %27 = sbr.rel (%p25) target = $region29
  $region28: #{transformer_decoder.20} parent=0 // pred_region
    %vm28 = vcmask 261120
    %29 = vst.msk [vmem:[#allocation2] sm:$0xff] %vm28, 0.0
    %30 = vst.msk [vmem:[#allocation2 + $0x8] sm:$0xff] %vm28, 0.0
  $region29: #{transformer_decoder.20} parent=0 // pred_fallthru
    _
  %v31 = vld [vmem:[#allocation2] sm:$0xff]
  %v32 = vld [vmem:[#allocation2 + $0x8] sm:$0xff]
  %v33 = vld [vmem:[%s0] sm:$0xff]
  %v34 = vld [vmem:[%s0 + $0x8] sm:$0xff]
  %v35 = vpack.c.bf16 %v34, %v33
  %v36 = vld [vmem:[%s1] sm:$0xff]
  %v37 = vld [vmem:[%s1 + $0x8] sm:$0xff]
  %v38 = vld [vmem:[%s1 + $0x10] sm:$0xff]
  %v39 = vld [vmem:[%s1 + $0x18] sm:$0xff]
  %v40 = vpack.c.bf16 %v37, %v36
  %v41 = vpack.c.bf16 %v39, %v38
  %vm42 = vcmask 261120
  %v44 = vsel %vm42, %v35, 0
  %46 = vmatprep.subr.bf16.mxu0 0
  %47 = vmatpush1.bf16.msra.mxu0 %v40
  %48 = vmatprep.subr.bf16.mxu0 0
  %49 = vmatpush1.bf16.msra.mxu0 %v41
  %50 = vmatprep.subr.bf16.mxu0 0
  %51 = vmatpush1.bf16.msra.mxu0 0
  %52 = vmatprep.subr.bf16.mxu0 0
  %53 = vmatpush1.bf16.msra.mxu0 0
  %54 = vmatprep.subr.bf16.mxu0 0
  %55 = vmatpush1.bf16.msra.mxu0 0
  %56 = vmatprep.subr.bf16.mxu0 0
  %57 = vmatpush1.bf16.msra.mxu0 0
  %58 = vmatprep.subr.bf16.mxu0 0
  %59 = vmatpush1.bf16.msra.mxu0 0
  %60 = vmatprep.subr.bf16.mxu0 0
  %61 = vmatpush1.bf16.msra.mxu0 0
  %62 = vmatprep.subr.bf16.mxu0 0
  %63 = vmatpush1.bf16.msra.mxu0 0
  %64 = vmatprep.subr.bf16.mxu0 0
  %65 = vmatpush1.bf16.msra.mxu0 0
  %66 = vmatprep.subr.bf16.mxu0 0
  %67 = vmatpush1.bf16.msra.mxu0 0
  %68 = vmatprep.subr.bf16.mxu0 0
  %69 = vmatpush1.bf16.msra.mxu0 0
  %70 = vmatprep.subr.bf16.mxu0 0
  %71 = vmatpush1.bf16.msra.mxu0 0
  %72 = vmatprep.subr.bf16.mxu0 0
  %73 = vmatpush1.bf16.msra.mxu0 0
  %74 = vmatprep.subr.bf16.mxu0 0
  %75 = vmatpush1.bf16.msra.mxu0 0
  %76 = vmatprep.subr.bf16.mxu0 0
  %77 = vmatpush1.bf16.msra.mxu0 0
  %78 = vmatprep.mubr.bf16.mxu0 0
  %79 = vmatmul.mubr.bf16.gmra.mrb[0].mxu0 %v44
  %v80 = vpop.f32.mrb[0].mxu0
  %v81 = vadd.f32 0.0, %v80
  %v82 = vpop.f32.mrb[0].mxu0
  %v83 = vpop.f32.mrb[0].mxu0
  %v84 = vadd.f32 0.0, %v83
  %v85 = vpop.f32.mrb[0].mxu0
  %86 = vdwg.mxu0
  %v87 = vadd.f32 %v31, %v81
  %v88 = vadd.f32 %v32, %v84
  %89 = vst.msk [vmem:[#allocation2] sm:$0xff] %vm42, %v87
  %90 = vst.msk [vmem:[#allocation2 + $0x8] sm:$0xff] %vm42, %v88
  // Predicated region
  $region30: #{transformer_decoder.20} parent=0 // pred_check
    %p91 = pneg %p24
  $region31: #{transformer_decoder.20} parent=0 // pred_check_branch
    %93 = sbr.rel (%p91) target = $region33
  $region32: #{transformer_decoder.20} parent=0 // pred_region
    %v94 = vld [vmem:[#allocation2] sm:$0xff]
    %v95 = vld [vmem:[#allocation2 + $0x8] sm:$0xff]
    %v96 = vld [vmem:[%s2] sm:$0x1]
    %v98 = vlaneseq
    %v99 = vshrl.u32 %v98, 7
    %v100 = vsub.s32 0, %v99
    %v101 = vrot.slane %v96, %v100
    %v103 = vadd.f32 %v94, %v101
    %v104 = vadd.f32 %v95, %v101
    %v105 = vld [vmem:[%s3] sm:$0xff]
    %v106 = vld [vmem:[%s3 + $0x8] sm:$0xff]
    %v107 = vadd.f32 %v103, %v105
    %v108 = vadd.f32 %v104, %v106
    %v109 = vsel %vm42, %v107, 0.0
    %110 = vadd.xlane.f32.xlu0 %v109
    %v111 = vpop.xlane.xlu0 %110
    %v112 = vsel %vm42, %v108, 0.0
    %113 = vadd.xlane.f32.xlu0 %v112
    %v114 = vpop.xlane.xlu0 %113
    %v115 = vrcp.pop 32.0
    %v116 = vmul.f32 %v111, %v115
    %v117 = vmul.f32 %v114, %v115
    %v118 = vsub.f32 %v107, %v116
    %v119 = vsub.f32 %v108, %v117
    %v120 = vmul.f32 %v118, %v118
    %v121 = vmul.f32 %v119, %v119
    %v122 = vsel %vm42, %v120, 0.0
    %123 = vadd.xlane.f32.xlu0 %v122
    %v124 = vpop.xlane.xlu0 %123
    %v125 = vsel %vm42, %v121, 0.0
    %126 = vadd.xlane.f32.xlu0 %v125
    %v127 = vpop.xlane.xlu0 %126
    %v128 = vmul.f32 %v124, %v115
    %v129 = vmul.f32 %v127, %v115
    %v130 = vadd.f32 %v128, 1e-05
    %v131 = vadd.f32 %v129, 1e-05
    %v132 = vrsqrt.pop %v130
    %v133 = vrsqrt.pop %v131
    %v134 = vmul.f32 %v118, %v132
    %v135 = vmul.f32 %v119, %v133
    %v136 = vld [vmem:[%s4] sm:$0x1]
    %v138 = vlaneseq
    %v139 = vshrl.u32 %v138, 7
    %v140 = vsub.s32 0, %v139
    %v141 = vrot.slane %v136, %v140
    %v143 = vmul.f32 %v134, %v141
    %v144 = vmul.f32 %v135, %v141
    %v145 = vld [vmem:[%s5] sm:$0x1]
    %v147 = vlaneseq
    %v148 = vshrl.u32 %v147, 7
    %v149 = vsub.s32 0, %v148
    %v150 = vrot.slane %v145, %v149
    %v152 = vadd.f32 %v143, %v150
    %v153 = vadd.f32 %v144, %v150
    %154 = vst.msk [vmem:[%s6] sm:$0xff] %vm42, %v152
    %155 = vst.msk [vmem:[%s6 + $0x8] sm:$0xff] %vm42, %v153
  $region33: #{transformer_decoder.20} parent=0 // pred_fallthru
    _
  // Predicated region
  $region34: #{transformer_decoder.20} parent=0 // pred_check
    _
  $region35: #{transformer_decoder.20} parent=0 // pred_check_branch
    %157 = sbr.rel (0) target = $region37
  $region36: #{transformer_decoder.20} parent=0 // pred_region
    _
  $region37: #{transformer_decoder.20} parent=0 // pred_fallthru
    _
  // Predicated region
  $region38: #{transformer_decoder.20} parent=0 // pred_check
    _
  $region39: #{transformer_decoder.20} parent=0 // pred_check_branch
    %159 = sbr.rel (0) target = $region41
  $region40: #{transformer_decoder.20} parent=0 // pred_region
    _
  $region41: #{transformer_decoder.20} parent=0 // pred_fallthru
    _

// kernel: transformer_decoder.22
$region0: #{transformer_decoder.22}
  #allocation0 [shape = 'u32[]', space=smem, size = 0x4, offset = 0x4, fixed_abs, tag = 'smem constant byte address 0x4 - core index']
  #allocation1 [shape = 'u32[144,128]{1,0:T(1,128)}', space=vmem, size = 0x12000, scoped, tag = 'internal scratch']
  #allocation2 [shape = 'f32[16,64]{1,0:T(8,128)}', space=vmem, size = 0x2000, scoped, tag = 'scratch operand']
  %s0 = inlined_call_operand.vmem [shape: f32[16,32], index: 0, kind: input, shape index: {}]
  %s1 = inlined_call_operand.vmem [shape: f32[32,64], index: 1, kind: input, shape index: {}]
  %s2 = inlined_call_operand.vmem [shape: f32[1,64], index: 2, kind: input, shape index: {}]
  %s3 = inlined_call_operand.vmem [shape: f32[16,64], index: 3, kind: output, shape index: {}]
  %s4 = sld [smem:[#allocation0]]
  $region30: #{transformer_decoder.22} parent=0
    _
  %s6 = ssub.s32 1, %s4
  %s7 = scalar_select 0, %s6, %s4
  // Predicated region
  $region2: #{transformer_decoder.22} parent=0 // pred_check
    _
  $region3: #{transformer_decoder.22} parent=0 // pred_check_branch
    %9 = sbr.rel (0) target = $region5
  $region4: #{transformer_decoder.22} parent=0 // pred_region
    _
  $region5: #{transformer_decoder.22} parent=0 // pred_fallthru
    _
  // Predicated region
  $region6: #{transformer_decoder.22} parent=0 // pred_check
    _
  $region7: #{transformer_decoder.22} parent=0 // pred_check_branch
    %11 = sbr.rel (0) target = $region9
  $region8: #{transformer_decoder.22} parent=0 // pred_region
    _
  $region9: #{transformer_decoder.22} parent=0 // pred_fallthru
    _
  // Predicated region
  $region10: #{transformer_decoder.22} parent=0 // pred_check
    _
  $region11: #{transformer_decoder.22} parent=0 // pred_check_branch
    %13 = sbr.rel (0) target = $region13
  $region12: #{transformer_decoder.22} parent=0 // pred_region
    _
  $region13: #{transformer_decoder.22} parent=0 // pred_fallthru
    _
  %p15 = scmp.eq.s32.totalorder 0, 0
  // Predicated region
  $region14: #{transformer_decoder.22} parent=0 // pred_check
    %p16 = pneg %p15
  $region15: #{transformer_decoder.22} parent=0 // pred_check_branch
    %18 = sbr.rel (%p16) target = $region17
  $region16: #{transformer_decoder.22} parent=0 // pred_region
    %vm19 = vcmask 523264
    %20 = vst.msk [vmem:[#allocation2] sm:$0xff] %vm19, 0.0
    %21 = vst.msk [vmem:[#allocation2 + $0x8] sm:$0xff] %vm19, 0.0
  $region17: #{transformer_decoder.22} parent=0 // pred_fallthru
    _
  %v22 = vld [vmem:[#allocation2] sm:$0xff]
  %v23 = vld [vmem:[#allocation2 + $0x8] sm:$0xff]
  %v24 = vld [vmem:[%s0] sm:$0xff]
  %v25 = vld [vmem:[%s0 + $0x8] sm:$0xff]
  %v26 = vpack.c.bf16 %v25, %v24
  %v27 = vld [vmem:[%s1] sm:$0xff]
  %v28 = vld [vmem:[%s1 + $0x8] sm:$0xff]
  %v29 = vld [vmem:[%s1 + $0x10] sm:$0xff]
  %v30 = vld [vmem:[%s1 + $0x18] sm:$0xff]
  %v31 = vpack.c.bf16 %v28, %v27
  %v32 = vpack.c.bf16 %v30, %v29
  %vm33 = vcmask 261120
  %v35 = vsel %vm33, %v26, 0
  %37 = vmatprep.subr.bf16.mxu0 0
  %38 = vmatpush1.bf16.msra.mxu0 %v31
  %39 = vmatprep.subr.bf16.mxu0 0
  %40 = vmatpush1.bf16.msra.mxu0 %v32
  %41 = vmatprep.subr.bf16.mxu0 0
  %42 = vmatpush1.bf16.msra.mxu0 0
  %43 = vmatprep.subr.bf16.mxu0 0
  %44 = vmatpush1.bf16.msra.mxu0 0
  %45 = vmatprep.subr.bf16.mxu0 0
  %46 = vmatpush1.bf16.msra.mxu0 0
  %47 = vmatprep.subr.bf16.mxu0 0
  %48 = vmatpush1.bf16.msra.mxu0 0
  %49 = vmatprep.subr.bf16.mxu0 0
  %50 = vmatpush1.bf16.msra.mxu0 0
  %51 = vmatprep.subr.bf16.mxu0 0
  %52 = vmatpush1.bf16.msra.mxu0 0
  %53 = vmatprep.subr.bf16.mxu0 0
  %54 = vmatpush1.bf16.msra.mxu0 0
  %55 = vmatprep.subr.bf16.mxu0 0
  %56 = vmatpush1.bf16.msra.mxu0 0
  %57 = vmatprep.subr.bf16.mxu0 0
  %58 = vmatpush1.bf16.msra.mxu0 0
  %59 = vmatprep.subr.bf16.mxu0 0
  %60 = vmatpush1.bf16.msra.mxu0 0
  %61 = vmatprep.subr.bf16.mxu0 0
  %62 = vmatpush1.bf16.msra.mxu0 0
  %63 = vmatprep.subr.bf16.mxu0 0
  %64 = vmatpush1.bf16.msra.mxu0 0
  %65 = vmatprep.subr.bf16.mxu0 0
  %66 = vmatpush1.bf16.msra.mxu0 0
  %67 = vmatprep.subr.bf16.mxu0 0
  %68 = vmatpush1.bf16.msra.mxu0 0
  %69 = vmatprep.mubr.bf16.mxu0 0
  %70 = vmatmul.mubr.bf16.gmra.mrb[0].mxu0 %v35
  %v71 = vpop.f32.mrb[0].mxu0
  %v72 = vadd.f32 0.0, %v71
  %v73 = vpop.f32.mrb[0].mxu0
  %v74 = vpop.f32.mrb[0].mxu0
  %v75 = vadd.f32 0.0, %v74
  %v76 = vpop.f32.mrb[0].mxu0
  %77 = vdwg.mxu0
  %v78 = vadd.f32 %v22, %v72
  %v79 = vadd.f32 %v23, %v75
  %vm80 = vcmask 523264
  %81 = vst.msk [vmem:[#allocation2] sm:$0xff] %vm80, %v78
  %82 = vst.msk [vmem:[#allocation2 + $0x8] sm:$0xff] %vm80, %v79
  // Predicated region
  $region18: #{transformer_decoder.22} parent=0 // pred_check
    %p83 = pneg %p15
  $region19: #{transformer_decoder.22} parent=0 // pred_check_branch
    %85 = sbr.rel (%p83) target = $region21
  $region20: #{transformer_decoder.22} parent=0 // pred_region
    %v86 = vld [vmem:[#allocation2] sm:$0xff]
    %v87 = vld [vmem:[#allocation2 + $0x8] sm:$0xff]
    %v88 = vld [vmem:[%s2] sm:$0x1]
    %v90 = vlaneseq
    %v91 = vshrl.u32 %v90, 7
    %v92 = vsub.s32 0, %v91
    %v93 = vrot.slane %v88, %v92
    %v95 = vadd.f32 %v86, %v93
    %v96 = vadd.f32 %v87, %v93
    %97 = vst.msk [vmem:[%s3] sm:$0xff] %vm80, %v95
    %98 = vst.msk [vmem:[%s3 + $0x8] sm:$0xff] %vm80, %v96
  $region21: #{transformer_decoder.22} parent=0 // pred_fallthru
    _
  // Predicated region
  $region22: #{transformer_decoder.22} parent=0 // pred_check
    _
  $region23: #{transformer_decoder.22} parent=0 // pred_check_branch
    %100 = sbr.rel (0) target = $region25
  $region24: #{transformer_decoder.22} parent=0 // pred_region
    _
  $region25: #{transformer_decoder.22} parent=0 // pred_fallthru
    _
  // Predicated region
  $region26: #{transformer_decoder.22} parent=0 // pred_check
    _
  $region27: #{transformer_decoder.22} parent=0 // pred_check_branch
    %102 = sbr.rel (0) target = $region29
  $region28: #{transformer_decoder.22} parent=0 // pred_region
    _
  $region29: #{transformer_decoder.22} parent=0 // pred_fallthru
    _

// kernel: transformer_decoder.25
$region0: #{transformer_decoder.25}
  #allocation0 [shape = 'u32[]', space=smem, size = 0x4, offset = 0x4, fixed_abs, tag = 'smem constant byte address 0x4 - core index']
  #allocation1 [shape = 'u32[144,128]{1,0:T(1,128)}', space=vmem, size = 0x12000, scoped, tag = 'internal scratch']
  #allocation2 [shape = 'f32[16,64]{1,0:T(8,128)}', space=vmem, size = 0x2000, scoped, tag = 'scratch operand']
  %s0 = inlined_call_operand.vmem [shape: f32[16,32], index: 0, kind: input, shape index: {}]
  %s1 = inlined_call_operand.vmem [shape: f32[32,64], index: 1, kind: input, shape index: {}]
  %s2 = inlined_call_operand.vmem [shape: f32[1,64], index: 2, kind: input, shape index: {}]
  %s3 = inlined_call_operand.vmem [shape: f32[16,64], index: 3, kind: output, shape index: {}]
  %s4 = sld [smem:[#allocation0]]
  $region30: #{transformer_decoder.25} parent=0
    _
  %s6 = ssub.s32 1, %s4
  %s7 = scalar_select 0, %s6, %s4
  // Predicated region
  $region2: #{transformer_decoder.25} parent=0 // pred_check
    _
  $region3: #{transformer_decoder.25} parent=0 // pred_check_branch
    %9 = sbr.rel (0) target = $region5
  $region4: #{transformer_decoder.25} parent=0 // pred_region
    _
  $region5: #{transformer_decoder.25} parent=0 // pred_fallthru
    _
  // Predicated region
  $region6: #{transformer_decoder.25} parent=0 // pred_check
    _
  $region7: #{transformer_decoder.25} parent=0 // pred_check_branch
    %11 = sbr.rel (0) target = $region9
  $region8: #{transformer_decoder.25} parent=0 // pred_region
    _
  $region9: #{transformer_decoder.25} parent=0 // pred_fallthru
    _
  // Predicated region
  $region10: #{transformer_decoder.25} parent=0 // pred_check
    _
  $region11: #{transformer_decoder.25} parent=0 // pred_check_branch
    %13 = sbr.rel (0) target = $region13
  $region12: #{transformer_decoder.25} parent=0 // pred_region
    _
  $region13: #{transformer_decoder.25} parent=0 // pred_fallthru
    _
  %p15 = scmp.eq.s32.totalorder 0, 0
  // Predicated region
  $region14: #{transformer_decoder.25} parent=0 // pred_check
    %p16 = pneg %p15
  $region15: #{transformer_decoder.25} parent=0 // pred_check_branch
    %18 = sbr.rel (%p16) target = $region17
  $region16: #{transformer_decoder.25} parent=0 // pred_region
    %vm19 = vcmask 523264
    %20 = vst.msk [vmem:[#allocation2] sm:$0xff] %vm19, 0.0
    %21 = vst.msk [vmem:[#allocation2 + $0x8] sm:$0xff] %vm19, 0.0
  $region17: #{transformer_decoder.25} parent=0 // pred_fallthru
    _
  %v22 = vld [vmem:[#allocation2] sm:$0xff]
  %v23 = vld [vmem:[#allocation2 + $0x8] sm:$0xff]
  %v24 = vld [vmem:[%s0] sm:$0xff]
  %v25 = vld [vmem:[%s0 + $0x8] sm:$0xff]
  %v26 = vpack.c.bf16 %v25, %v24
  %v27 = vld [vmem:[%s1] sm:$0xff]
  %v28 = vld [vmem:[%s1 + $0x8] sm:$0xff]
  %v29 = vld [vmem:[%s1 + $0x10] sm:$0xff]
  %v30 = vld [vmem:[%s1 + $0x18] sm:$0xff]
  %v31 = vpack.c.bf16 %v28, %v27
  %v32 = vpack.c.bf16 %v30, %v29
  %vm33 = vcmask 261120
  %v35 = vsel %vm33, %v26, 0
  %37 = vmatprep.subr.bf16.mxu0 0
  %38 = vmatpush1.bf16.msra.mxu0 %v31
  %39 = vmatprep.subr.bf16.mxu0 0
  %40 = vmatpush1.bf16.msra.mxu0 %v32
  %41 = vmatprep.subr.bf16.mxu0 0
  %42 = vmatpush1.bf16.msra.mxu0 0
  %43 = vmatprep.subr.bf16.mxu0 0
  %44 = vmatpush1.bf16.msra.mxu0 0
  %45 = vmatprep.subr.bf16.mxu0 0
  %46 = vmatpush1.bf16.msra.mxu0 0
  %47 = vmatprep.subr.bf16.mxu0 0
  %48 = vmatpush1.bf16.msra.mxu0 0
  %49 = vmatprep.subr.bf16.mxu0 0
  %50 = vmatpush1.bf16.msra.mxu0 0
  %51 = vmatprep.subr.bf16.mxu0 0
  %52 = vmatpush1.bf16.msra.mxu0 0
  %53 = vmatprep.subr.bf16.mxu0 0
  %54 = vmatpush1.bf16.msra.mxu0 0
  %55 = vmatprep.subr.bf16.mxu0 0
  %56 = vmatpush1.bf16.msra.mxu0 0
  %57 = vmatprep.subr.bf16.mxu0 0
  %58 = vmatpush1.bf16.msra.mxu0 0
  %59 = vmatprep.subr.bf16.mxu0 0
  %60 = vmatpush1.bf16.msra.mxu0 0
  %61 = vmatprep.subr.bf16.mxu0 0
  %62 = vmatpush1.bf16.msra.mxu0 0
  %63 = vmatprep.subr.bf16.mxu0 0
  %64 = vmatpush1.bf16.msra.mxu0 0
  %65 = vmatprep.subr.bf16.mxu0 0
  %66 = vmatpush1.bf16.msra.mxu0 0
  %67 = vmatprep.subr.bf16.mxu0 0
  %68 = vmatpush1.bf16.msra.mxu0 0
  %69 = vmatprep.mubr.bf16.mxu0 0
  %70 = vmatmul.mubr.bf16.gmra.mrb[0].mxu0 %v35
  %v71 = vpop.f32.mrb[0].mxu0
  %v72 = vadd.f32 0.0, %v71
  %v73 = vpop.f32.mrb[0].mxu0
  %v74 = vpop.f32.mrb[0].mxu0
  %v75 = vadd.f32 0.0, %v74
  %v76 = vpop.f32.mrb[0].mxu0
  %77 = vdwg.mxu0
  %v78 = vadd.f32 %v22, %v72
  %v79 = vadd.f32 %v23, %v75
  %vm80 = vcmask 523264
  %81 = vst.msk [vmem:[#allocation2] sm:$0xff] %vm80, %v78
  %82 = vst.msk [vmem:[#allocation2 + $0x8] sm:$0xff] %vm80, %v79
  // Predicated region
  $region18: #{transformer_decoder.25} parent=0 // pred_check
    %p83 = pneg %p15
  $region19: #{transformer_decoder.25} parent=0 // pred_check_branch
    %85 = sbr.rel (%p83) target = $region21
  $region20: #{transformer_decoder.25} parent=0 // pred_region
    %v86 = vld [vmem:[#allocation2] sm:$0xff]
    %v87 = vld [vmem:[#allocation2 + $0x8] sm:$0xff]
    %v88 = vld [vmem:[%s2] sm:$0x1]
    %v90 = vlaneseq
    %v91 = vshrl.u32 %v90, 7
    %v92 = vsub.s32 0, %v91
    %v93 = vrot.slane %v88, %v92
    %v95 = vadd.f32 %v86, %v93
    %v96 = vadd.f32 %v87, %v93
    %v97 = vmax.f32 %v95, 0.0
    %v98 = vmax.f32 %v96, 0.0
    %99 = vst.msk [vmem:[%s3] sm:$0xff] %vm80, %v97
    %100 = vst.msk [vmem:[%s3 + $0x8] sm:$0xff] %vm80, %v98
  $region21: #{transformer_decoder.25} parent=0 // pred_fallthru
    _
  // Predicated region
  $region22: #{transformer_decoder.25} parent=0 // pred_check
    _
  $region23: #{transformer_decoder.25} parent=0 // pred_check_branch
    %102 = sbr.rel (0) target = $region25
  $region24: #{transformer_decoder.25} parent=0 // pred_region
    _
  $region25: #{transformer_decoder.25} parent=0 // pred_fallthru
    _
  // Predicated region
  $region26: #{transformer_decoder.25} parent=0 // pred_check
    _
  $region27: #{transformer_decoder.25} parent=0 // pred_check_branch
    %104 = sbr.rel (0) target = $region29
  $region28: #{transformer_decoder.25} parent=0 // pred_region
    _
  $region29: #{transformer_decoder.25} parent=0 // pred_fallthru
    _

// kernel: transformer_decoder.23
$region0: #{transformer_decoder.23}
  #allocation0 [shape = 'u32[]', space=smem, size = 0x4, offset = 0x4, fixed_abs, tag = 'smem constant byte address 0x4 - core index']
  #allocation1 [shape = 'u32[144,128]{1,0:T(1,128)}', space=vmem, size = 0x12000, scoped, tag = 'internal scratch']
  #allocation2 [shape = 'f32[8,1]{1,0:T(8,128)}', space=vmem, size = 0x1000, scoped, tag = 'scratch operand']
  #allocation3 [shape = 'f32[8,1]{1,0:T(8,128)}', space=vmem, size = 0x1000, scoped, tag = 'scratch operand']
  #allocation4 [shape = 'f32[8,8]{1,0:T(8,128)}', space=vmem, size = 0x1000, scoped, tag = 'scratch operand']
  %s0 = inlined_call_operand.vmem [shape: f32[2,4,8,8], index: 0, kind: input, shape index: {}]
  %s1 = inlined_call_operand.vmem [shape: f32[2,4,8,8], index: 1, kind: input, shape index: {}]
  %s2 = inlined_call_operand.vmem [shape: f32[2,4,8,8], index: 2, kind: input, shape index: {}]
  %s3 = inlined_call_operand.vmem [shape: f32[2,4,8,8], index: 3, kind: output, shape index: {}]
  %s4 = sld [smem:[#allocation0]]
  $region53: #{transformer_decoder.23} parent=0
    _
  %s6 = ssub.s32 1, %s4
  %s7 = scalar_select 0, %s6, %s4
  loop: start=0, step=1, limit=10
  $region2: #{transformer_decoder.23} parent=0 // loop_pre_header
    _
  $region3: #{transformer_decoder.23} parent=0 // loop_header
    %s9 = sphi 0, %s13
    %p10 = scmp.ge.s32.totalorder %s9, 10
    %s16 = sphi 0, %s42
    %s17 = sphi 0, %s38
    %s18 = sphi 0, %s34
    %s19 = sphi 0, %s30
    %s20 = sphi 0, %s16
    %s21 = sphi 0, %s17
    %s22 = sphi 0, %s18
    %s23 = sphi 0, %s19
    %s24 = sphi 0, %s20
    %s25 = sphi 0, %s21
    %s26 = sphi 0, %s22
    %s27 = sphi 0, %s23
    %s49 = sphi 0, %s51
    %s52 = sphi 0, %s49
    %s53 = sphi 0, %s52
    %s69 = sphi 0, %s53
    %s79 = sphi 0, %s81
    %s82 = sphi 0, %s79
    %s83 = sphi 0, %s82
    %s99 = sphi 0, %s83
    %s109 = sphi 0, %s111
    %s112 = sphi 0, %s109
    %s113 = sphi 0, %s112
    %s129 = sphi 0, %s113
    %s139 = sphi 0, %s141
    %s142 = sphi 0, %s139
    %s143 = sphi 0, %s142
    %s159 = sphi 0, %s143
  $region4: #{transformer_decoder.23} parent=0 // loop_header_branch
    %12 = sbr.rel (%p10) target = $region8
  $region5: #{transformer_decoder.23} parent=0 // loop_body
    %s14 = ssub.s32 %s9, 1
    %s15 = ssub.s32 %s9, 2
    %s28 = sadd.s32 1, %s19
    %p29 = scmp.ge.s32.totalorder %s28, 1
    %s30 = scalar_select %p29, 0, %s28
    %s31 = sadd.s32 1, %s18
    %s32 = scalar_select %p29, %s31, %s18
    %p33 = scmp.ge.s32.totalorder %s32, 1
    %s34 = scalar_select %p33, 0, %s32
    %s35 = sadd.s32 1, %s17
    %s36 = scalar_select %p33, %s35, %s17
    %p37 = scmp.ge.s32.totalorder %s36, 4
    %s38 = scalar_select %p37, 0, %s36
    %s39 = sadd.s32 1, %s16
    %s40 = scalar_select %p37, %s39, %s16
    %p41 = scmp.ge.s32.totalorder %s40, 2
    %s42 = scalar_select %p41, 0, %s40
    %s43 = ssub.s32 %s16, %s42
    %s44 = ssub.s32 %s17, %s38
    %s45 = sor.u32 %s43, %s44
    %s46 = ssub.s32 %s18, %s34
    %s47 = sor.u32 %s45, %s46
    %p48 = scmp.eq.s32.totalorder %s47, 0
    %s50 = sadd.s32 %s49, 1
    %s51 = scalar_select %p48, %s49, %s50
    %p54 = pneg %p48
    %p55 = scmp.eq.s32.totalorder %s9, 7
    %p56 = por %p54, %p55
    %p57 = scmp.ne.s32.totalorder %s49, %s52
    %p58 = scmp.eq.s32.totalorder %s9, 0
    %p59 = por %p57, %p58
    %p60 = scmp.ne.s32.totalorder %s49, %s52
    %p61 = scmp.eq.s32.totalorder %s14, 7
    %p62 = por %p60, %p61
    %p63 = scmp.ne.s32.totalorder %s52, %s53
    %p64 = scmp.eq.s32.totalorder %s14, 0
    %p65 = por %p63, %p64
    %p66 = scmp.ne.s32.totalorder %s52, %s53
    %p67 = scmp.eq.s32.totalorder %s15, 7
    %p68 = por %p66, %p67
    %p70 = scmp.ne.s32.totalorder %s53, %s69
    %p71 = scmp.eq.s32.totalorder %s15, 0
    %p72 = por %p70, %p71
    %s73 = ssub.s32 %s16, %s42
    %s74 = ssub.s32 %s17, %s38
    %s75 = sor.u32 %s73, %s74
    %s76 = ssub.s32 %s19, %s30
    %s77 = sor.u32 %s75, %s76
    %p78 = scmp.eq.s32.totalorder %s77, 0
    %s80 = sadd.s32 %s79, 1
    %s81 = scalar_select %p78, %s79, %s80
    %p84 = pneg %p78
    %p85 = scmp.eq.s32.totalorder %s9, 7
    %p86 = por %p84, %p85
    %p87 = scmp.ne.s32.totalorder %s79, %s82
    %p88 = scmp.eq.s32.totalorder %s9, 0
    %p89 = por %p87, %p88
    %p90 = scmp.ne.s32.totalorder %s79, %s82
    %p91 = scmp.eq.s32.totalorder %s14, 7
    %p92 = por %p90, %p91
    %p93 = scmp.ne.s32.totalorder %s82, %s83
    %p94 = scmp.eq.s32.totalorder %s14, 0
    %p95 = por %p93, %p94
    %p96 = scmp.ne.s32.totalorder %s82, %s83
    %p97 = scmp.eq.s32.totalorder %s15, 7
    %p98 = por %p96, %p97
    %p100 = scmp.ne.s32.totalorder %s83, %s99
    %p101 = scmp.eq.s32.totalorder %s15, 0
    %p102 = por %p100, %p101
    %s103 = ssub.s32 %s16, %s42
    %s104 = ssub.s32 %s17, %s38
    %s105 = sor.u32 %s103, %s104
    %s106 = ssub.s32 %s19, %s30
    %s107 = sor.u32 %s105, %s106
    %p108 = scmp.eq.s32.totalorder %s107, 0
    %s110 = sadd.s32 %s109, 1
    %s111 = scalar_select %p108, %s109, %s110
    %p114 = pneg %p108
    %p115 = scmp.eq.s32.totalorder %s9, 7
    %p116 = por %p114, %p115
    %p117 = scmp.ne.s32.totalorder %s109, %s112
    %p118 = scmp.eq.s32.totalorder %s9, 0
    %p119 = por %p117, %p118
    %p120 = scmp.ne.s32.totalorder %s109, %s112
    %p121 = scmp.eq.s32.totalorder %s14, 7
    %p122 = por %p120, %p121
    %p123 = scmp.ne.s32.totalorder %s112, %s113
    %p124 = scmp.eq.s32.totalorder %s14, 0
    %p125 = por %p123, %p124
    %p126 = scmp.ne.s32.totalorder %s112, %s113
    %p127 = scmp.eq.s32.totalorder %s15, 7
    %p128 = por %p126, %p127
    %p130 = scmp.ne.s32.totalorder %s113, %s129
    %p131 = scmp.eq.s32.totalorder %s15, 0
    %p132 = por %p130, %p131
    %s133 = ssub.s32 %s16, %s42
    %s134 = ssub.s32 %s17, %s38
    %s135 = sor.u32 %s133, %s134
    %s136 = ssub.s32 %s18, %s34
    %s137 = sor.u32 %s135, %s136
    %p138 = scmp.eq.s32.totalorder %s137, 0
    %s140 = sadd.s32 %s139, 1
    %s141 = scalar_select %p138, %s139, %s140
    %p144 = pneg %p138
    %p145 = scmp.eq.s32.totalorder %s9, 7
    %p146 = por %p144, %p145
    %p147 = scmp.ne.s32.totalorder %s139, %s142
    %p148 = scmp.eq.s32.totalorder %s9, 0
    %p149 = por %p147, %p148
    %p150 = scmp.ne.s32.totalorder %s139, %s142
    %p151 = scmp.eq.s32.totalorder %s14, 7
    %p152 = por %p150, %p151
    %p153 = scmp.ne.s32.totalorder %s142, %s143
    %p154 = scmp.eq.s32.totalorder %s14, 0
    %p155 = por %p153, %p154
    %p156 = scmp.ne.s32.totalorder %s142, %s143
    %p157 = scmp.eq.s32.totalorder %s15, 7
    %p158 = por %p156, %p157
    %p160 = scmp.ne.s32.totalorder %s143, %s159
    %p161 = scmp.eq.s32.totalorder %s15, 0
    %p162 = por %p160, %p161
    %p163 = scmp.le.s32.totalorder 1, %s9
    %p164 = scmp.lt.s32.totalorder %s9, 9
    %p165 = pnand %p163, %p164
    %p166 = pneg %p165
    // Predicated region
    $region9: #{transformer_decoder.23} parent=5 // pred_check
      _
    $region10: #{transformer_decoder.23} parent=5 // pred_check_branch
      %168 = sbr.rel (%p165) target = $region12
    $region11: #{transformer_decoder.23} parent=5 // pred_region
      %s169 = ssub.s32 %s9, 1
    $region12: #{transformer_decoder.23} parent=5 // pred_fallthru
      _
    %p170 = scmp.lt.s32.totalorder %s9, 8
    // Predicated region
    $region13: #{transformer_decoder.23} parent=5 // pred_check
      %p171 = pneg %p170
    $region14: #{transformer_decoder.23} parent=5 // pred_check_branch
      %173 = sbr.rel (%p171) target = $region16
    $region15: #{transformer_decoder.23} parent=5 // pred_region
      // Predicated region
      $region17: #{transformer_decoder.23} parent=15 // pred_check
        %p174 = pneg %p59
      $region18: #{transformer_decoder.23} parent=15 // pred_check_branch
        %176 = sbr.rel (%p174) target = $region20
      $region19: #{transformer_decoder.23} parent=15 // pred_region
        %p177 = scmp.lt.s32.totalorder %s16, 1
        %s178 = scalar_select %p177, %s16, 1
        %p179 = scmp.lt.s32.totalorder %s17, 3
        %s180 = scalar_select %p179, %s17, 3
        %p181 = scmp.lt.s32.totalorder %s18, 0
        %s182 = scalar_select %p181, %s18, 0
        %s183 = sadd.s32 %s182, %s180
        %s184 = smul.addr %s178, 4
        %s185 = sadd.s32 %s183, %s184
        %s186 = smul.addr %s185, 8
        %s187 = scalar_lea.vmem %s0, %s186
      $region20: #{transformer_decoder.23} parent=15 // pred_fallthru
        _
      // Predicated region
      $region21: #{transformer_decoder.23} parent=15 // pred_check
        %p188 = pneg %p89
      $region22: #{transformer_decoder.23} parent=15 // pred_check_branch
        %190 = sbr.rel (%p188) target = $region24
      $region23: #{transformer_decoder.23} parent=15 // pred_region
        %p191 = scmp.lt.s32.totalorder %s16, 1
        %s192 = scalar_select %p191, %s16, 1
        %p193 = scmp.lt.s32.totalorder %s17, 3
        %s194 = scalar_select %p193, %s17, 3
        %p195 = scmp.lt.s32.totalorder %s19, 0
        %s196 = scalar_select %p195, %s19, 0
        %s197 = sadd.s32 %s196, %s194
        %s198 = smul.addr %s192, 4
        %s199 = sadd.s32 %s197, %s198
        %s200 = smul.addr %s199, 8
        %s201 = scalar_lea.vmem %s1, %s200
      $region24: #{transformer_decoder.23} parent=15 // pred_fallthru
        _
      // Predicated region
      $region25: #{transformer_decoder.23} parent=15 // pred_check
        %p202 = pneg %p119
      $region26: #{transformer_decoder.23} parent=15 // pred_check_branch
        %204 = sbr.rel (%p202) target = $region28
      $region27: #{transformer_decoder.23} parent=15 // pred_region
        %p205 = scmp.lt.s32.totalorder %s16, 1
        %s206 = scalar_select %p205, %s16, 1
        %p207 = scmp.lt.s32.totalorder %s17, 3
        %s208 = scalar_select %p207, %s17, 3
        %p209 = scmp.lt.s32.totalorder %s19, 0
        %s210 = scalar_select %p209, %s19, 0
        %s211 = sadd.s32 %s210, %s208
        %s212 = smul.addr %s206, 4
        %s213 = sadd.s32 %s211, %s212
        %s214 = smul.addr %s213, 8
        %s215 = scalar_lea.vmem %s2, %s214
      $region28: #{transformer_decoder.23} parent=15 // pred_fallthru
        _
    $region16: #{transformer_decoder.23} parent=5 // pred_fallthru
      _
    %p216 = scmp.le.s32.totalorder 1, %s9
    %p217 = scmp.lt.s32.totalorder %s9, 9
    %p218 = pnand %p216, %p217
    %p219 = pneg %p218
    // Predicated region
    $region29: #{transformer_decoder.23} parent=5 // pred_check
      _
    $region30: #{transformer_decoder.23} parent=5 // pred_check_branch
      %221 = sbr.rel (%p218) target = $region32
    $region31: #{transformer_decoder.23} parent=5 // pred_region
      %s222 = ssub.s32 %s9, 1
      %p223 = scmp.lt.s32.totalorder %s20, 1
      %s224 = scalar_select %p223, %s20, 1
      %p225 = scmp.lt.s32.totalorder %s21, 3
      %s226 = scalar_select %p225, %s21, 3
      %p227 = scmp.lt.s32.totalorder %s22, 0
      %s228 = scalar_select %p227, %s22, 0
      %s229 = sadd.s32 %s228, %s226
      %s230 = smul.addr %s224, 4
      %s231 = sadd.s32 %s229, %s230
      %s232 = smul.addr %s231, 8
      %s233 = scalar_lea.vmem %s0, %s232
      %p234 = pneg %p65
      %p235 = pneg %p62
      %p236 = scmp.lt.s32.totalorder %s20, 1
      %s237 = scalar_select %p236, %s20, 1
      %p238 = scmp.lt.s32.totalorder %s21, 3
      %s239 = scalar_select %p238, %s21, 3
      %p240 = scmp.lt.s32.totalorder %s23, 0
      %s241 = scalar_select %p240, %s23, 0
      %s242 = sadd.s32 %s241, %s239
      %s243 = smul.addr %s237, 4
      %s244 = sadd.s32 %s242, %s243
      %s245 = smul.addr %s244, 8
      %s246 = scalar_lea.vmem %s1, %s245
      %p247 = pneg %p95
      %p248 = pneg %p92
      %p249 = scmp.lt.s32.totalorder %s20, 1
      %s250 = scalar_select %p249, %s20, 1
      %p251 = scmp.lt.s32.totalorder %s21, 3
      %s252 = scalar_select %p251, %s21, 3
      %p253 = scmp.lt.s32.totalorder %s23, 0
      %s254 = scalar_select %p253, %s23, 0
      %s255 = sadd.s32 %s254, %s252
      %s256 = smul.addr %s250, 4
      %s257 = sadd.s32 %s255, %s256
      %s258 = smul.addr %s257, 8
      %s259 = scalar_lea.vmem %s2, %s258
      %p260 = pneg %p125
      %p261 = pneg %p122
      %p262 = pneg %p155
      %p263 = pneg %p152
      %p264 = scmp.lt.s32.totalorder %s20, 1
      %s265 = scalar_select %p264, %s20, 1
      %p266 = scmp.lt.s32.totalorder %s21, 3
      %s267 = scalar_select %p266, %s21, 3
      %p268 = scmp.lt.s32.totalorder %s22, 0
      %s269 = scalar_select %p268, %s22, 0
      %s270 = sadd.s32 %s269, %s267
      %s271 = smul.addr %s265, 4
      %s272 = sadd.s32 %s270, %s271
      %s273 = smul.addr %s272, 8
      %s274 = scalar_lea.vmem %s3, %s273
      %p275 = scmp.lt.s32.totalorder %s20, 1
      %s276 = scalar_select %p275, %s20, 1
      %p277 = scmp.lt.s32.totalorder %s21, 3
      %s278 = scalar_select %p277, %s21, 3
      %p279 = scmp.lt.s32.totalorder %s22, 0
      %s280 = scalar_select %p279, %s22, 0
      %s281 = sadd.s32 %s280, %s278
      %s282 = smul.addr %s276, 4
      %s283 = sadd.s32 %s281, %s282
      %s284 = smul.addr %s283, 8
      %s285 = scalar_lea.vmem %s0, %s284
      %p286 = scmp.lt.s32.totalorder %s20, 1
      %s287 = scalar_select %p286, %s20, 1
      %p288 = scmp.lt.s32.totalorder %s21, 3
      %s289 = scalar_select %p288, %s21, 3
      %p290 = scmp.lt.s32.totalorder %s23, 0
      %s291 = scalar_select %p290, %s23, 0
      %s292 = sadd.s32 %s291, %s289
      %s293 = smul.addr %s287, 4
      %s294 = sadd.s32 %s292, %s293
      %s295 = smul.addr %s294, 8
      %s296 = scalar_lea.vmem %s1, %s295
      %p297 = scmp.lt.s32.totalorder %s20, 1
      %s298 = scalar_select %p297, %s20, 1
      %p299 = scmp.lt.s32.totalorder %s21, 3
      %s300 = scalar_select %p299, %s21, 3
      %p301 = scmp.lt.s32.totalorder %s23, 0
      %s302 = scalar_select %p301, %s23, 0
      %s303 = sadd.s32 %s302, %s300
      %s304 = smul.addr %s298, 4
      %s305 = sadd.s32 %s303, %s304
      %s306 = smul.addr %s305, 8
      %s307 = scalar_lea.vmem %s2, %s306
      %p308 = scmp.lt.s32.totalorder %s20, 1
      %s309 = scalar_select %p308, %s20, 1
      %p310 = scmp.lt.s32.totalorder %s21, 3
      %s311 = scalar_select %p310, %s21, 3
      %p312 = scmp.lt.s32.totalorder %s22, 0
      %s313 = scalar_select %p312, %s22, 0
      %s314 = sadd.s32 %s313, %s311
      %s315 = smul.addr %s309, 4
      %s316 = sadd.s32 %s314, %s315
      %s317 = smul.addr %s316, 8
      %s318 = scalar_lea.vmem %s3, %s317
      %p320 = scmp.eq.s32.totalorder %s23, 0
      // Predicated region
      $region33: #{transformer_decoder.23} parent=31 // pred_check
        %p321 = pneg %p320
      $region34: #{transformer_decoder.23} parent=31 // pred_check_branch
        %323 = sbr.rel (%p321) target = $region36
      $region35: #{transformer_decoder.23} parent=31 // pred_region
        %vm324 = vcmask 7168
        %325 = vst.msk [vmem:[#allocation2] sm:$0xff] %vm324, -1e+30
        %326 = vst.msk [vmem:[#allocation3] sm:$0xff] %vm324, 0.0
        %vm327 = vcmask 64512
        %328 = vst.msk [vmem:[#allocation4] sm:$0xff] %vm327, 0.0
      $region36: #{transformer_decoder.23} parent=31 // pred_fallthru
        _
      %v329 = vld [vmem:[%s285] sm:$0xff]
      %v330 = vmul.f32 %v329, 0.35355338
      %v331 = vpack.c.bf16 %v330, %v330
      %v332 = vld [vmem:[%s296] sm:$0xff]
      %v333 = vpack.c.bf16 %v332, %v332
      %vm334 = vcmask 64512
      %v336 = vsel %vm334, %v331, 0
      %v339 = vsel %vm334, %v333, 0
      %341 = vmatprep.subr.bf16.mxu0 0
      %342 = vmatpush1.bf16.xpose.msra.mxu0 %v339
      %343 = vmatprep.subr.bf16.mxu0 0
      %344 = vmatpush1.bf16.xpose.msra.mxu0 0
      %345 = vmatprep.subr.bf16.mxu0 0
      %346 = vmatpush1.bf16.xpose.msra.mxu0 0
      %347 = vmatprep.subr.bf16.mxu0 0
      %348 = vmatpush1.bf16.xpose.msra.mxu0 0
      %349 = vmatprep.subr.bf16.mxu0 0
      %350 = vmatpush1.bf16.xpose.msra.mxu0 0
      %351 = vmatprep.subr.bf16.mxu0 0
      %352 = vmatpush1.bf16.xpose.msra.mxu0 0
      %353 = vmatprep.subr.bf16.mxu0 0
      %354 = vmatpush1.bf16.xpose.msra.mxu0 0
      %355 = vmatprep.subr.bf16.mxu0 0
      %356 = vmatpush1.bf16.xpose.msra.mxu0 0
      %357 = vmatprep.subr.bf16.mxu0 0
      %358 = vmatpush1.bf16.xpose.msra.mxu0 0
      %359 = vmatprep.subr.bf16.mxu0 0
      %360 = vmatpush1.bf16.xpose.msra.mxu0 0
      %361 = vmatprep.subr.bf16.mxu0 0
      %362 = vmatpush1.bf16.xpose.msra.mxu0 0
      %363 = vmatprep.subr.bf16.mxu0 0
      %364 = vmatpush1.bf16.xpose.msra.mxu0 0
      %365 = vmatprep.subr.bf16.mxu0 0
      %366 = vmatpush1.bf16.xpose.msra.mxu0 0
      %367 = vmatprep.subr.bf16.mxu0 0
      %368 = vmatpush1.bf16.xpose.msra.mxu0 0
      %369 = vmatprep.subr.bf16.mxu0 0
      %370 = vmatpush1.bf16.xpose.msra.mxu0 0
      %371 = vmatprep.subr.bf16.mxu0 0
      %372 = vmatpush1.bf16.xpose.msra.mxu0 0
      %373 = vmatprep.mubr.bf16.mxu0 0
      %374 = vmatmul.mubr.bf16.gmra.mrb[0].mxu0 %v336
      %v375 = vpop.f32.mrb[0].mxu0
      %v376 = vadd.f32 0.0, %v375
      %v377 = vpop.f32.mrb[0].mxu0
      %v378 = vpop.f32.mrb[0].mxu0
      %v379 = vpop.f32.mrb[0].mxu0
      %380 = vdwg.mxu0
      %v381 = vld [vmem:[#allocation2] sm:$0xff]
      %v382 = vsel %vm334, %v376, -inf
      %383 = vmax.xlane.f32.xlu0 %v382
      %v384 = vpop.xlane.xlu0 %383
      %v385 = vmax.f32 %v381, %v384
      %v386 = vsub.f32 %v381, %v385
      %v387 = vmul.f32 %v386, 1.442695
      %v388 = vpow.pop %v387
      %390 = vset.pattern.permute.xlu0 0
      %391 = vperm.xlu0 %390, %v385
      %v392 = vpop.permute.xlu0 %391
      %v394 = vsub.f32 %v376, %v392
      %v395 = vmul.f32 %v394, 1.442695
      %v396 = vpow.pop %v395
      %v397 = vld [vmem:[#allocation3] sm:$0xff]
      %v398 = vmul.f32 %v388, %v397
      %v399 = vsel %vm334, %v396, 0.0
      %400 = vadd.xlane.f32.xlu0 %v399
      %v401 = vpop.xlane.xlu0 %400
      %v402 = vadd.f32 %v398, %v401
      %vm403 = vcmask 7168
      %404 = vst.msk [vmem:[#allocation3] sm:$0xff] %vm403, %v402
      %v405 = vld [vmem:[#allocation4] sm:$0xff]
      %407 = vset.pattern.permute.xlu0 0
      %408 = vperm.xlu0 %407, %v388
      %v409 = vpop.permute.xlu0 %408
      %v411 = vmul.f32 %v409, %v405
      %v412 = vpack.c.bf16 %v396, %v396
      %v413 = vld [vmem:[%s307] sm:$0xff]
      %v414 = vpack.c.bf16 %v413, %v413
      %v416 = vsel %vm334, %v412, 0
      %vm418 = vcmask 1043456
      %v420 = vsel %vm418, %v414, 0
      %422 = vmatprep.subr.bf16.mxu0 0
      %423 = vmatpush1.bf16.msra.mxu0 %v420
      %424 = vmatprep.subr.bf16.mxu0 0
      %425 = vmatpush1.bf16.msra.mxu0 0
      %426 = vmatprep.subr.bf16.mxu0 0
      %427 = vmatpush1.bf16.msra.mxu0 0
      %428 = vmatprep.subr.bf16.mxu0 0
      %429 = vmatpush1.bf16.msra.mxu0 0
      %430 = vmatprep.subr.bf16.mxu0 0
      %431 = vmatpush1.bf16.msra.mxu0 0
      %432 = vmatprep.subr.bf16.mxu0 0
      %433 = vmatpush1.bf16.msra.mxu0 0
      %434 = vmatprep.subr.bf16.mxu0 0
      %435 = vmatpush1.bf16.msra.mxu0 0
      %436 = vmatprep.subr.bf16.mxu0 0
      %437 = vmatpush1.bf16.msra.mxu0 0
      %438 = vmatprep.subr.bf16.mxu0 0
      %439 = vmatpush1.bf16.msra.mxu0 0
      %440 = vmatprep.subr.bf16.mxu0 0
      %441 = vmatpush1.bf16.msra.mxu0 0
      %442 = vmatprep.subr.bf16.mxu0 0
      %443 = vmatpush1.bf16.msra.mxu0 0
      %444 = vmatprep.subr.bf16.mxu0 0
      %445 = vmatpush1.bf16.msra.mxu0 0
      %446 = vmatprep.subr.bf16.mxu0 0
      %447 = vmatpush1.bf16.msra.mxu0 0
      %448 = vmatprep.subr.bf16.mxu0 0
      %449 = vmatpush1.bf16.msra.mxu0 0
      %450 = vmatprep.subr.bf16.mxu0 0
      %451 = vmatpush1.bf16.msra.mxu0 0
      %452 = vmatprep.subr.bf16.mxu0 0
      %453 = vmatpush1.bf16.msra.mxu0 0
      %454 = vmatprep.mubr.bf16.mxu0 0
      %455 = vmatmul.mubr.bf16.gmra.mrb[0].mxu0 %v416
      %v456 = vpop.f32.mrb[0].mxu0
      %v457 = vadd.f32 0.0, %v456
      %v458 = vpop.f32.mrb[0].mxu0
      %v459 = vpop.f32.mrb[0].mxu0
      %v460 = vpop.f32.mrb[0].mxu0
      %461 = vdwg.mxu0
      %v462 = vadd.f32 %v411, %v457
      %463 = vst.msk [vmem:[#allocation4] sm:$0xff] %vm334, %v462
      %464 = vst.msk [vmem:[#allocation2] sm:$0xff] %vm403, %v385
      // Predicated region
      $region37: #{transformer_decoder.23} parent=31 // pred_check
        %p465 = pneg %p320
      $region38: #{transformer_decoder.23} parent=31 // pred_check_branch
        %467 = sbr.rel (%p465) target = $region40
      $region39: #{transformer_decoder.23} parent=31 // pred_region
        %v468 = vld [vmem:[#allocation3] sm:$0xff]
        %v469 = vrcp.pop %v468
        %v470 = vld [vmem:[#allocation4] sm:$0xff]
        %472 = vset.pattern.permute.xlu0 0
        %473 = vperm.xlu0 %472, %v469
        %v474 = vpop.permute.xlu0 %473
        %v476 = vmul.f32 %v470, %v474
        %477 = vst.msk [vmem:[%s318] sm:$0xff] %vm334, %v476
      $region40: #{transformer_decoder.23} parent=31 // pred_fallthru
        _
      %p478 = scmp.lt.s32.totalorder %s20, 1
      %s479 = scalar_select %p478, %s20, 1
      %p480 = scmp.lt.s32.totalorder %s21, 3
      %s481 = scalar_select %p480, %s21, 3
      %p482 = scmp.lt.s32.totalorder %s22, 0
      %s483 = scalar_select %p482, %s22, 0
      %s484 = sadd.s32 %s483, %s481
      %s485 = smul.addr %s479, 4
      %s486 = sadd.s32 %s484, %s485
      %s487 = smul.addr %s486, 8
      %s488 = scalar_lea.vmem %s3, %s487
      // Predicated region
      $region41: #{transformer_decoder.23} parent=31 // pred_check
        %p489 = pneg %p152
      $region42: #{transformer_decoder.23} parent=31 // pred_check_branch
        %491 = sbr.rel (%p489) target = $region44
      $region43: #{transformer_decoder.23} parent=31 // pred_region
        _
      $region44: #{transformer_decoder.23} parent=31 // pred_fallthru
        _
    $region32: #{transformer_decoder.23} parent=5 // pred_fallthru
      _
    %p492 = scmp.le.s32.totalorder 2, %s9
    // Predicated region
    $region45: #{transformer_decoder.23} parent=5 // pred_check
      %p493 = pneg %p492
    $region46: #{transformer_decoder.23} parent=5 // pred_check_branch
      %495 = sbr.rel (%p493) target = $region48
    $region47: #{transformer_decoder.23} parent=5 // pred_region
      %s496 = ssub.s32 %s9, 2
      // Predicated region
      $region49: #{transformer_decoder.23} parent=47 // pred_check
        %p497 = pneg %p158
      $region50: #{transformer_decoder.23} parent=47 // pred_check_branch
        %499 = sbr.rel (%p497) target = $region52
      $region51: #{transformer_decoder.23} parent=47 // pred_region
        %p500 = scmp.lt.s32.totalorder %s24, 1
        %s501 = scalar_select %p500, %s24, 1
        %p502 = scmp.lt.s32.totalorder %s25, 3
        %s503 = scalar_select %p502, %s25, 3
        %p504 = scmp.lt.s32.totalorder %s26, 0
        %s505 = scalar_select %p504, %s26, 0
        %s506 = sadd.s32 %s505, %s503
        %s507 = smul.addr %s501, 4
        %s508 = sadd.s32 %s506, %s507
        %s509 = smul.addr %s508, 8
        %s510 = scalar_lea.vmem %s3, %s509
      $region52: #{transformer_decoder.23} parent=47 // pred_fallthru
        _
    $region48: #{transformer_decoder.23} parent=5 // pred_fallthru
      _
  $region6: #{transformer_decoder.23} parent=0 // loop_footer
    %s13 = sadd.s32 1, %s9
  $region7: #{transformer_decoder.23} parent=0 // loop_footer_branch
    %8 = sbr.rel target = $region3
  $region8: #{transformer_decoder.23} parent=0 // loop_exit
    _

// kernel: transformer_decoder.26
$region0: #{transformer_decoder.26}
  #allocation0 [shape = 'u32[]', space=smem, size = 0x4, offset = 0x4, fixed_abs, tag = 'smem constant byte address 0x4 - core index']
  #allocation1 [shape = 'u32[144,128]{1,0:T(1,128)}', space=vmem, size = 0x12000, scoped, tag = 'internal scratch']
  #allocation2 [shape = 'f32[16,32]{1,0:T(8,128)}', space=vmem, size = 0x2000, scoped, tag = 'scratch operand']
  %s0 = inlined_call_operand.vmem [shape: f32[16,64], index: 0, kind: input, shape index: {}]
  %s1 = inlined_call_operand.vmem [shape: f32[64,32], index: 1, kind: input, shape index: {}]
  %s2 = inlined_call_operand.vmem [shape: f32[1,32], index: 2, kind: input, shape index: {}]
  %s3 = inlined_call_operand.vmem [shape: f32[16,32], index: 3, kind: input, shape index: {}]
  %s4 = inlined_call_operand.vmem [shape: f32[1,32], index: 4, kind: input, shape index: {}]
  %s5 = inlined_call_operand.vmem [shape: f32[1,32], index: 5, kind: input, shape index: {}]
  %s6 = inlined_call_operand.vmem [shape: f32[16,32], index: 6, kind: output, shape index: {}]
  %s7 = sld [smem:[#allocation0]]
  $region42: #{transformer_decoder.26} parent=0
    _
  %s9 = ssub.s32 1, %s7
  %s10 = scalar_select 0, %s9, %s7
  // Predicated region
  $region2: #{transformer_decoder.26} parent=0 // pred_check
    _
  $region3: #{transformer_decoder.26} parent=0 // pred_check_branch
    %12 = sbr.rel (0) target = $region5
  $region4: #{transformer_decoder.26} parent=0 // pred_region
    _
  $region5: #{transformer_decoder.26} parent=0 // pred_fallthru
    _
  // Predicated region
  $region6: #{transformer_decoder.26} parent=0 // pred_check
    _
  $region7: #{transformer_decoder.26} parent=0 // pred_check_branch
    %14 = sbr.rel (0) target = $region9
  $region8: #{transformer_decoder.26} parent=0 // pred_region
    _
  $region9: #{transformer_decoder.26} parent=0 // pred_fallthru
    _
  // Predicated region
  $region10: #{transformer_decoder.26} parent=0 // pred_check
    _
  $region11: #{transformer_decoder.26} parent=0 // pred_check_branch
    %16 = sbr.rel (0) target = $region13
  $region12: #{transformer_decoder.26} parent=0 // pred_region
    _
  $region13: #{transformer_decoder.26} parent=0 // pred_fallthru
    _
  // Predicated region
  $region14: #{transformer_decoder.26} parent=0 // pred_check
    _
  $region15: #{transformer_decoder.26} parent=0 // pred_check_branch
    %18 = sbr.rel (0) target = $region17
  $region16: #{transformer_decoder.26} parent=0 // pred_region
    _
  $region17: #{transformer_decoder.26} parent=0 // pred_fallthru
    _
  // Predicated region
  $region18: #{transformer_decoder.26} parent=0 // pred_check
    _
  $region19: #{transformer_decoder.26} parent=0 // pred_check_branch
    %20 = sbr.rel (0) target = $region21
  $region20: #{transformer_decoder.26} parent=0 // pred_region
    _
  $region21: #{transformer_decoder.26} parent=0 // pred_fallthru
    _
  // Predicated region
  $region22: #{transformer_decoder.26} parent=0 // pred_check
    _
  $region23: #{transformer_decoder.26} parent=0 // pred_check_branch
    %22 = sbr.rel (0) target = $region25
  $region24: #{transformer_decoder.26} parent=0 // pred_region
    _
  $region25: #{transformer_decoder.26} parent=0 // pred_fallthru
    _
  %p24 = scmp.eq.s32.totalorder 0, 0
  // Predicated region
  $region26: #{transformer_decoder.26} parent=0 // pred_check
    %p25 = pneg %p24
  $region27: #{transformer_decoder.26} parent=0 // pred_check_branch
    %27 = sbr.rel (%p25) target = $region29
  $region28: #{transformer_decoder.26} parent=0 // pred_region
    %vm28 = vcmask 261120
    %29 = vst.msk [vmem:[#allocation2] sm:$0xff] %vm28, 0.0
    %30 = vst.msk [vmem:[#allocation2 + $0x8] sm:$0xff] %vm28, 0.0
  $region29: #{transformer_decoder.26} parent=0 // pred_fallthru
    _
  %v31 = vld [vmem:[#allocation2] sm:$0xff]
  %v32 = vld [vmem:[#allocation2 + $0x8] sm:$0xff]
  %v33 = vld [vmem:[%s0] sm:$0xff]
  %v34 = vld [vmem:[%s0 + $0x8] sm:$0xff]
  %v35 = vpack.c.bf16 %v34, %v33
  %v36 = vld [vmem:[%s1] sm:$0xff]
  %v37 = vld [vmem:[%s1 + $0x8] sm:$0xff]
  %v38 = vld [vmem:[%s1 + $0x10] sm:$0xff]
  %v39 = vld [vmem:[%s1 + $0x18] sm:$0xff]
  %v40 = vld [vmem:[%s1 + $0x20] sm:$0xff]
  %v41 = vld [vmem:[%s1 + $0x28] sm:$0xff]
  %v42 = vld [vmem:[%s1 + $0x30] sm:$0xff]
  %v43 = vld [vmem:[%s1 + $0x38] sm:$0xff]
  %v44 = vpack.c.bf16 %v37, %v36
  %v45 = vpack.c.bf16 %v39, %v38
  %v46 = vpack.c.bf16 %v41, %v40
  %v47 = vpack.c.bf16 %v43, %v42
  %vm48 = vcmask 523264
  %v50 = vsel %vm48, %v35, 0
  %52 = vmatprep.subr.bf16.mxu0 0
  %53 = vmatpush1.bf16.msra.mxu0 %v44
  %54 = vmatprep.subr.bf16.mxu0 0
  %55 = vmatpush1.bf16.msra.mxu0 %v45
  %56 = vmatprep.subr.bf16.mxu0 0
  %57 = vmatpush1.bf16.msra.mxu0 %v46
  %58 = vmatprep.subr.bf16.mxu0 0
  %59 = vmatpush1.bf16.msra.mxu0 %v47
  %60 = vmatprep.subr.bf16.mxu0 0
  %61 = vmatpush1.bf16.msra.mxu0 0
  %62 = vmatprep.subr.bf16.mxu0 0
  %63 = vmatpush1.bf16.msra.mxu0 0
  %64 = vmatprep.subr.bf16.mxu0 0
  %65 = vmatpush1.bf16.msra.mxu0 0
  %66 = vmatprep.subr.bf16.mxu0 0
  %67 = vmatpush1.bf16.msra.mxu0 0
  %68 = vmatprep.subr.bf16.mxu0 0
  %69 = vmatpush1.bf16.msra.mxu0 0
  %70 = vmatprep.subr.bf16.mxu0 0
  %71 = vmatpush1.bf16.msra.mxu0 0
  %72 = vmatprep.subr.bf16.mxu0 0
  %73 = vmatpush1.bf16.msra.mxu0 0
  %74 = vmatprep.subr.bf16.mxu0 0
  %75 = vmatpush1.bf16.msra.mxu0 0
  %76 = vmatprep.subr.bf16.mxu0 0
  %77 = vmatpush1.bf16.msra.mxu0 0
  %78 = vmatprep.subr.bf16.mxu0 0
  %79 = vmatpush1.bf16.msra.mxu0 0
  %80 = vmatprep.subr.bf16.mxu0 0
  %81 = vmatpush1.bf16.msra.mxu0 0
  %82 = vmatprep.subr.bf16.mxu0 0
  %83 = vmatpush1.bf16.msra.mxu0 0
  %84 = vmatprep.mubr.bf16.mxu0 0
  %85 = vmatmul.mubr.bf16.gmra.mrb[0].mxu0 %v50
  %v86 = vpop.f32.mrb[0].mxu0
  %v87 = vadd.f32 0.0, %v86
  %v88 = vpop.f32.mrb[0].mxu0
  %v89 = vpop.f32.mrb[0].mxu0
  %v90 = vadd.f32 0.0, %v89
  %v91 = vpop.f32.mrb[0].mxu0
  %92 = vdwg.mxu0
  %v93 = vadd.f32 %v31, %v87
  %v94 = vadd.f32 %v32, %v90
  %vm95 = vcmask 261120
  %96 = vst.msk [vmem:[#allocation2] sm:$0xff] %vm95, %v93
  %97 = vst.msk [vmem:[#allocation2 + $0x8] sm:$0xff] %vm95, %v94
  // Predicated region
  $region30: #{transformer_decoder.26} parent=0 // pred_check
    %p98 = pneg %p24
  $region31: #{transformer_decoder.26} parent=0 // pred_check_branch
    %100 = sbr.rel (%p98) target = $region33
  $region32: #{transformer_decoder.26} parent=0 // pred_region
    %v101 = vld [vmem:[#allocation2] sm:$0xff]
    %v102 = vld [vmem:[#allocation2 + $0x8] sm:$0xff]
    %v103 = vld [vmem:[%s2] sm:$0x1]
    %v105 = vlaneseq
    %v106 = vshrl.u32 %v105, 7
    %v107 = vsub.s32 0, %v106
    %v108 = vrot.slane %v103, %v107
    %v110 = vadd.f32 %v101, %v108
    %v111 = vadd.f32 %v102, %v108
    %v112 = vld [vmem:[%s3] sm:$0xff]
    %v113 = vld [vmem:[%s3 + $0x8] sm:$0xff]
    %v114 = vadd.f32 %v110, %v112
    %v115 = vadd.f32 %v111, %v113
    %v116 = vsel %vm95, %v114, 0.0
    %117 = vadd.xlane.f32.xlu0 %v116
    %v118 = vpop.xlane.xlu0 %117
    %v119 = vsel %vm95, %v115, 0.0
    %120 = vadd.xlane.f32.xlu0 %v119
    %v121 = vpop.xlane.xlu0 %120
    %v122 = vrcp.pop 32.0
    %v123 = vmul.f32 %v118, %v122
    %v124 = vmul.f32 %v121, %v122
    %v125 = vsub.f32 %v114, %v123
    %v126 = vsub.f32 %v115, %v124
    %v127 = vmul.f32 %v125, %v125
    %v128 = vmul.f32 %v126, %v126
    %v129 = vsel %vm95, %v127, 0.0
    %130 = vadd.xlane.f32.xlu0 %v129
    %v131 = vpop.xlane.xlu0 %130
    %v132 = vsel %vm95, %v128, 0.0
    %133 = vadd.xlane.f32.xlu0 %v132
    %v134 = vpop.xlane.xlu0 %133
    %v135 = vmul.f32 %v131, %v122
    %v136 = vmul.f32 %v134, %v122
    %v137 = vadd.f32 %v135, 1e-05
    %v138 = vadd.f32 %v136, 1e-05
    %v139 = vrsqrt.pop %v137
    %v140 = vrsqrt.pop %v138
    %v141 = vmul.f32 %v125, %v139
    %v142 = vmul.f32 %v126, %v140
    %v143 = vld [vmem:[%s4] sm:$0x1]
    %v145 = vlaneseq
    %v146 = vshrl.u32 %v145, 7
    %v147 = vsub.s32 0, %v146
    %v148 = vrot.slane %v143, %v147
    %v150 = vmul.f32 %v141, %v148
    %v151 = vmul.f32 %v142, %v148
    %v152 = vld [vmem:[%s5] sm:$0x1]
    %v154 = vlaneseq
    %v155 = vshrl.u32 %v154, 7
    %v156 = vsub.s32 0, %v155
    %v157 = vrot.slane %v152, %v156
    %v159 = vadd.f32 %v150, %v157
    %v160 = vadd.f32 %v151, %v157
    %161 = vst.msk [vmem:[%s6] sm:$0xff] %vm95, %v159
    %162 = vst.msk [vmem:[%s6 + $0x8] sm:$0xff] %vm95, %v160
  $region33: #{transformer_decoder.26} parent=0 // pred_fallthru
    _
  // Predicated region
  $region34: #{transformer_decoder.26} parent=0 // pred_check
    _
  $region35: #{transformer_decoder.26} parent=0 // pred_check_branch
    %164 = sbr.rel (0) target = $region37
  $region36: #{transformer_decoder.26} parent=0 // pred_region
    _
  $region37: #{transformer_decoder.26} parent=0 // pred_fallthru
    _
  // Predicated region
  $region38: #{transformer_decoder.26} parent=0 // pred_check
    _
  $region39: #{transformer_decoder.26} parent=0 // pred_check_branch
    %166 = sbr.rel (0) target = $region41
  $region40: #{transformer_decoder.26} parent=0 // pred_region
    _
  $region41: #{transformer_decoder.26} parent=0 // pred_fallthru
    _

// kernel: transformer_decoder.35
$region0: #{transformer_decoder.35}
  #allocation0 [shape = 'u32[]', space=smem, size = 0x4, offset = 0x4, fixed_abs, tag = 'smem constant byte address 0x4 - core index']
  #allocation1 [shape = 'u32[144,128]{1,0:T(1,128)}', space=vmem, size = 0x12000, scoped, tag = 'internal scratch']
  #allocation2 [shape = 'f32[16,32]{1,0:T(8,128)}', space=vmem, size = 0x2000, scoped, tag = 'scratch operand']
  %s0 = inlined_call_operand.vmem [shape: f32[16,64], index: 0, kind: input, shape index: {}]
  %s1 = inlined_call_operand.vmem [shape: f32[64,32], index: 1, kind: input, shape index: {}]
  %s2 = inlined_call_operand.vmem [shape: f32[1,32], index: 2, kind: input, shape index: {}]
  %s3 = inlined_call_operand.vmem [shape: f32[16,32], index: 3, kind: input, shape index: {}]
  %s4 = inlined_call_operand.vmem [shape: f32[1,32], index: 4, kind: input, shape index: {}]
  %s5 = inlined_call_operand.vmem [shape: f32[1,32], index: 5, kind: input, shape index: {}]
  %s6 = inlined_call_operand.hbm [shape: f32[16,32], index: 6, kind: output, shape index: {}]
  %s7 = sld [smem:[#allocation0]]
  $region42: #{transformer_decoder.35} parent=0
    _
  %s9 = ssub.s32 1, %s7
  %s10 = scalar_select 0, %s9, %s7
  $region1: #{transformer_decoder.35} parent=0
    #allocation3 [shape = 'u8[8192]{0}', space=vmem, size = 0x2000, scoped, tag = 'output window, operand 0, single buffered']
    #allocation4 [shape = 's32[1]{0}', space=sflag, size = 0x4, scoped, tag = 'scoped memory for transformer_decoder.35']
    %11 = vsyncpa [#allocation4], 0
    // Predicated region
    $region2: #{transformer_decoder.35} parent=1 // pred_check
      _
    $region3: #{transformer_decoder.35} parent=1 // pred_check_branch
      %13 = sbr.rel (0) target = $region5
    $region4: #{transformer_decoder.35} parent=1 // pred_region
      _
    $region5: #{transformer_decoder.35} parent=1 // pred_fallthru
      _
    // Predicated region
    $region6: #{transformer_decoder.35} parent=1 // pred_check
      _
    $region7: #{transformer_decoder.35} parent=1 // pred_check_branch
      %15 = sbr.rel (0) target = $region9
    $region8: #{transformer_decoder.35} parent=1 // pred_region
      _
    $region9: #{transformer_decoder.35} parent=1 // pred_fallthru
      _
    // Predicated region
    $region10: #{transformer_decoder.35} parent=1 // pred_check
      _
    $region11: #{transformer_decoder.35} parent=1 // pred_check_branch
      %17 = sbr.rel (0) target = $region13
    $region12: #{transformer_decoder.35} parent=1 // pred_region
      _
    $region13: #{transformer_decoder.35} parent=1 // pred_fallthru
      _
    // Predicated region
    $region14: #{transformer_decoder.35} parent=1 // pred_check
      _
    $region15: #{transformer_decoder.35} parent=1 // pred_check_branch
      %19 = sbr.rel (0) target = $region17
    $region16: #{transformer_decoder.35} parent=1 // pred_region
      _
    $region17: #{transformer_decoder.35} parent=1 // pred_fallthru
      _
    // Predicated region
    $region18: #{transformer_decoder.35} parent=1 // pred_check
      _
    $region19: #{transformer_decoder.35} parent=1 // pred_check_branch
      %21 = sbr.rel (0) target = $region21
    $region20: #{transformer_decoder.35} parent=1 // pred_region
      _
    $region21: #{transformer_decoder.35} parent=1 // pred_fallthru
      _
    // Predicated region
    $region22: #{transformer_decoder.35} parent=1 // pred_check
      _
    $region23: #{transformer_decoder.35} parent=1 // pred_check_branch
      %23 = sbr.rel (0) target = $region25
    $region24: #{transformer_decoder.35} parent=1 // pred_region
      _
    $region25: #{transformer_decoder.35} parent=1 // pred_fallthru
      _
    %p25 = scmp.eq.s32.totalorder 0, 0
    // Predicated region
    $region26: #{transformer_decoder.35} parent=1 // pred_check
      %p26 = pneg %p25
    $region27: #{transformer_decoder.35} parent=1 // pred_check_branch
      %28 = sbr.rel (%p26) target = $region29
    $region28: #{transformer_decoder.35} parent=1 // pred_region
      %vm29 = vcmask 261120
      %30 = vst.msk [vmem:[#allocation2] sm:$0xff] %vm29, 0.0
      %31 = vst.msk [vmem:[#allocation2 + $0x8] sm:$0xff] %vm29, 0.0
    $region29: #{transformer_decoder.35} parent=1 // pred_fallthru
      _
    %v32 = vld [vmem:[#allocation2] sm:$0xff]
    %v33 = vld [vmem:[#allocation2 + $0x8] sm:$0xff]
    %v34 = vld [vmem:[%s0] sm:$0xff]
    %v35 = vld [vmem:[%s0 + $0x8] sm:$0xff]
    %v36 = vpack.c.bf16 %v35, %v34
    %v37 = vld [vmem:[%s1] sm:$0xff]
    %v38 = vld [vmem:[%s1 + $0x8] sm:$0xff]
    %v39 = vld [vmem:[%s1 + $0x10] sm:$0xff]
    %v40 = vld [vmem:[%s1 + $0x18] sm:$0xff]
    %v41 = vld [vmem:[%s1 + $0x20] sm:$0xff]
    %v42 = vld [vmem:[%s1 + $0x28] sm:$0xff]
    %v43 = vld [vmem:[%s1 + $0x30] sm:$0xff]
    %v44 = vld [vmem:[%s1 + $0x38] sm:$0xff]
    %v45 = vpack.c.bf16 %v38, %v37
    %v46 = vpack.c.bf16 %v40, %v39
    %v47 = vpack.c.bf16 %v42, %v41
    %v48 = vpack.c.bf16 %v44, %v43
    %vm49 = vcmask 523264
    %v51 = vsel %vm49, %v36, 0
    %53 = vmatprep.subr.bf16.mxu0 0
    %54 = vmatpush1.bf16.msra.mxu0 %v45
    %55 = vmatprep.subr.bf16.mxu0 0
    %56 = vmatpush1.bf16.msra.mxu0 %v46
    %57 = vmatprep.subr.bf16.mxu0 0
    %58 = vmatpush1.bf16.msra.mxu0 %v47
    %59 = vmatprep.subr.bf16.mxu0 0
    %60 = vmatpush1.bf16.msra.mxu0 %v48
    %61 = vmatprep.subr.bf16.mxu0 0
    %62 = vmatpush1.bf16.msra.mxu0 0
    %63 = vmatprep.subr.bf16.mxu0 0
    %64 = vmatpush1.bf16.msra.mxu0 0
    %65 = vmatprep.subr.bf16.mxu0 0
    %66 = vmatpush1.bf16.msra.mxu0 0
    %67 = vmatprep.subr.bf16.mxu0 0
    %68 = vmatpush1.bf16.msra.mxu0 0
    %69 = vmatprep.subr.bf16.mxu0 0
    %70 = vmatpush1.bf16.msra.mxu0 0
    %71 = vmatprep.subr.bf16.mxu0 0
    %72 = vmatpush1.bf16.msra.mxu0 0
    %73 = vmatprep.subr.bf16.mxu0 0
    %74 = vmatpush1.bf16.msra.mxu0 0
    %75 = vmatprep.subr.bf16.mxu0 0
    %76 = vmatpush1.bf16.msra.mxu0 0
    %77 = vmatprep.subr.bf16.mxu0 0
    %78 = vmatpush1.bf16.msra.mxu0 0
    %79 = vmatprep.subr.bf16.mxu0 0
    %80 = vmatpush1.bf16.msra.mxu0 0
    %81 = vmatprep.subr.bf16.mxu0 0
    %82 = vmatpush1.bf16.msra.mxu0 0
    %83 = vmatprep.subr.bf16.mxu0 0
    %84 = vmatpush1.bf16.msra.mxu0 0
    %85 = vmatprep.mubr.bf16.mxu0 0
    %86 = vmatmul.mubr.bf16.gmra.mrb[0].mxu0 %v51
    %v87 = vpop.f32.mrb[0].mxu0
    %v88 = vadd.f32 0.0, %v87
    %v89 = vpop.f32.mrb[0].mxu0
    %v90 = vpop.f32.mrb[0].mxu0
    %v91 = vadd.f32 0.0, %v90
    %v92 = vpop.f32.mrb[0].mxu0
    %93 = vdwg.mxu0
    %v94 = vadd.f32 %v32, %v88
    %v95 = vadd.f32 %v33, %v91
    %vm96 = vcmask 261120
    %97 = vst.msk [vmem:[#allocation2] sm:$0xff] %vm96, %v94
    %98 = vst.msk [vmem:[#allocation2 + $0x8] sm:$0xff] %vm96, %v95
    // Predicated region
    $region30: #{transformer_decoder.35} parent=1 // pred_check
      %p99 = pneg %p25
    $region31: #{transformer_decoder.35} parent=1 // pred_check_branch
      %101 = sbr.rel (%p99) target = $region33
    $region32: #{transformer_decoder.35} parent=1 // pred_region
      %v102 = vld [vmem:[#allocation2] sm:$0xff]
      %v103 = vld [vmem:[#allocation2 + $0x8] sm:$0xff]
      %v104 = vld [vmem:[%s2] sm:$0x1]
      %v106 = vlaneseq
      %v107 = vshrl.u32 %v106, 7
      %v108 = vsub.s32 0, %v107
      %v109 = vrot.slane %v104, %v108
      %v111 = vadd.f32 %v102, %v109
      %v112 = vadd.f32 %v103, %v109
      %v113 = vld [vmem:[%s3] sm:$0xff]
      %v114 = vld [vmem:[%s3 + $0x8] sm:$0xff]
      %v115 = vadd.f32 %v111, %v113
      %v116 = vadd.f32 %v112, %v114
      %v117 = vsel %vm96, %v115, 0.0
      %118 = vadd.xlane.f32.xlu0 %v117
      %v119 = vpop.xlane.xlu0 %118
      %v120 = vsel %vm96, %v116, 0.0
      %121 = vadd.xlane.f32.xlu0 %v120
      %v122 = vpop.xlane.xlu0 %121
      %v123 = vrcp.pop 32.0
      %v124 = vmul.f32 %v119, %v123
      %v125 = vmul.f32 %v122, %v123
      %v126 = vsub.f32 %v115, %v124
      %v127 = vsub.f32 %v116, %v125
      %v128 = vmul.f32 %v126, %v126
      %v129 = vmul.f32 %v127, %v127
      %v130 = vsel %vm96, %v128, 0.0
      %131 = vadd.xlane.f32.xlu0 %v130
      %v132 = vpop.xlane.xlu0 %131
      %v133 = vsel %vm96, %v129, 0.0
      %134 = vadd.xlane.f32.xlu0 %v133
      %v135 = vpop.xlane.xlu0 %134
      %v136 = vmul.f32 %v132, %v123
      %v137 = vmul.f32 %v135, %v123
      %v138 = vadd.f32 %v136, 1e-05
      %v139 = vadd.f32 %v137, 1e-05
      %v140 = vrsqrt.pop %v138
      %v141 = vrsqrt.pop %v139
      %v142 = vmul.f32 %v126, %v140
      %v143 = vmul.f32 %v127, %v141
      %v144 = vld [vmem:[%s4] sm:$0x1]
      %v146 = vlaneseq
      %v147 = vshrl.u32 %v146, 7
      %v148 = vsub.s32 0, %v147
      %v149 = vrot.slane %v144, %v148
      %v151 = vmul.f32 %v142, %v149
      %v152 = vmul.f32 %v143, %v149
      %v153 = vld [vmem:[%s5] sm:$0x1]
      %v155 = vlaneseq
      %v156 = vshrl.u32 %v155, 7
      %v157 = vsub.s32 0, %v156
      %v158 = vrot.slane %v153, %v157
      %v160 = vadd.f32 %v151, %v158
      %v161 = vadd.f32 %v152, %v158
      %162 = vst.msk [vmem:[#allocation3] sm:$0xff] %vm96, %v160
      %163 = vst.msk [vmem:[#allocation3 + $0x8] sm:$0xff] %vm96, %v161
    $region33: #{transformer_decoder.35} parent=1 // pred_fallthru
      _
    // Predicated region
    $region34: #{transformer_decoder.35} parent=1 // pred_check
      _
    $region35: #{transformer_decoder.35} parent=1 // pred_check_branch
      %165 = sbr.rel (0) target = $region37
    $region36: #{transformer_decoder.35} parent=1 // pred_region
      %s167 = ssub.s32 256, 256
      %168 = vsyncadd [#allocation4], %s167
      %s169 = sshll.u32 [#allocation3], 4
      %s170 = int_to_ptr.vmem [resolvable:$true] %s169
      %175 = dma.vmem_to_hbm [thread:$0]  %s170, 256, %s6, [#allocation4], 128, 128, 8
    $region37: #{transformer_decoder.35} parent=1 // pred_fallthru
      _
    // Predicated region
    $region38: #{transformer_decoder.35} parent=1 // pred_check
      _
    $region39: #{transformer_decoder.35} parent=1 // pred_check_branch
      %177 = sbr.rel (0) target = $region41
    $region40: #{transformer_decoder.35} parent=1 // pred_region
      %178 = dma.done [#allocation4], 256
    $region41: #{transformer_decoder.35} parent=1 // pred_fallthru
      _
    %179 = vsyncpa [#allocation4], 1

</llo_original>
